<compile_context>
chip_gen: v6e
topology: v6e:2x2x1
jax: 0.10.0
libtpu: 0.0.40
codegen_flags: <defaults>
</compile_context>

<pallas_src>
import functools

import jax
import jax.numpy as jnp
from jax.experimental import pallas as pl
from jax.experimental.pallas import tpu as pltpu

# F.rrelu (eval mode) negative slope = (lower + upper) / 2 = (1/8 + 1/3) / 2
RRELU_SLOPE = (1.0 / 8.0 + 1.0 / 3.0) / 2.0
L2_EPS = 1e-12  # F.normalize eps


def _l2norm(x):
    # F.normalize(x, p=2, dim=1):  x / max(||x||, eps) == x * rsqrt(max(||x||^2, eps^2))
    ss = jnp.sum(x * x, axis=-1, keepdims=True)
    return x * jax.lax.rsqrt(jnp.maximum(ss, L2_EPS * L2_EPS))


def _rrelu(x):
    # TODO(synk): F.rrelu in training mode uses a random slope; eval-mode mean slope used here.
    return jnp.where(x >= 0, x, RRELU_SLOPE * x)


def _softmax_rows(logits):
    # softmax over the last (lane) axis; divide replaced by EUP approx reciprocal.
    m = jnp.max(logits, axis=-1, keepdims=True)
    e = jnp.exp(logits - m)
    s = jnp.sum(e, axis=-1, keepdims=True)
    return e * pl.reciprocal(s, approx=True)


# ----------------------------------------------------------------------------------
# Fused kernel
# ----------------------------------------------------------------------------------
def fused_kernel(H,
                 # per-step blocked input
                 a_ref,
                 # resident inputs
                 m_ref, rowt_ref, a_sub_ref, dyn_ref, rel_ref, qm_ref,
                 w4a_ref, wcat_ref, wcat_his_ref,
                 w2t_ref, b2_ref, w5t_ref, b5_ref,
                 wbig_ref, bbig_ref, wtg_ref, btg_ref,
                 # outputs
                 his_emb_ref, his_r_ref, temp_out_ref, rel_out_ref, hist_ref,
                 # VMEM scratch (carried across grid steps)
                 h_carry, att_sum):
    i = pl.program_id(0)
    bf16 = jnp.bfloat16

    # ---------------- prologue (original pre-loop code), executed once ----------------
    @pl.when(i == 0)
    def _():
        # self.h = F.normalize(self.dynamic_emb)    (layer_norm=True)
        h = _l2norm(dyn_ref[...])
        h_carry[...] = h
        att_sum[...] = jnp.zeros_like(att_sum)

        # TODO(synk): DGL RGCNCell2 (UnionRGCNLayer2) message passing -> dense surrogate.
        h_b = h.astype(bf16)
        agg0 = jnp.dot(a_sub_ref[...], h_b, preferred_element_type=jnp.float32)
        cat0 = jnp.concatenate([agg0.astype(bf16), h_b], axis=-1)           # [A@h | h]
        his_ent = _l2norm(_rrelu(jnp.dot(cat0, wcat_his_ref[...],
                                         preferred_element_type=jnp.float32)))

        # his_r_emb = F.normalize(self.emb_rel)
        his_r_ref[...] = _l2norm(rel_ref[...])

        # his_emb = F.normalize(softmax(w5(query_mask + his_ent), dim=1) * his_ent)
        logits = (jnp.dot((qm_ref[...] + his_ent).astype(bf16), w5t_ref[...],
                          preferred_element_type=jnp.float32) + b5_ref[...])
        his_emb_ref[...] = _l2norm(_softmax_rows(logits) * his_ent)

    # ---------------- recurrent step i ----------------
    h_prev = h_carry[...]                             # previous h_0 (or normalize(dyn) at i==0)

    # self.h = w4(concat([self.h, h_t], dim=1))
    # (h_t part + bias precomputed: row_t[i] = cos(wt2*t2+bt2) @ w4b + b4, resident table)
    h_new = (jnp.dot(h_prev.astype(bf16), w4a_ref[...],
                     preferred_element_type=jnp.float32) + rowt_ref[i])
    h_new_b = h_new.astype(bf16)
    # GRU hidden: at i==0 the fresh w4 output; at i>0 the carried previous GRU output.
    hidden = jnp.where(i == 0, h_new, h_prev)

    # x_input[r] = emb_rel[r] + mean of self.h over relation r's r_to_e span (exact, matmul)
    x_input = rel_ref[...] + jnp.dot(m_ref[i], h_new_b, preferred_element_type=jnp.float32)

    # TODO(synk): rgcn.forward (DGL UnionRGCNLayer) -> dense normalized-adjacency surrogate.
    agg = jnp.dot(a_ref[0], h_new_b, preferred_element_type=jnp.float32)
    cat = jnp.concatenate([agg.astype(bf16), h_new_b], axis=-1)             # [A@h | h]
    current_h_b = _l2norm(_rrelu(jnp.dot(cat, wcat_ref[...],
                                         preferred_element_type=jnp.float32))).astype(bf16)

    # GRUCell(current_h, hidden) -- single fused gate matmul: [r | z | gi_n | gh_n]
    g = (jnp.dot(jnp.concatenate([current_h_b, hidden.astype(bf16)], axis=-1),
                 wbig_ref[...], preferred_element_type=jnp.float32) + bbig_ref[...])
    rz = jax.nn.sigmoid(g[:, 0:2 * H])
    r = rz[:, 0:H]
    z = rz[:, H:2 * H]
    n = jnp.tanh(g[:, 2 * H:3 * H] + r * g[:, 3 * H:4 * H])
    h0 = _l2norm((1.0 - z) * n + z * hidden)          # layer_norm=True

    temp_out_ref[0] = h0                              # his_temp_embs[i] / history_embs[i]
    h_carry[...] = h0                                 # self.h = self.h_0

    # att_e = softmax(w2(query_mask + current_h), dim=1); accumulated after the GRU so the
    # (E,H) f32 softmax result is not live across the GRU chain.
    att_logits = (jnp.dot((qm_ref[...] + current_h_b).astype(bf16), w2t_ref[...],
                          preferred_element_type=jnp.float32) + b2_ref[...])
    att_sum[...] = att_sum[...] + _softmax_rows(att_logits) * h0

    # time gate for relation embedding
    tw = jax.nn.sigmoid(jnp.dot(x_input.astype(bf16), wtg_ref[...],
                                preferred_element_type=jnp.float32) + btg_ref[...])
    rel_out_ref[0] = _l2norm(tw * x_input + (1.0 - tw) * rel_ref[...])      # his_rel_embs[i]

    @pl.when(i == pl.num_programs(0) - 1)
    def _():
        # mean over T then F.normalize: the 1/T scale is a no-op under L2 normalization.
        hist_ref[...] = _l2norm(_l2norm(att_sum[...]) + h0)


# ----------------------------------------------------------------------------------
# Wrapper
# ----------------------------------------------------------------------------------
def recurrent_rgcn_forward(params, query_mask, a_sub, a_stack, m_stack):
    E, H = params["dynamic_emb"].shape
    R2 = params["emb_rel"].shape[0]
    T = a_stack.shape[0]
    f32, bf16 = jnp.float32, jnp.bfloat16
    # NOTE: for lane-dense layout, E should be a multiple of 128 (zero-pad A/M/dyn/qm
    # rows/cols otherwise; padded rows of the outputs must be sliced off by the caller).

    # Hoisted time-feature table: row_t[i] = cos(weight_t2 * t2 + bias_t2) @ w4b + b4,
    # with t2 = T - i + 1  (matches `t2 = len(g_list) - i + 1` in the reference).
    t2 = (jnp.float32(T) + 1.0) - jnp.arange(T, dtype=f32)                  # (T,)
    h_t = jnp.cos(params["weight_t2"] * t2[:, None] + params["bias_t2"])    # (T, H)
    row_t = (h_t @ params["w4b_t"] + params["b4"]).reshape(T, 1, H)         # (T, 1, H) f32

    # bf16 MXU operands (f32 accumulation inside the kernel).
    a_sub_b = a_sub.astype(bf16)
    a_stack_b = a_stack.astype(bf16)
    m_stack_b = m_stack.astype(bf16)
    w4a = params["w4a_t"].astype(bf16)
    w_cat = jnp.concatenate([params["w_neigh"], params["w_self"]], axis=0).astype(bf16)
    w_cat_his = jnp.concatenate([params["w_neigh_his"], params["w_self_his"]], axis=0).astype(bf16)
    w2t = params["w2_t"].astype(bf16)
    w5t = params["w5_t"].astype(bf16)

    # Fully fused GRU gate weight (2H, 4H): [cur | hid] @ W_big -> [r | z | gi_n | gh_n]
    wih_t, whh_t = params["gru_wih_t"], params["gru_whh_t"]   # (H, 3H), gate order [r|z|n]
    zhh = jnp.zeros((H, H), f32)
    w_big = jnp.concatenate([
        jnp.concatenate([wih_t[:, :2 * H], wih_t[:, 2 * H:], zhh], axis=1),
        jnp.concatenate([whh_t[:, :2 * H], zhh, whh_t[:, 2 * H:]], axis=1),
    ], axis=0).astype(bf16)                                                 # (2H, 4H)
    b_big = jnp.concatenate([
        params["gru_bih"][:, :2 * H] + params["gru_bhh"][:, :2 * H],
        params["gru_bih"][:, 2 * H:],
        params["gru_bhh"][:, 2 * H:],
    ], axis=1)                                                              # (1, 4H) f32
    w_tg = params["time_gate_weight"].astype(bf16)

    full = lambda shape: pl.BlockSpec(shape, lambda i, _s=shape: tuple(0 for _ in _s))
    in_specs = [
        pl.BlockSpec((1, E, E), lambda i: (i, 0, 0)),     # A_t (bf16), per-step pipelined
        full((T, R2, E)),                                 # M_t stack (bf16), resident
        full((T, 1, H)),                                  # row_t table (f32), resident
        full((E, E)),                                     # a_sub (bf16), prologue only
        full((E, H)),                                     # dynamic_emb
        full((R2, H)),                                    # emb_rel
        full((E, H)),                                     # query_mask
        full((H, H)),                                     # w4a_T (bf16)
        full((2 * H, H)), full((2 * H, H)),               # W_cat, W_cat_his (bf16)
        full((H, H)), full((1, H)),                       # w2_T (bf16), b2
        full((H, H)), full((1, H)),                       # w5_T (bf16), b5
        full((2 * H, 4 * H)), full((1, 4 * H)),           # fused GRU W_big (bf16), b_big
        full((H, H)), full((1, H)),                       # time_gate_weight (bf16), bias
    ]
    out_specs = [
        pl.BlockSpec((E, H), lambda i: (0, 0)),           # his_emb (resident, written at i==0)
        pl.BlockSpec((R2, H), lambda i: (0, 0)),          # his_r_emb (resident, written at i==0)
        pl.BlockSpec((1, E, H), lambda i: (i, 0, 0)),     # his_temp_embs stacked
        pl.BlockSpec((1, R2, H), lambda i: (i, 0, 0)),    # his_rel_embs stacked
        pl.BlockSpec((E, H), lambda i: (0, 0)),           # history_emb (resident, last step)
    ]

    operands = (a_stack_b, m_stack_b, row_t, a_sub_b,
                params["dynamic_emb"], params["emb_rel"], query_mask,
                w4a, w_cat, w_cat_his,
                w2t, params["b2"], w5t, params["b5"],
                w_big, b_big, w_tg, params["time_gate_bias"])

    # Explicit VMEM budget: 2x (double-buffer) generous over-estimate + margin, capped well
    # below every generation's physical VMEM.  Avoids v5e's 16 MiB default scoped limit.
    in_bytes = sum(int(x.size) * x.dtype.itemsize for x in operands)
    out_bytes = (3 * E * H + R2 * H + T * E * H + T * R2 * H) * 4
    scratch_bytes = 2 * E * H * 4
    vmem_limit = int(min(2 * (in_bytes + out_bytes) + scratch_bytes + (8 << 20), 48 << 20))

    his_emb, his_r_emb, his_temp, his_rel, history_emb = pl.pallas_call(
        functools.partial(fused_kernel, H),
        out_shape=(jax.ShapeDtypeStruct((E, H), f32),
                   jax.ShapeDtypeStruct((R2, H), f32),
                   jax.ShapeDtypeStruct((T, E, H), f32),
                   jax.ShapeDtypeStruct((T, R2, H), f32),
                   jax.ShapeDtypeStruct((E, H), f32)),
        grid_spec=pltpu.PrefetchScalarGridSpec(
            num_scalar_prefetch=0,
            grid=(T,),
            in_specs=in_specs,
            out_specs=out_specs,
            scratch_shapes=[pltpu.VMEM((E, H), f32),      # h_carry
                            pltpu.VMEM((E, H), f32)],     # att_sum accumulator
        ),
        compiler_params=pltpu.CompilerParams(
            dimension_semantics=("arbitrary",),
            vmem_limit_bytes=vmem_limit),
    )(*operands)

    hr = his_rel[-1]           # self.hr after the last timestep
    static_emb = None          # use_static=False
    # his_temp / his_rel are the stacked equivalents of the python lists his_temp_embs / his_rel_embs
    return history_emb, static_emb, hr, his_emb, his_r_emb, his_temp, his_rel


# ----------------------------------------------------------------------------------
# Deterministic parameter / synthetic-input construction
# ----------------------------------------------------------------------------------
def make_params_and_inputs(key, E=128, H=128, R=8, T=3):
    R2 = 2 * R
    ks = jax.random.split(key, 32)
    f32 = jnp.float32
    nrm = lambda k, s, sc=0.05: (sc * jax.random.normal(k, s)).astype(f32)

    params = {
        "dynamic_emb": jax.random.normal(ks[0], (E, H)).astype(f32),       # init.normal_
        "emb_rel": nrm(ks[1], (R2, H), (2.0 / (R2 + H)) ** 0.5),           # xavier_normal_
        "weight_t2": jax.random.normal(ks[2], (1, H)).astype(f32),
        "bias_t2": jax.random.normal(ks[3], (1, H)).astype(f32),
        # w4: Linear(2H, H)  -> transposed & split into h-part / h_t-part
        "w4a_t": nrm(ks[4], (H, H)), "w4b_t": nrm(ks[5], (H, H)), "b4": nrm(ks[6], (1, H)),
        # w2, w5: Linear(H, H)
        "w2_t": nrm(ks[7], (H, H)), "b2": nrm(ks[8], (1, H)),
        "w5_t": nrm(ks[9], (H, H)), "b5": nrm(ks[10], (1, H)),
        # dense-RGCN surrogate weights (current graph + sub_graph/all_GCN)
        "w_neigh": nrm(ks[11], (H, H)), "w_self": nrm(ks[12], (H, H)),
        "w_neigh_his": nrm(ks[13], (H, H)), "w_self_his": nrm(ks[14], (H, H)),
        # GRUCell(h_dim, h_dim), gate order [r | z | n]
        "gru_wih_t": nrm(ks[15], (H, 3 * H)), "gru_bih": nrm(ks[16], (1, 3 * H)),
        "gru_whh_t": nrm(ks[17], (H, 3 * H)), "gru_bhh": nrm(ks[18], (1, 3 * H)),
        # time gate
        "time_gate_weight": nrm(ks[19], (H, H), (6.0 / (2 * H)) ** 0.5),   # xavier_uniform-ish
        "time_gate_bias": jnp.zeros((1, H), f32),
    }

    # query_mask input (E, H) -- computed outside forward() in the original code
    query_mask = nrm(ks[20], (E, H), 0.1)

    def norm_adj(k, shape):
        mask = (jax.random.uniform(k, shape) < 0.15).astype(f32)
        deg = jnp.maximum(mask.sum(axis=-1, keepdims=True), 1.0)
        return mask / deg

    a_sub = norm_adj(ks[21], (E, E))                      # sub_graph adjacency surrogate
    a_stack = norm_adj(ks[22], (T, E, E))                 # g_list adjacency surrogates
    # M_t: (2R, E) averaging matrices == exact r_to_e / r_len / uniq_r span-mean aggregation
    m_mask = (jax.random.uniform(ks[23], (T, R2, E)) < 0.1).astype(f32)
    m_stack = m_mask / jnp.maximum(m_mask.sum(axis=-1, keepdims=True), 1.0)

    return params, query_mask, a_sub, a_stack, m_stack


if __name__ == "__main__":
    key = jax.random.PRNGKey(0)
    E, H, R, T = 128, 128, 8, 3     # E multiple of 128 -> lane-dense adjacency blocks
    params, query_mask, a_sub, a_stack, m_stack = make_params_and_inputs(key, E=E, H=H, R=R, T=T)

    outs = jax.jit(recurrent_rgcn_forward)(params, query_mask, a_sub, a_stack, m_stack)
    history_emb, static_emb, hr, his_emb, his_r_emb, his_temp, his_rel = outs
    jax.block_until_ready((history_emb, hr, his_emb, his_r_emb, his_temp, his_rel))

    assert history_emb.shape == (E, H)
    assert hr.shape == (2 * R, H)
    assert his_emb.shape == (E, H)
    assert his_r_emb.shape == (2 * R, H)
    assert his_temp.shape == (T, E, H)
    assert his_rel.shape == (T, 2 * R, H)
    assert bool(jnp.all(jnp.isfinite(history_emb)))
    assert bool(jnp.all(jnp.isfinite(his_emb)))
    assert bool(jnp.all(jnp.isfinite(his_rel)))
    print("KERNEL_OK")
</pallas_src>

<mosaic_0001>
module attributes {stable_mosaic.version = 11 : i64} {
  func.func @fused_kernel(%arg0: i32, %arg1: memref<1x128x128xbf16, #tpu.memory_space<vmem>>, %arg2: memref<3x16x128xbf16, #tpu.memory_space<vmem>>, %arg3: memref<3x1x128xf32, #tpu.memory_space<vmem>>, %arg4: memref<128x128xbf16, #tpu.memory_space<vmem>>, %arg5: memref<128x128xf32, #tpu.memory_space<vmem>>, %arg6: memref<16x128xf32, #tpu.memory_space<vmem>>, %arg7: memref<128x128xf32, #tpu.memory_space<vmem>>, %arg8: memref<128x128xbf16, #tpu.memory_space<vmem>>, %arg9: memref<256x128xbf16, #tpu.memory_space<vmem>>, %arg10: memref<256x128xbf16, #tpu.memory_space<vmem>>, %arg11: memref<128x128xbf16, #tpu.memory_space<vmem>>, %arg12: memref<1x128xf32, #tpu.memory_space<vmem>>, %arg13: memref<128x128xbf16, #tpu.memory_space<vmem>>, %arg14: memref<1x128xf32, #tpu.memory_space<vmem>>, %arg15: memref<256x512xbf16, #tpu.memory_space<vmem>>, %arg16: memref<1x512xf32, #tpu.memory_space<vmem>>, %arg17: memref<128x128xbf16, #tpu.memory_space<vmem>>, %arg18: memref<1x128xf32, #tpu.memory_space<vmem>>, %arg19: memref<128x128xf32, #tpu.memory_space<vmem>>, %arg20: memref<16x128xf32, #tpu.memory_space<vmem>>, %arg21: memref<1x128x128xf32, #tpu.memory_space<vmem>>, %arg22: memref<1x16x128xf32, #tpu.memory_space<vmem>>, %arg23: memref<128x128xf32, #tpu.memory_space<vmem>>, %arg24: memref<128x128xf32, #tpu.memory_space<vmem>>, %arg25: memref<128x128xf32, #tpu.memory_space<vmem>>) attributes {dimension_semantics = [#tpu.dimension_semantics<arbitrary>], iteration_bounds = array<i64: 3>, scalar_prefetch = 0 : i64, scratch_operands = 2 : i64, tpu.core_type = #tpu.core_type<tc>, window_params = [{transform_indices = @transform_0, window_bounds = array<i64: 1, 128, 128>}, {pipeline_mode = #tpu.pipeline_mode<synchronous>, transform_indices = @transform_1, window_bounds = array<i64: 3, 16, 128>}, {pipeline_mode = #tpu.pipeline_mode<synchronous>, transform_indices = @transform_2, window_bounds = array<i64: 3, 1, 128>}, {pipeline_mode = #tpu.pipeline_mode<synchronous>, transform_indices = @transform_3, window_bounds = array<i64: 128, 128>}, {pipeline_mode = #tpu.pipeline_mode<synchronous>, transform_indices = @transform_4, window_bounds = array<i64: 128, 128>}, {pipeline_mode = #tpu.pipeline_mode<synchronous>, transform_indices = @transform_5, window_bounds = array<i64: 16, 128>}, {pipeline_mode = #tpu.pipeline_mode<synchronous>, transform_indices = @transform_6, window_bounds = array<i64: 128, 128>}, {pipeline_mode = #tpu.pipeline_mode<synchronous>, transform_indices = @transform_7, window_bounds = array<i64: 128, 128>}, {pipeline_mode = #tpu.pipeline_mode<synchronous>, transform_indices = @transform_8, window_bounds = array<i64: 256, 128>}, {pipeline_mode = #tpu.pipeline_mode<synchronous>, transform_indices = @transform_9, window_bounds = array<i64: 256, 128>}, {pipeline_mode = #tpu.pipeline_mode<synchronous>, transform_indices = @transform_10, window_bounds = array<i64: 128, 128>}, {pipeline_mode = #tpu.pipeline_mode<synchronous>, transform_indices = @transform_11, window_bounds = array<i64: 1, 128>}, {pipeline_mode = #tpu.pipeline_mode<synchronous>, transform_indices = @transform_12, window_bounds = array<i64: 128, 128>}, {pipeline_mode = #tpu.pipeline_mode<synchronous>, transform_indices = @transform_13, window_bounds = array<i64: 1, 128>}, {pipeline_mode = #tpu.pipeline_mode<synchronous>, transform_indices = @transform_14, window_bounds = array<i64: 256, 512>}, {pipeline_mode = #tpu.pipeline_mode<synchronous>, transform_indices = @transform_15, window_bounds = array<i64: 1, 512>}, {pipeline_mode = #tpu.pipeline_mode<synchronous>, transform_indices = @transform_16, window_bounds = array<i64: 128, 128>}, {pipeline_mode = #tpu.pipeline_mode<synchronous>, transform_indices = @transform_17, window_bounds = array<i64: 1, 128>}, {pipeline_mode = #tpu.pipeline_mode<synchronous>, transform_indices = @transform_18, window_bounds = array<i64: 128, 128>}, {pipeline_mode = #tpu.pipeline_mode<synchronous>, transform_indices = @transform_19, window_bounds = array<i64: 16, 128>}, {transform_indices = @transform_20, window_bounds = array<i64: 1, 128, 128>}, {transform_indices = @transform_21, window_bounds = array<i64: 1, 16, 128>}, {pipeline_mode = #tpu.pipeline_mode<synchronous>, transform_indices = @transform_22, window_bounds = array<i64: 128, 128>}]} {
    %c0_i32 = arith.constant 0 : i32
    %0 = arith.cmpi eq, %arg0, %c0_i32 : i32
    %1 = arith.extui %0 : i1 to i32
    %c0_i32_0 = arith.constant 0 : i32
    %2 = arith.cmpi ne, %1, %c0_i32_0 : i32
    scf.if %2 {
      %c0_65 = arith.constant 0 : index
      %c0_66 = arith.constant 0 : index
      %133 = vector.load %arg5[%c0_65, %c0_66] : memref<128x128xf32, #tpu.memory_space<vmem>>, vector<128x128xf32>
      %134 = arith.mulf %133, %133 : vector<128x128xf32>
      %cst_67 = arith.constant dense<0.000000e+00> : vector<128xf32>
      %135 = vector.multi_reduction <add>, %134, %cst_67 [1] : vector<128x128xf32> to vector<128xf32>
      %136 = vector.shape_cast %135 : vector<128xf32> to vector<128x1xf32>
      %cst_68 = arith.constant 1.000000e-24 : f32
      %137 = vector.broadcast %cst_68 : f32 to vector<128x1xf32>
      %138 = arith.maximumf %136, %137 : vector<128x1xf32>
      %139 = math.rsqrt %138 : vector<128x1xf32>
      %140 = vector.broadcast %139 : vector<128x1xf32> to vector<128x128xf32>
      %141 = arith.mulf %133, %140 : vector<128x128xf32>
      %c0_69 = arith.constant 0 : index
      %c0_70 = arith.constant 0 : index
      %142 = vector.load %arg24[%c0_69, %c0_70] : memref<128x128xf32, #tpu.memory_space<vmem>>, vector<128x128xf32>
      tpu.vector_store %arg24[%c0_69, %c0_70], %141 {strides = array<i32>} : memref<128x128xf32, #tpu.memory_space<vmem>>, vector<128x128xf32>,
      %cst_71 = arith.constant 0.000000e+00 : f32
      %143 = vector.broadcast %cst_71 : f32 to vector<128x128xf32>
      %c0_72 = arith.constant 0 : index
      %c0_73 = arith.constant 0 : index
      %144 = vector.load %arg25[%c0_72, %c0_73] : memref<128x128xf32, #tpu.memory_space<vmem>>, vector<128x128xf32>
      tpu.vector_store %arg25[%c0_72, %c0_73], %143 {strides = array<i32>} : memref<128x128xf32, #tpu.memory_space<vmem>>, vector<128x128xf32>,
      %145 = arith.truncf %141 : vector<128x128xf32> to vector<128x128xbf16>
      %c0_74 = arith.constant 0 : index
      %c0_75 = arith.constant 0 : index
      %146 = vector.load %arg4[%c0_74, %c0_75] : memref<128x128xbf16, #tpu.memory_space<vmem>>, vector<128x128xbf16>
      %cst_76 = arith.constant dense<0.000000e+00> : vector<128x128xf32>
      %147 = tpu.matmul %146, %145, %cst_76 {dimension_numbers = #tpu.dot_dimension_numbers<[1], [0], [0], [1], [0, 0, 1, 1], [], []>} : vector<128x128xbf16>, vector<128x128xbf16>, vector<128x128xf32> -> vector<128x128xf32>
      %148 = arith.truncf %147 : vector<128x128xf32> to vector<128x128xbf16>
      %149 = tpu.concatenate %148, %145 in 1 : vector<128x128xbf16>, vector<128x128xbf16> -> vector<128x256xbf16>
      %c0_77 = arith.constant 0 : index
      %c0_78 = arith.constant 0 : index
      %150 = vector.load %arg10[%c0_77, %c0_78] : memref<256x128xbf16, #tpu.memory_space<vmem>>, vector<256x128xbf16>
      %cst_79 = arith.constant dense<0.000000e+00> : vector<128x128xf32>
      %151 = tpu.matmul %149, %150, %cst_79 {dimension_numbers = #tpu.dot_dimension_numbers<[1], [0], [0], [1], [0, 0, 1, 1], [], []>} : vector<128x256xbf16>, vector<256x128xbf16>, vector<128x128xf32> -> vector<128x128xf32>
      %cst_80 = arith.constant 0.000000e+00 : f32
      %152 = vector.broadcast %cst_80 : f32 to vector<128x128xf32>
      %153 = arith.cmpf oge, %151, %152 : vector<128x128xf32>
      %cst_81 = arith.constant 0.229166672 : f32
      %154 = vector.broadcast %cst_81 : f32 to vector<128x128xf32>
      %155 = arith.mulf %154, %151 : vector<128x128xf32>
      %156 = arith.select %153, %151, %155 : vector<128x128xi1>, vector<128x128xf32>
      %157 = arith.mulf %156, %156 : vector<128x128xf32>
      %cst_82 = arith.constant dense<0.000000e+00> : vector<128xf32>
      %158 = vector.multi_reduction <add>, %157, %cst_82 [1] : vector<128x128xf32> to vector<128xf32>
      %159 = vector.shape_cast %158 : vector<128xf32> to vector<128x1xf32>
      %cst_83 = arith.constant 1.000000e-24 : f32
      %160 = vector.broadcast %cst_83 : f32 to vector<128x1xf32>
      %161 = arith.maximumf %159, %160 : vector<128x1xf32>
      %162 = math.rsqrt %161 : vector<128x1xf32>
      %163 = vector.broadcast %162 : vector<128x1xf32> to vector<128x128xf32>
      %164 = arith.mulf %156, %163 : vector<128x128xf32>
      %c0_84 = arith.constant 0 : index
      %c0_85 = arith.constant 0 : index
      %165 = vector.load %arg6[%c0_84, %c0_85] : memref<16x128xf32, #tpu.memory_space<vmem>>, vector<16x128xf32>
      %166 = arith.mulf %165, %165 : vector<16x128xf32>
      %cst_86 = arith.constant dense<0.000000e+00> : vector<16xf32>
      %167 = vector.multi_reduction <add>, %166, %cst_86 [1] : vector<16x128xf32> to vector<16xf32>
      %168 = vector.shape_cast %167 : vector<16xf32> to vector<16x1xf32>
      %cst_87 = arith.constant 1.000000e-24 : f32
      %169 = vector.broadcast %cst_87 : f32 to vector<16x1xf32>
      %170 = arith.maximumf %168, %169 : vector<16x1xf32>
      %171 = math.rsqrt %170 : vector<16x1xf32>
      %172 = vector.broadcast %171 : vector<16x1xf32> to vector<16x128xf32>
      %173 = arith.mulf %165, %172 : vector<16x128xf32>
      %c0_88 = arith.constant 0 : index
      %c0_89 = arith.constant 0 : index
      %174 = vector.load %arg20[%c0_88, %c0_89] : memref<16x128xf32, #tpu.memory_space<vmem>>, vector<16x128xf32>
      tpu.vector_store %arg20[%c0_88, %c0_89], %173 {strides = array<i32>} : memref<16x128xf32, #tpu.memory_space<vmem>>, vector<16x128xf32>,
      %c0_90 = arith.constant 0 : index
      %c0_91 = arith.constant 0 : index
      %175 = vector.load %arg7[%c0_90, %c0_91] : memref<128x128xf32, #tpu.memory_space<vmem>>, vector<128x128xf32>
      %176 = arith.addf %175, %164 : vector<128x128xf32>
      %177 = arith.truncf %176 : vector<128x128xf32> to vector<128x128xbf16>
      %c0_92 = arith.constant 0 : index
      %c0_93 = arith.constant 0 : index
      %178 = vector.load %arg13[%c0_92, %c0_93] : memref<128x128xbf16, #tpu.memory_space<vmem>>, vector<128x128xbf16>
      %cst_94 = arith.constant dense<0.000000e+00> : vector<128x128xf32>
      %179 = tpu.matmul %177, %178, %cst_94 {dimension_numbers = #tpu.dot_dimension_numbers<[1], [0], [0], [1], [0, 0, 1, 1], [], []>} : vector<128x128xbf16>, vector<128x128xbf16>, vector<128x128xf32> -> vector<128x128xf32>
      %c0_95 = arith.constant 0 : index
      %c0_96 = arith.constant 0 : index
      %180 = vector.load %arg14[%c0_95, %c0_96] : memref<1x128xf32, #tpu.memory_space<vmem>>, vector<1x128xf32>
      %181 = vector.broadcast %180 : vector<1x128xf32> to vector<128x128xf32>
      %182 = arith.addf %179, %181 : vector<128x128xf32>
      %cst_97 = arith.constant dense<0xFF800000> : vector<128xf32>
      %183 = vector.multi_reduction <maximumf>, %182, %cst_97 [1] : vector<128x128xf32> to vector<128xf32>
      %184 = vector.shape_cast %183 : vector<128xf32> to vector<128x1xf32>
      %185 = vector.broadcast %184 : vector<128x1xf32> to vector<128x128xf32>
      %186 = arith.subf %182, %185 : vector<128x128xf32>
      %187 = math.exp %186 : vector<128x128xf32>
      %cst_98 = arith.constant dense<0.000000e+00> : vector<128xf32>
      %188 = vector.multi_reduction <add>, %187, %cst_98 [1] : vector<128x128xf32> to vector<128xf32>
      %189 = vector.shape_cast %188 : vector<128xf32> to vector<128x1xf32>
      %190 = tpu.reciprocal %189 {approx = true} : vector<128x1xf32> -> vector<128x1xf32>
      %191 = vector.broadcast %190 : vector<128x1xf32> to vector<128x128xf32>
      %192 = arith.mulf %187, %191 : vector<128x128xf32>
      %193 = arith.mulf %192, %164 : vector<128x128xf32>
      %194 = arith.mulf %193, %193 : vector<128x128xf32>
      %cst_99 = arith.constant dense<0.000000e+00> : vector<128xf32>
      %195 = vector.multi_reduction <add>, %194, %cst_99 [1] : vector<128x128xf32> to vector<128xf32>
      %196 = vector.shape_cast %195 : vector<128xf32> to vector<128x1xf32>
      %cst_100 = arith.constant 1.000000e-24 : f32
      %197 = vector.broadcast %cst_100 : f32 to vector<128x1xf32>
      %198 = arith.maximumf %196, %197 : vector<128x1xf32>
      %199 = math.rsqrt %198 : vector<128x1xf32>
      %200 = vector.broadcast %199 : vector<128x1xf32> to vector<128x128xf32>
      %201 = arith.mulf %193, %200 : vector<128x128xf32>
      %c0_101 = arith.constant 0 : index
      %c0_102 = arith.constant 0 : index
      %202 = vector.load %arg19[%c0_101, %c0_102] : memref<128x128xf32, #tpu.memory_space<vmem>>, vector<128x128xf32>
      tpu.vector_store %arg19[%c0_101, %c0_102], %201 {strides = array<i32>} : memref<128x128xf32, #tpu.memory_space<vmem>>, vector<128x128xf32>,
    } else {
    }
    %c0 = arith.constant 0 : index
    %c0_1 = arith.constant 0 : index
    %3 = vector.load %arg24[%c0, %c0_1] : memref<128x128xf32, #tpu.memory_space<vmem>>, vector<128x128xf32>
    %4 = arith.truncf %3 : vector<128x128xf32> to vector<128x128xbf16>
    %c0_2 = arith.constant 0 : index
    %c0_3 = arith.constant 0 : index
    %5 = vector.load %arg8[%c0_2, %c0_3] : memref<128x128xbf16, #tpu.memory_space<vmem>>, vector<128x128xbf16>
    %cst = arith.constant dense<0.000000e+00> : vector<128x128xf32>
    %6 = tpu.matmul %4, %5, %cst {dimension_numbers = #tpu.dot_dimension_numbers<[1], [0], [0], [1], [0, 0, 1, 1], [], []>} : vector<128x128xbf16>, vector<128x128xbf16>, vector<128x128xf32> -> vector<128x128xf32>
    %7 = arith.index_cast %arg0 : i32 to index
    %c0_4 = arith.constant 0 : index
    %c0_5 = arith.constant 0 : index
    %8 = vector.load %arg3[%7, %c0_4, %c0_5] : memref<3x1x128xf32, #tpu.memory_space<vmem>>, vector<1x1x128xf32>
    %9 = vector.shape_cast %8 : vector<1x1x128xf32> to vector<1x128xf32>
    %10 = vector.broadcast %9 : vector<1x128xf32> to vector<128x128xf32>
    %11 = arith.addf %6, %10 : vector<128x128xf32>
    %12 = arith.truncf %11 : vector<128x128xf32> to vector<128x128xbf16>
    %c0_i32_6 = arith.constant 0 : i32
    %13 = arith.cmpi eq, %arg0, %c0_i32_6 : i32
    %14 = arith.select %13, %11, %3 : vector<128x128xf32>
    %c0_7 = arith.constant 0 : index
    %c0_8 = arith.constant 0 : index
    %15 = vector.load %arg6[%c0_7, %c0_8] : memref<16x128xf32, #tpu.memory_space<vmem>>, vector<16x128xf32>
    %16 = arith.index_cast %arg0 : i32 to index
    %c0_9 = arith.constant 0 : index
    %c0_10 = arith.constant 0 : index
    %17 = vector.load %arg2[%16, %c0_9, %c0_10] : memref<3x16x128xbf16, #tpu.memory_space<vmem>>, vector<1x16x128xbf16>
    %18 = vector.shape_cast %17 : vector<1x16x128xbf16> to vector<16x128xbf16>
    %cst_11 = arith.constant dense<0.000000e+00> : vector<16x128xf32>
    %19 = tpu.matmul %18, %12, %cst_11 {dimension_numbers = #tpu.dot_dimension_numbers<[1], [0], [0], [1], [0, 0, 1, 1], [], []>} : vector<16x128xbf16>, vector<128x128xbf16>, vector<16x128xf32> -> vector<16x128xf32>
    %20 = arith.addf %15, %19 : vector<16x128xf32>
    %c0_12 = arith.constant 0 : index
    %c0_13 = arith.constant 0 : index
    %c0_14 = arith.constant 0 : index
    %21 = vector.load %arg1[%c0_12, %c0_13, %c0_14] : memref<1x128x128xbf16, #tpu.memory_space<vmem>>, vector<1x128x128xbf16>
    %22 = vector.shape_cast %21 : vector<1x128x128xbf16> to vector<128x128xbf16>
    %cst_15 = arith.constant dense<0.000000e+00> : vector<128x128xf32>
    %23 = tpu.matmul %22, %12, %cst_15 {dimension_numbers = #tpu.dot_dimension_numbers<[1], [0], [0], [1], [0, 0, 1, 1], [], []>} : vector<128x128xbf16>, vector<128x128xbf16>, vector<128x128xf32> -> vector<128x128xf32>
    %24 = arith.truncf %23 : vector<128x128xf32> to vector<128x128xbf16>
    %25 = tpu.concatenate %24, %12 in 1 : vector<128x128xbf16>, vector<128x128xbf16> -> vector<128x256xbf16>
    %c0_16 = arith.constant 0 : index
    %c0_17 = arith.constant 0 : index
    %26 = vector.load %arg9[%c0_16, %c0_17] : memref<256x128xbf16, #tpu.memory_space<vmem>>, vector<256x128xbf16>
    %cst_18 = arith.constant dense<0.000000e+00> : vector<128x128xf32>
    %27 = tpu.matmul %25, %26, %cst_18 {dimension_numbers = #tpu.dot_dimension_numbers<[1], [0], [0], [1], [0, 0, 1, 1], [], []>} : vector<128x256xbf16>, vector<256x128xbf16>, vector<128x128xf32> -> vector<128x128xf32>
    %cst_19 = arith.constant 0.000000e+00 : f32
    %28 = vector.broadcast %cst_19 : f32 to vector<128x128xf32>
    %29 = arith.cmpf oge, %27, %28 : vector<128x128xf32>
    %cst_20 = arith.constant 0.229166672 : f32
    %30 = vector.broadcast %cst_20 : f32 to vector<128x128xf32>
    %31 = arith.mulf %30, %27 : vector<128x128xf32>
    %32 = arith.select %29, %27, %31 : vector<128x128xi1>, vector<128x128xf32>
    %33 = arith.mulf %32, %32 : vector<128x128xf32>
    %cst_21 = arith.constant dense<0.000000e+00> : vector<128xf32>
    %34 = vector.multi_reduction <add>, %33, %cst_21 [1] : vector<128x128xf32> to vector<128xf32>
    %35 = vector.shape_cast %34 : vector<128xf32> to vector<128x1xf32>
    %cst_22 = arith.constant 1.000000e-24 : f32
    %36 = vector.broadcast %cst_22 : f32 to vector<128x1xf32>
    %37 = arith.maximumf %35, %36 : vector<128x1xf32>
    %38 = math.rsqrt %37 : vector<128x1xf32>
    %39 = vector.broadcast %38 : vector<128x1xf32> to vector<128x128xf32>
    %40 = arith.mulf %32, %39 : vector<128x128xf32>
    %41 = arith.truncf %40 : vector<128x128xf32> to vector<128x128xbf16>
    %42 = arith.truncf %14 : vector<128x128xf32> to vector<128x128xbf16>
    %43 = tpu.concatenate %41, %42 in 1 : vector<128x128xbf16>, vector<128x128xbf16> -> vector<128x256xbf16>
    %c0_23 = arith.constant 0 : index
    %c0_24 = arith.constant 0 : index
    %44 = vector.load %arg15[%c0_23, %c0_24] : memref<256x512xbf16, #tpu.memory_space<vmem>>, vector<256x512xbf16>
    %cst_25 = arith.constant dense<0.000000e+00> : vector<128x512xf32>
    %45 = tpu.matmul %43, %44, %cst_25 {dimension_numbers = #tpu.dot_dimension_numbers<[1], [0], [0], [1], [0, 0, 1, 1], [], []>} : vector<128x256xbf16>, vector<256x512xbf16>, vector<128x512xf32> -> vector<128x512xf32>
    %c0_26 = arith.constant 0 : index
    %c0_27 = arith.constant 0 : index
    %46 = vector.load %arg16[%c0_26, %c0_27] : memref<1x512xf32, #tpu.memory_space<vmem>>, vector<1x512xf32>
    %47 = vector.broadcast %46 : vector<1x512xf32> to vector<128x512xf32>
    %48 = arith.addf %45, %47 : vector<128x512xf32>
    %49 = vector.extract_strided_slice %48 {offsets = [0, 0], sizes = [128, 256], strides = [1, 1]} : vector<128x512xf32> to vector<128x256xf32>
    %50 = arith.negf %49 : vector<128x256xf32>
    %51 = math.exp %50 : vector<128x256xf32>
    %cst_28 = arith.constant 1.000000e+00 : f32
    %52 = vector.broadcast %cst_28 : f32 to vector<128x256xf32>
    %53 = arith.addf %52, %51 : vector<128x256xf32>
    %54 = arith.divf %52, %53 : vector<128x256xf32>
    %55 = vector.extract_strided_slice %54 {offsets = [0, 0], sizes = [128, 128], strides = [1, 1]} : vector<128x256xf32> to vector<128x128xf32>
    %56 = vector.extract_strided_slice %54 {offsets = [0, 128], sizes = [128, 128], strides = [1, 1]} : vector<128x256xf32> to vector<128x128xf32>
    %57 = vector.extract_strided_slice %48 {offsets = [0, 256], sizes = [128, 128], strides = [1, 1]} : vector<128x512xf32> to vector<128x128xf32>
    %58 = vector.extract_strided_slice %48 {offsets = [0, 384], sizes = [128, 128], strides = [1, 1]} : vector<128x512xf32> to vector<128x128xf32>
    %59 = arith.mulf %55, %58 : vector<128x128xf32>
    %60 = arith.addf %57, %59 : vector<128x128xf32>
    %61 = math.tanh %60 : vector<128x128xf32>
    %cst_29 = arith.constant 1.000000e+00 : f32
    %62 = vector.broadcast %cst_29 : f32 to vector<128x128xf32>
    %63 = arith.subf %62, %56 : vector<128x128xf32>
    %64 = arith.mulf %63, %61 : vector<128x128xf32>
    %65 = arith.mulf %56, %14 : vector<128x128xf32>
    %66 = arith.addf %64, %65 : vector<128x128xf32>
    %67 = arith.mulf %66, %66 : vector<128x128xf32>
    %cst_30 = arith.constant dense<0.000000e+00> : vector<128xf32>
    %68 = vector.multi_reduction <add>, %67, %cst_30 [1] : vector<128x128xf32> to vector<128xf32>
    %69 = vector.shape_cast %68 : vector<128xf32> to vector<128x1xf32>
    %cst_31 = arith.constant 1.000000e-24 : f32
    %70 = vector.broadcast %cst_31 : f32 to vector<128x1xf32>
    %71 = arith.maximumf %69, %70 : vector<128x1xf32>
    %72 = math.rsqrt %71 : vector<128x1xf32>
    %73 = vector.broadcast %72 : vector<128x1xf32> to vector<128x128xf32>
    %74 = arith.mulf %66, %73 : vector<128x128xf32>
    %c0_32 = arith.constant 0 : index
    %c0_33 = arith.constant 0 : index
    %c0_34 = arith.constant 0 : index
    %75 = vector.load %arg21[%c0_32, %c0_33, %c0_34] : memref<1x128x128xf32, #tpu.memory_space<vmem>>, vector<1x128x128xf32>
    %76 = vector.shape_cast %75 : vector<1x128x128xf32> to vector<128x128xf32>
    %77 = vector.shape_cast %74 : vector<128x128xf32> to vector<1x128x128xf32>
    tpu.vector_store %arg21[%c0_32, %c0_33, %c0_34], %77 {strides = array<i32>} : memref<1x128x128xf32, #tpu.memory_space<vmem>>, vector<1x128x128xf32>,
    %c0_35 = arith.constant 0 : index
    %c0_36 = arith.constant 0 : index
    %78 = vector.load %arg24[%c0_35, %c0_36] : memref<128x128xf32, #tpu.memory_space<vmem>>, vector<128x128xf32>
    tpu.vector_store %arg24[%c0_35, %c0_36], %74 {strides = array<i32>} : memref<128x128xf32, #tpu.memory_space<vmem>>, vector<128x128xf32>,
    %c0_37 = arith.constant 0 : index
    %c0_38 = arith.constant 0 : index
    %79 = vector.load %arg7[%c0_37, %c0_38] : memref<128x128xf32, #tpu.memory_space<vmem>>, vector<128x128xf32>
    %80 = arith.extf %41 : vector<128x128xbf16> to vector<128x128xf32>
    %81 = arith.addf %79, %80 : vector<128x128xf32>
    %82 = arith.truncf %81 : vector<128x128xf32> to vector<128x128xbf16>
    %c0_39 = arith.constant 0 : index
    %c0_40 = arith.constant 0 : index
    %83 = vector.load %arg11[%c0_39, %c0_40] : memref<128x128xbf16, #tpu.memory_space<vmem>>, vector<128x128xbf16>
    %cst_41 = arith.constant dense<0.000000e+00> : vector<128x128xf32>
    %84 = tpu.matmul %82, %83, %cst_41 {dimension_numbers = #tpu.dot_dimension_numbers<[1], [0], [0], [1], [0, 0, 1, 1], [], []>} : vector<128x128xbf16>, vector<128x128xbf16>, vector<128x128xf32> -> vector<128x128xf32>
    %c0_42 = arith.constant 0 : index
    %c0_43 = arith.constant 0 : index
    %85 = vector.load %arg12[%c0_42, %c0_43] : memref<1x128xf32, #tpu.memory_space<vmem>>, vector<1x128xf32>
    %86 = vector.broadcast %85 : vector<1x128xf32> to vector<128x128xf32>
    %87 = arith.addf %84, %86 : vector<128x128xf32>
    %c0_44 = arith.constant 0 : index
    %c0_45 = arith.constant 0 : index
    %88 = vector.load %arg25[%c0_44, %c0_45] : memref<128x128xf32, #tpu.memory_space<vmem>>, vector<128x128xf32>
    %cst_46 = arith.constant dense<0xFF800000> : vector<128xf32>
    %89 = vector.multi_reduction <maximumf>, %87, %cst_46 [1] : vector<128x128xf32> to vector<128xf32>
    %90 = vector.shape_cast %89 : vector<128xf32> to vector<128x1xf32>
    %91 = vector.broadcast %90 : vector<128x1xf32> to vector<128x128xf32>
    %92 = arith.subf %87, %91 : vector<128x128xf32>
    %93 = math.exp %92 : vector<128x128xf32>
    %cst_47 = arith.constant dense<0.000000e+00> : vector<128xf32>
    %94 = vector.multi_reduction <add>, %93, %cst_47 [1] : vector<128x128xf32> to vector<128xf32>
    %95 = vector.shape_cast %94 : vector<128xf32> to vector<128x1xf32>
    %96 = tpu.reciprocal %95 {approx = true} : vector<128x1xf32> -> vector<128x1xf32>
    %97 = vector.broadcast %96 : vector<128x1xf32> to vector<128x128xf32>
    %98 = arith.mulf %93, %97 : vector<128x128xf32>
    %99 = arith.mulf %98, %74 : vector<128x128xf32>
    %100 = arith.addf %88, %99 : vector<128x128xf32>
    %c0_48 = arith.constant 0 : index
    %c0_49 = arith.constant 0 : index
    %101 = vector.load %arg25[%c0_48, %c0_49] : memref<128x128xf32, #tpu.memory_space<vmem>>, vector<128x128xf32>
    tpu.vector_store %arg25[%c0_48, %c0_49], %100 {strides = array<i32>} : memref<128x128xf32, #tpu.memory_space<vmem>>, vector<128x128xf32>,
    %102 = arith.truncf %20 : vector<16x128xf32> to vector<16x128xbf16>
    %c0_50 = arith.constant 0 : index
    %c0_51 = arith.constant 0 : index
    %103 = vector.load %arg17[%c0_50, %c0_51] : memref<128x128xbf16, #tpu.memory_space<vmem>>, vector<128x128xbf16>
    %cst_52 = arith.constant dense<0.000000e+00> : vector<16x128xf32>
    %104 = tpu.matmul %102, %103, %cst_52 {dimension_numbers = #tpu.dot_dimension_numbers<[1], [0], [0], [1], [0, 0, 1, 1], [], []>} : vector<16x128xbf16>, vector<128x128xbf16>, vector<16x128xf32> -> vector<16x128xf32>
    %c0_53 = arith.constant 0 : index
    %c0_54 = arith.constant 0 : index
    %105 = vector.load %arg18[%c0_53, %c0_54] : memref<1x128xf32, #tpu.memory_space<vmem>>, vector<1x128xf32>
    %106 = vector.broadcast %105 : vector<1x128xf32> to vector<16x128xf32>
    %107 = arith.addf %104, %106 : vector<16x128xf32>
    %108 = arith.negf %107 : vector<16x128xf32>
    %109 = math.exp %108 : vector<16x128xf32>
    %cst_55 = arith.constant 1.000000e+00 : f32
    %110 = vector.broadcast %cst_55 : f32 to vector<16x128xf32>
    %111 = arith.addf %110, %109 : vector<16x128xf32>
    %112 = arith.divf %110, %111 : vector<16x128xf32>
    %113 = arith.mulf %112, %20 : vector<16x128xf32>
    %cst_56 = arith.constant 1.000000e+00 : f32
    %114 = vector.broadcast %cst_56 : f32 to vector<16x128xf32>
    %115 = arith.subf %114, %112 : vector<16x128xf32>
    %c0_57 = arith.constant 0 : index
    %c0_58 = arith.constant 0 : index
    %116 = vector.load %arg6[%c0_57, %c0_58] : memref<16x128xf32, #tpu.memory_space<vmem>>, vector<16x128xf32>
    %117 = arith.mulf %115, %116 : vector<16x128xf32>
    %118 = arith.addf %113, %117 : vector<16x128xf32>
    %119 = arith.mulf %118, %118 : vector<16x128xf32>
    %cst_59 = arith.constant dense<0.000000e+00> : vector<16xf32>
    %120 = vector.multi_reduction <add>, %119, %cst_59 [1] : vector<16x128xf32> to vector<16xf32>
    %121 = vector.shape_cast %120 : vector<16xf32> to vector<16x1xf32>
    %cst_60 = arith.constant 1.000000e-24 : f32
    %122 = vector.broadcast %cst_60 : f32 to vector<16x1xf32>
    %123 = arith.maximumf %121, %122 : vector<16x1xf32>
    %124 = math.rsqrt %123 : vector<16x1xf32>
    %125 = vector.broadcast %124 : vector<16x1xf32> to vector<16x128xf32>
    %126 = arith.mulf %118, %125 : vector<16x128xf32>
    %c0_61 = arith.constant 0 : index
    %c0_62 = arith.constant 0 : index
    %c0_63 = arith.constant 0 : index
    %127 = vector.load %arg22[%c0_61, %c0_62, %c0_63] : memref<1x16x128xf32, #tpu.memory_space<vmem>>, vector<1x16x128xf32>
    %128 = vector.shape_cast %127 : vector<1x16x128xf32> to vector<16x128xf32>
    %129 = vector.shape_cast %126 : vector<16x128xf32> to vector<1x16x128xf32>
    tpu.vector_store %arg22[%c0_61, %c0_62, %c0_63], %129 {strides = array<i32>} : memref<1x16x128xf32, #tpu.memory_space<vmem>>, vector<1x16x128xf32>,
    %c2_i32 = arith.constant 2 : i32
    %130 = arith.cmpi eq, %arg0, %c2_i32 : i32
    %131 = arith.extui %130 : i1 to i32
    %c0_i32_64 = arith.constant 0 : i32
    %132 = arith.cmpi ne, %131, %c0_i32_64 : i32
    scf.if %132 {
      %c0_65 = arith.constant 0 : index
      %c0_66 = arith.constant 0 : index
      %133 = vector.load %arg25[%c0_65, %c0_66] : memref<128x128xf32, #tpu.memory_space<vmem>>, vector<128x128xf32>
      %134 = arith.mulf %133, %133 : vector<128x128xf32>
      %cst_67 = arith.constant dense<0.000000e+00> : vector<128xf32>
      %135 = vector.multi_reduction <add>, %134, %cst_67 [1] : vector<128x128xf32> to vector<128xf32>
      %136 = vector.shape_cast %135 : vector<128xf32> to vector<128x1xf32>
      %cst_68 = arith.constant 1.000000e-24 : f32
      %137 = vector.broadcast %cst_68 : f32 to vector<128x1xf32>
      %138 = arith.maximumf %136, %137 : vector<128x1xf32>
      %139 = math.rsqrt %138 : vector<128x1xf32>
      %140 = vector.broadcast %139 : vector<128x1xf32> to vector<128x128xf32>
      %141 = arith.mulf %133, %140 : vector<128x128xf32>
      %142 = arith.addf %141, %74 : vector<128x128xf32>
      %143 = arith.mulf %142, %142 : vector<128x128xf32>
      %cst_69 = arith.constant dense<0.000000e+00> : vector<128xf32>
      %144 = vector.multi_reduction <add>, %143, %cst_69 [1] : vector<128x128xf32> to vector<128xf32>
      %145 = vector.shape_cast %144 : vector<128xf32> to vector<128x1xf32>
      %cst_70 = arith.constant 1.000000e-24 : f32
      %146 = vector.broadcast %cst_70 : f32 to vector<128x1xf32>
      %147 = arith.maximumf %145, %146 : vector<128x1xf32>
      %148 = math.rsqrt %147 : vector<128x1xf32>
      %149 = vector.broadcast %148 : vector<128x1xf32> to vector<128x128xf32>
      %150 = arith.mulf %142, %149 : vector<128x128xf32>
      %c0_71 = arith.constant 0 : index
      %c0_72 = arith.constant 0 : index
      %151 = vector.load %arg23[%c0_71, %c0_72] : memref<128x128xf32, #tpu.memory_space<vmem>>, vector<128x128xf32>
      tpu.vector_store %arg23[%c0_71, %c0_72], %150 {strides = array<i32>} : memref<128x128xf32, #tpu.memory_space<vmem>>, vector<128x128xf32>,
    } else {
    }
    return
  }
  func.func @transform_0(%arg0: i32) -> (i32, i32, i32) {
    %c0_i32 = arith.constant 0 : i32
    %c0_i32_0 = arith.constant 0 : i32
    %c0_i32_1 = arith.constant 0 : i32
    return %arg0, %c0_i32, %c0_i32_0 : i32, i32, i32
  }
  func.func @transform_1(%arg0: i32) -> (i32, i32, i32) {
    %c0_i32 = arith.constant 0 : i32
    %c0_i32_0 = arith.constant 0 : i32
    %c0_i32_1 = arith.constant 0 : i32
    %c0_i32_2 = arith.constant 0 : i32
    return %c0_i32, %c0_i32_0, %c0_i32_1 : i32, i32, i32
  }
  func.func @transform_2(%arg0: i32) -> (i32, i32, i32) {
    %c0_i32 = arith.constant 0 : i32
    %c0_i32_0 = arith.constant 0 : i32
    %c0_i32_1 = arith.constant 0 : i32
    %c0_i32_2 = arith.constant 0 : i32
    return %c0_i32, %c0_i32_0, %c0_i32_1 : i32, i32, i32
  }
  func.func @transform_3(%arg0: i32) -> (i32, i32) {
    %c0_i32 = arith.constant 0 : i32
    %c0_i32_0 = arith.constant 0 : i32
    %c0_i32_1 = arith.constant 0 : i32
    return %c0_i32, %c0_i32_0 : i32, i32
  }
  func.func @transform_4(%arg0: i32) -> (i32, i32) {
    %c0_i32 = arith.constant 0 : i32
    %c0_i32_0 = arith.constant 0 : i32
    %c0_i32_1 = arith.constant 0 : i32
    return %c0_i32, %c0_i32_0 : i32, i32
  }
  func.func @transform_5(%arg0: i32) -> (i32, i32) {
    %c0_i32 = arith.constant 0 : i32
    %c0_i32_0 = arith.constant 0 : i32
    %c0_i32_1 = arith.constant 0 : i32
    return %c0_i32, %c0_i32_0 : i32, i32
  }
  func.func @transform_6(%arg0: i32) -> (i32, i32) {
    %c0_i32 = arith.constant 0 : i32
    %c0_i32_0 = arith.constant 0 : i32
    %c0_i32_1 = arith.constant 0 : i32
    return %c0_i32, %c0_i32_0 : i32, i32
  }
  func.func @transform_7(%arg0: i32) -> (i32, i32) {
    %c0_i32 = arith.constant 0 : i32
    %c0_i32_0 = arith.constant 0 : i32
    %c0_i32_1 = arith.constant 0 : i32
    return %c0_i32, %c0_i32_0 : i32, i32
  }
  func.func @transform_8(%arg0: i32) -> (i32, i32) {
    %c0_i32 = arith.constant 0 : i32
    %c0_i32_0 = arith.constant 0 : i32
    %c0_i32_1 = arith.constant 0 : i32
    return %c0_i32, %c0_i32_0 : i32, i32
  }
  func.func @transform_9(%arg0: i32) -> (i32, i32) {
    %c0_i32 = arith.constant 0 : i32
    %c0_i32_0 = arith.constant 0 : i32
    %c0_i32_1 = arith.constant 0 : i32
    return %c0_i32, %c0_i32_0 : i32, i32
  }
  func.func @transform_10(%arg0: i32) -> (i32, i32) {
    %c0_i32 = arith.constant 0 : i32
    %c0_i32_0 = arith.constant 0 : i32
    %c0_i32_1 = arith.constant 0 : i32
    return %c0_i32, %c0_i32_0 : i32, i32
  }
  func.func @transform_11(%arg0: i32) -> (i32, i32) {
    %c0_i32 = arith.constant 0 : i32
    %c0_i32_0 = arith.constant 0 : i32
    %c0_i32_1 = arith.constant 0 : i32
    return %c0_i32, %c0_i32_0 : i32, i32
  }
  func.func @transform_12(%arg0: i32) -> (i32, i32) {
    %c0_i32 = arith.constant 0 : i32
    %c0_i32_0 = arith.constant 0 : i32
    %c0_i32_1 = arith.constant 0 : i32
    return %c0_i32, %c0_i32_0 : i32, i32
  }
  func.func @transform_13(%arg0: i32) -> (i32, i32) {
    %c0_i32 = arith.constant 0 : i32
    %c0_i32_0 = arith.constant 0 : i32
    %c0_i32_1 = arith.constant 0 : i32
    return %c0_i32, %c0_i32_0 : i32, i32
  }
  func.func @transform_14(%arg0: i32) -> (i32, i32) {
    %c0_i32 = arith.constant 0 : i32
    %c0_i32_0 = arith.constant 0 : i32
    %c0_i32_1 = arith.constant 0 : i32
    return %c0_i32, %c0_i32_0 : i32, i32
  }
  func.func @transform_15(%arg0: i32) -> (i32, i32) {
    %c0_i32 = arith.constant 0 : i32
    %c0_i32_0 = arith.constant 0 : i32
    %c0_i32_1 = arith.constant 0 : i32
    return %c0_i32, %c0_i32_0 : i32, i32
  }
  func.func @transform_16(%arg0: i32) -> (i32, i32) {
    %c0_i32 = arith.constant 0 : i32
    %c0_i32_0 = arith.constant 0 : i32
    %c0_i32_1 = arith.constant 0 : i32
    return %c0_i32, %c0_i32_0 : i32, i32
  }
  func.func @transform_17(%arg0: i32) -> (i32, i32) {
    %c0_i32 = arith.constant 0 : i32
    %c0_i32_0 = arith.constant 0 : i32
    %c0_i32_1 = arith.constant 0 : i32
    return %c0_i32, %c0_i32_0 : i32, i32
  }
  func.func @transform_18(%arg0: i32) -> (i32, i32) {
    %c0_i32 = arith.constant 0 : i32
    %c0_i32_0 = arith.constant 0 : i32
    %c0_i32_1 = arith.constant 0 : i32
    return %c0_i32, %c0_i32_0 : i32, i32
  }
  func.func @transform_19(%arg0: i32) -> (i32, i32) {
    %c0_i32 = arith.constant 0 : i32
    %c0_i32_0 = arith.constant 0 : i32
    %c0_i32_1 = arith.constant 0 : i32
    return %c0_i32, %c0_i32_0 : i32, i32
  }
  func.func @transform_20(%arg0: i32) -> (i32, i32, i32) {
    %c0_i32 = arith.constant 0 : i32
    %c0_i32_0 = arith.constant 0 : i32
    %c0_i32_1 = arith.constant 0 : i32
    return %arg0, %c0_i32, %c0_i32_0 : i32, i32, i32
  }
  func.func @transform_21(%arg0: i32) -> (i32, i32, i32) {
    %c0_i32 = arith.constant 0 : i32
    %c0_i32_0 = arith.constant 0 : i32
    %c0_i32_1 = arith.constant 0 : i32
    return %arg0, %c0_i32, %c0_i32_0 : i32, i32, i32
  }
  func.func @transform_22(%arg0: i32) -> (i32, i32) {
    %c0_i32 = arith.constant 0 : i32
    %c0_i32_0 = arith.constant 0 : i32
    %c0_i32_1 = arith.constant 0 : i32
    return %c0_i32, %c0_i32_0 : i32, i32
  }
}

</mosaic_0001>

<llo_original>
// kernel: recurrent_rgcn_forward.1
$region0: #{recurrent_rgcn_forward.1}
  #allocation0 [shape = 'u32[]', space=smem, size = 0x4, offset = 0x4, fixed_abs, tag = 'smem constant byte address 0x4 - core index']
  #allocation1 [shape = 'u32[144,128]{1,0:T(1,128)}', space=vmem, size = 0x12000, scoped, tag = 'internal scratch']
  #allocation2 [shape = 'f32[128,128]{1,0:T(8,128)}', space=vmem, size = 0x10000, scoped, tag = 'scratch operand']
  #allocation3 [shape = 'f32[128,128]{1,0:T(8,128)}', space=vmem, size = 0x10000, scoped, tag = 'scratch operand']
  %s0 = inlined_call_operand.vmem [shape: bf16[3,128,128], index: 0, kind: input, shape index: {}]
  %s1 = inlined_call_operand.vmem [shape: bf16[3,16,128], index: 1, kind: input, shape index: {}]
  %s2 = inlined_call_operand.vmem [shape: f32[3,1,128], index: 2, kind: input, shape index: {}]
  %s3 = inlined_call_operand.vmem [shape: bf16[128,128], index: 3, kind: input, shape index: {}]
  %s4 = inlined_call_operand.vmem [shape: f32[128,128], index: 4, kind: input, shape index: {}]
  %s5 = inlined_call_operand.vmem [shape: f32[16,128], index: 5, kind: input, shape index: {}]
  %s6 = inlined_call_operand.vmem [shape: f32[128,128], index: 6, kind: input, shape index: {}]
  %s7 = inlined_call_operand.vmem [shape: bf16[128,128], index: 7, kind: input, shape index: {}]
  %s8 = inlined_call_operand.vmem [shape: bf16[256,128], index: 8, kind: input, shape index: {}]
  %s9 = inlined_call_operand.vmem [shape: bf16[256,128], index: 9, kind: input, shape index: {}]
  %s10 = inlined_call_operand.vmem [shape: bf16[128,128], index: 10, kind: input, shape index: {}]
  %s11 = inlined_call_operand.vmem [shape: f32[1,128], index: 11, kind: input, shape index: {}]
  %s12 = inlined_call_operand.vmem [shape: bf16[128,128], index: 12, kind: input, shape index: {}]
  %s13 = inlined_call_operand.vmem [shape: f32[1,128], index: 13, kind: input, shape index: {}]
  %s14 = inlined_call_operand.vmem [shape: bf16[256,512], index: 14, kind: input, shape index: {}]
  %s15 = inlined_call_operand.vmem [shape: f32[1,512], index: 15, kind: input, shape index: {}]
  %s16 = inlined_call_operand.vmem [shape: bf16[128,128], index: 16, kind: input, shape index: {}]
  %s17 = inlined_call_operand.vmem [shape: f32[1,128], index: 17, kind: input, shape index: {}]
  %s18 = inlined_call_operand.hbm [shape: f32[128,128], index: 18, kind: output, shape index: {0}]
  %s19 = inlined_call_operand.hbm [shape: f32[16,128], index: 19, kind: output, shape index: {1}]
  %s20 = inlined_call_operand.hbm [shape: f32[3,128,128], index: 20, kind: output, shape index: {2}]
  %s21 = inlined_call_operand.vmem [shape: f32[3,16,128], index: 21, kind: output, shape index: {3}]
  %s22 = inlined_call_operand.hbm [shape: f32[128,128], index: 22, kind: output, shape index: {4}]
  %23 = xla_tuple %s18, %s19, %s20, %s21, %s22
  %s24 = sld [smem:[#allocation0]]
  $region145: #{recurrent_rgcn_forward.1} parent=0
    _
  %s26 = ssub.s32 1, %s24
  %s27 = scalar_select 0, %s26, %s24
  $region1: #{recurrent_rgcn_forward.1} parent=0
    #allocation4 [shape = 'u8[65536]{0}', space=vmem, size = 0x10000, scoped, tag = 'output window, operand 0, single buffered']
    #allocation5 [shape = 's32[2]{0}', space=sflag, size = 0x8, scoped, tag = 'scoped memory for recurrent_rgcn_forward.1']
    #allocation6 [shape = 'u8[8192]{0}', space=vmem, size = 0x2000, scoped, tag = 'output window, operand 1, single buffered']
    #allocation7 [shape = 's32[1]{0}', space=sflag, size = 0x4, scoped, tag = 'scoped memory for recurrent_rgcn_forward.1']
    #allocation8 [shape = 'u8[131072]{0}', space=vmem, size = 0x20000, scoped, tag = 'output window, operand 2']
    #allocation9 [shape = 'u8[65536]{0}', space=vmem, size = 0x10000, scoped, tag = 'output window, operand 4, single buffered']
    %28 = vsyncpa [#allocation5], 0
    %29 = vsyncpa [#allocation7], 0
    loop: start=0, step=1, limit=5
    $region2: #{recurrent_rgcn_forward.1} parent=1 // loop_pre_header
      _
    $region3: #{recurrent_rgcn_forward.1} parent=1 // loop_header
      %s31 = sphi 0, %s35
      %p32 = scmp.ge.s32.totalorder %s31, 5
      %s41 = sphi 0, %s43
      %s44 = sphi 0, %s41
      %s45 = sphi 0, %s44
      %s61 = sphi 0, %s45
      %s65 = sphi 0, %s65
      %s67 = sphi 0, %s65
      %s68 = sphi 0, %s67
      %s82 = sphi 0, %s68
      %s86 = sphi 0, %s86
      %s88 = sphi 0, %s86
      %s89 = sphi 0, %s88
      %s103 = sphi 0, %s89
      %s107 = sphi 0, %s107
      %s109 = sphi 0, %s107
      %s110 = sphi 0, %s109
      %s124 = sphi 0, %s110
      %s128 = sphi 0, %s128
      %s130 = sphi 0, %s128
      %s131 = sphi 0, %s130
      %s145 = sphi 0, %s131
      %s149 = sphi 0, %s149
      %s151 = sphi 0, %s149
      %s152 = sphi 0, %s151
      %s166 = sphi 0, %s152
      %s170 = sphi 0, %s170
      %s172 = sphi 0, %s170
      %s173 = sphi 0, %s172
      %s187 = sphi 0, %s173
      %s191 = sphi 0, %s191
      %s193 = sphi 0, %s191
      %s194 = sphi 0, %s193
      %s208 = sphi 0, %s194
      %s212 = sphi 0, %s212
      %s214 = sphi 0, %s212
      %s215 = sphi 0, %s214
      %s229 = sphi 0, %s215
      %s233 = sphi 0, %s233
      %s235 = sphi 0, %s233
      %s236 = sphi 0, %s235
      %s250 = sphi 0, %s236
      %s254 = sphi 0, %s254
      %s256 = sphi 0, %s254
      %s257 = sphi 0, %s256
      %s271 = sphi 0, %s257
      %s275 = sphi 0, %s275
      %s277 = sphi 0, %s275
      %s278 = sphi 0, %s277
      %s292 = sphi 0, %s278
      %s296 = sphi 0, %s296
      %s298 = sphi 0, %s296
      %s299 = sphi 0, %s298
      %s313 = sphi 0, %s299
      %s317 = sphi 0, %s317
      %s319 = sphi 0, %s317
      %s320 = sphi 0, %s319
      %s334 = sphi 0, %s320
      %s338 = sphi 0, %s338
      %s340 = sphi 0, %s338
      %s341 = sphi 0, %s340
      %s355 = sphi 0, %s341
      %s359 = sphi 0, %s359
      %s361 = sphi 0, %s359
      %s362 = sphi 0, %s361
      %s376 = sphi 0, %s362
      %s380 = sphi 0, %s380
      %s382 = sphi 0, %s380
      %s383 = sphi 0, %s382
      %s397 = sphi 0, %s383
      %s401 = sphi 0, %s401
      %s403 = sphi 0, %s401
      %s404 = sphi 0, %s403
      %s418 = sphi 0, %s404
      %s422 = sphi 0, %s422
      %s424 = sphi 0, %s422
      %s425 = sphi 0, %s424
      %s439 = sphi 0, %s425
      %s443 = sphi 0, %s443
      %s445 = sphi 0, %s443
      %s446 = sphi 0, %s445
      %s460 = sphi 0, %s446
      %s466 = sphi 0, %s468
      %s469 = sphi 0, %s466
      %s470 = sphi 0, %s469
      %s486 = sphi 0, %s470
      %s492 = sphi 0, %s494
      %s495 = sphi 0, %s492
      %s496 = sphi 0, %s495
      %s512 = sphi 0, %s496
      %s516 = sphi 0, %s516
      %s518 = sphi 0, %s516
      %s519 = sphi 0, %s518
      %s533 = sphi 0, %s519
    $region4: #{recurrent_rgcn_forward.1} parent=1 // loop_header_branch
      %34 = sbr.rel (%p32) target = $region8
    $region5: #{recurrent_rgcn_forward.1} parent=1 // loop_body
      %s36 = ssub.s32 %s31, 1
      %s37 = ssub.s32 %s31, 2
      %s38 = sadd.s32 %s31, 1
      %s39 = ssub.s32 %s31, %s38
      %p40 = scmp.eq.s32.totalorder %s39, 0
      %s42 = sadd.s32 %s41, 1
      %s43 = scalar_select %p40, %s41, %s42
      %p46 = pneg %p40
      %p47 = scmp.eq.s32.totalorder %s31, 2
      %p48 = por %p46, %p47
      %p49 = scmp.ne.s32.totalorder %s41, %s44
      %p50 = scmp.eq.s32.totalorder %s31, 0
      %p51 = por %p49, %p50
      %p52 = scmp.ne.s32.totalorder %s41, %s44
      %p53 = scmp.eq.s32.totalorder %s36, 2
      %p54 = por %p52, %p53
      %p55 = scmp.ne.s32.totalorder %s44, %s45
      %p56 = scmp.eq.s32.totalorder %s36, 0
      %p57 = por %p55, %p56
      %p58 = scmp.ne.s32.totalorder %s44, %s45
      %p59 = scmp.eq.s32.totalorder %s37, 2
      %p60 = por %p58, %p59
      %p62 = scmp.ne.s32.totalorder %s45, %s61
      %p63 = scmp.eq.s32.totalorder %s37, 0
      %p64 = por %p62, %p63
      %s66 = sadd.s32 %s65, 1
      %p69 = scmp.eq.s32.totalorder %s31, 2
      %p70 = scmp.ne.s32.totalorder %s65, %s67
      %p71 = scmp.eq.s32.totalorder %s31, 0
      %p72 = por %p70, %p71
      %p73 = scmp.ne.s32.totalorder %s65, %s67
      %p74 = scmp.eq.s32.totalorder %s36, 2
      %p75 = por %p73, %p74
      %p76 = scmp.ne.s32.totalorder %s67, %s68
      %p77 = scmp.eq.s32.totalorder %s36, 0
      %p78 = por %p76, %p77
      %p79 = scmp.ne.s32.totalorder %s67, %s68
      %p80 = scmp.eq.s32.totalorder %s37, 2
      %p81 = por %p79, %p80
      %p83 = scmp.ne.s32.totalorder %s68, %s82
      %p84 = scmp.eq.s32.totalorder %s37, 0
      %p85 = por %p83, %p84
      %s87 = sadd.s32 %s86, 1
      %p90 = scmp.eq.s32.totalorder %s31, 2
      %p91 = scmp.ne.s32.totalorder %s86, %s88
      %p92 = scmp.eq.s32.totalorder %s31, 0
      %p93 = por %p91, %p92
      %p94 = scmp.ne.s32.totalorder %s86, %s88
      %p95 = scmp.eq.s32.totalorder %s36, 2
      %p96 = por %p94, %p95
      %p97 = scmp.ne.s32.totalorder %s88, %s89
      %p98 = scmp.eq.s32.totalorder %s36, 0
      %p99 = por %p97, %p98
      %p100 = scmp.ne.s32.totalorder %s88, %s89
      %p101 = scmp.eq.s32.totalorder %s37, 2
      %p102 = por %p100, %p101
      %p104 = scmp.ne.s32.totalorder %s89, %s103
      %p105 = scmp.eq.s32.totalorder %s37, 0
      %p106 = por %p104, %p105
      %s108 = sadd.s32 %s107, 1
      %p111 = scmp.eq.s32.totalorder %s31, 2
      %p112 = scmp.ne.s32.totalorder %s107, %s109
      %p113 = scmp.eq.s32.totalorder %s31, 0
      %p114 = por %p112, %p113
      %p115 = scmp.ne.s32.totalorder %s107, %s109
      %p116 = scmp.eq.s32.totalorder %s36, 2
      %p117 = por %p115, %p116
      %p118 = scmp.ne.s32.totalorder %s109, %s110
      %p119 = scmp.eq.s32.totalorder %s36, 0
      %p120 = por %p118, %p119
      %p121 = scmp.ne.s32.totalorder %s109, %s110
      %p122 = scmp.eq.s32.totalorder %s37, 2
      %p123 = por %p121, %p122
      %p125 = scmp.ne.s32.totalorder %s110, %s124
      %p126 = scmp.eq.s32.totalorder %s37, 0
      %p127 = por %p125, %p126
      %s129 = sadd.s32 %s128, 1
      %p132 = scmp.eq.s32.totalorder %s31, 2
      %p133 = scmp.ne.s32.totalorder %s128, %s130
      %p134 = scmp.eq.s32.totalorder %s31, 0
      %p135 = por %p133, %p134
      %p136 = scmp.ne.s32.totalorder %s128, %s130
      %p137 = scmp.eq.s32.totalorder %s36, 2
      %p138 = por %p136, %p137
      %p139 = scmp.ne.s32.totalorder %s130, %s131
      %p140 = scmp.eq.s32.totalorder %s36, 0
      %p141 = por %p139, %p140
      %p142 = scmp.ne.s32.totalorder %s130, %s131
      %p143 = scmp.eq.s32.totalorder %s37, 2
      %p144 = por %p142, %p143
      %p146 = scmp.ne.s32.totalorder %s131, %s145
      %p147 = scmp.eq.s32.totalorder %s37, 0
      %p148 = por %p146, %p147
      %s150 = sadd.s32 %s149, 1
      %p153 = scmp.eq.s32.totalorder %s31, 2
      %p154 = scmp.ne.s32.totalorder %s149, %s151
      %p155 = scmp.eq.s32.totalorder %s31, 0
      %p156 = por %p154, %p155
      %p157 = scmp.ne.s32.totalorder %s149, %s151
      %p158 = scmp.eq.s32.totalorder %s36, 2
      %p159 = por %p157, %p158
      %p160 = scmp.ne.s32.totalorder %s151, %s152
      %p161 = scmp.eq.s32.totalorder %s36, 0
      %p162 = por %p160, %p161
      %p163 = scmp.ne.s32.totalorder %s151, %s152
      %p164 = scmp.eq.s32.totalorder %s37, 2
      %p165 = por %p163, %p164
      %p167 = scmp.ne.s32.totalorder %s152, %s166
      %p168 = scmp.eq.s32.totalorder %s37, 0
      %p169 = por %p167, %p168
      %s171 = sadd.s32 %s170, 1
      %p174 = scmp.eq.s32.totalorder %s31, 2
      %p175 = scmp.ne.s32.totalorder %s170, %s172
      %p176 = scmp.eq.s32.totalorder %s31, 0
      %p177 = por %p175, %p176
      %p178 = scmp.ne.s32.totalorder %s170, %s172
      %p179 = scmp.eq.s32.totalorder %s36, 2
      %p180 = por %p178, %p179
      %p181 = scmp.ne.s32.totalorder %s172, %s173
      %p182 = scmp.eq.s32.totalorder %s36, 0
      %p183 = por %p181, %p182
      %p184 = scmp.ne.s32.totalorder %s172, %s173
      %p185 = scmp.eq.s32.totalorder %s37, 2
      %p186 = por %p184, %p185
      %p188 = scmp.ne.s32.totalorder %s173, %s187
      %p189 = scmp.eq.s32.totalorder %s37, 0
      %p190 = por %p188, %p189
      %s192 = sadd.s32 %s191, 1
      %p195 = scmp.eq.s32.totalorder %s31, 2
      %p196 = scmp.ne.s32.totalorder %s191, %s193
      %p197 = scmp.eq.s32.totalorder %s31, 0
      %p198 = por %p196, %p197
      %p199 = scmp.ne.s32.totalorder %s191, %s193
      %p200 = scmp.eq.s32.totalorder %s36, 2
      %p201 = por %p199, %p200
      %p202 = scmp.ne.s32.totalorder %s193, %s194
      %p203 = scmp.eq.s32.totalorder %s36, 0
      %p204 = por %p202, %p203
      %p205 = scmp.ne.s32.totalorder %s193, %s194
      %p206 = scmp.eq.s32.totalorder %s37, 2
      %p207 = por %p205, %p206
      %p209 = scmp.ne.s32.totalorder %s194, %s208
      %p210 = scmp.eq.s32.totalorder %s37, 0
      %p211 = por %p209, %p210
      %s213 = sadd.s32 %s212, 1
      %p216 = scmp.eq.s32.totalorder %s31, 2
      %p217 = scmp.ne.s32.totalorder %s212, %s214
      %p218 = scmp.eq.s32.totalorder %s31, 0
      %p219 = por %p217, %p218
      %p220 = scmp.ne.s32.totalorder %s212, %s214
      %p221 = scmp.eq.s32.totalorder %s36, 2
      %p222 = por %p220, %p221
      %p223 = scmp.ne.s32.totalorder %s214, %s215
      %p224 = scmp.eq.s32.totalorder %s36, 0
      %p225 = por %p223, %p224
      %p226 = scmp.ne.s32.totalorder %s214, %s215
      %p227 = scmp.eq.s32.totalorder %s37, 2
      %p228 = por %p226, %p227
      %p230 = scmp.ne.s32.totalorder %s215, %s229
      %p231 = scmp.eq.s32.totalorder %s37, 0
      %p232 = por %p230, %p231
      %s234 = sadd.s32 %s233, 1
      %p237 = scmp.eq.s32.totalorder %s31, 2
      %p238 = scmp.ne.s32.totalorder %s233, %s235
      %p239 = scmp.eq.s32.totalorder %s31, 0
      %p240 = por %p238, %p239
      %p241 = scmp.ne.s32.totalorder %s233, %s235
      %p242 = scmp.eq.s32.totalorder %s36, 2
      %p243 = por %p241, %p242
      %p244 = scmp.ne.s32.totalorder %s235, %s236
      %p245 = scmp.eq.s32.totalorder %s36, 0
      %p246 = por %p244, %p245
      %p247 = scmp.ne.s32.totalorder %s235, %s236
      %p248 = scmp.eq.s32.totalorder %s37, 2
      %p249 = por %p247, %p248
      %p251 = scmp.ne.s32.totalorder %s236, %s250
      %p252 = scmp.eq.s32.totalorder %s37, 0
      %p253 = por %p251, %p252
      %s255 = sadd.s32 %s254, 1
      %p258 = scmp.eq.s32.totalorder %s31, 2
      %p259 = scmp.ne.s32.totalorder %s254, %s256
      %p260 = scmp.eq.s32.totalorder %s31, 0
      %p261 = por %p259, %p260
      %p262 = scmp.ne.s32.totalorder %s254, %s256
      %p263 = scmp.eq.s32.totalorder %s36, 2
      %p264 = por %p262, %p263
      %p265 = scmp.ne.s32.totalorder %s256, %s257
      %p266 = scmp.eq.s32.totalorder %s36, 0
      %p267 = por %p265, %p266
      %p268 = scmp.ne.s32.totalorder %s256, %s257
      %p269 = scmp.eq.s32.totalorder %s37, 2
      %p270 = por %p268, %p269
      %p272 = scmp.ne.s32.totalorder %s257, %s271
      %p273 = scmp.eq.s32.totalorder %s37, 0
      %p274 = por %p272, %p273
      %s276 = sadd.s32 %s275, 1
      %p279 = scmp.eq.s32.totalorder %s31, 2
      %p280 = scmp.ne.s32.totalorder %s275, %s277
      %p281 = scmp.eq.s32.totalorder %s31, 0
      %p282 = por %p280, %p281
      %p283 = scmp.ne.s32.totalorder %s275, %s277
      %p284 = scmp.eq.s32.totalorder %s36, 2
      %p285 = por %p283, %p284
      %p286 = scmp.ne.s32.totalorder %s277, %s278
      %p287 = scmp.eq.s32.totalorder %s36, 0
      %p288 = por %p286, %p287
      %p289 = scmp.ne.s32.totalorder %s277, %s278
      %p290 = scmp.eq.s32.totalorder %s37, 2
      %p291 = por %p289, %p290
      %p293 = scmp.ne.s32.totalorder %s278, %s292
      %p294 = scmp.eq.s32.totalorder %s37, 0
      %p295 = por %p293, %p294
      %s297 = sadd.s32 %s296, 1
      %p300 = scmp.eq.s32.totalorder %s31, 2
      %p301 = scmp.ne.s32.totalorder %s296, %s298
      %p302 = scmp.eq.s32.totalorder %s31, 0
      %p303 = por %p301, %p302
      %p304 = scmp.ne.s32.totalorder %s296, %s298
      %p305 = scmp.eq.s32.totalorder %s36, 2
      %p306 = por %p304, %p305
      %p307 = scmp.ne.s32.totalorder %s298, %s299
      %p308 = scmp.eq.s32.totalorder %s36, 0
      %p309 = por %p307, %p308
      %p310 = scmp.ne.s32.totalorder %s298, %s299
      %p311 = scmp.eq.s32.totalorder %s37, 2
      %p312 = por %p310, %p311
      %p314 = scmp.ne.s32.totalorder %s299, %s313
      %p315 = scmp.eq.s32.totalorder %s37, 0
      %p316 = por %p314, %p315
      %s318 = sadd.s32 %s317, 1
      %p321 = scmp.eq.s32.totalorder %s31, 2
      %p322 = scmp.ne.s32.totalorder %s317, %s319
      %p323 = scmp.eq.s32.totalorder %s31, 0
      %p324 = por %p322, %p323
      %p325 = scmp.ne.s32.totalorder %s317, %s319
      %p326 = scmp.eq.s32.totalorder %s36, 2
      %p327 = por %p325, %p326
      %p328 = scmp.ne.s32.totalorder %s319, %s320
      %p329 = scmp.eq.s32.totalorder %s36, 0
      %p330 = por %p328, %p329
      %p331 = scmp.ne.s32.totalorder %s319, %s320
      %p332 = scmp.eq.s32.totalorder %s37, 2
      %p333 = por %p331, %p332
      %p335 = scmp.ne.s32.totalorder %s320, %s334
      %p336 = scmp.eq.s32.totalorder %s37, 0
      %p337 = por %p335, %p336
      %s339 = sadd.s32 %s338, 1
      %p342 = scmp.eq.s32.totalorder %s31, 2
      %p343 = scmp.ne.s32.totalorder %s338, %s340
      %p344 = scmp.eq.s32.totalorder %s31, 0
      %p345 = por %p343, %p344
      %p346 = scmp.ne.s32.totalorder %s338, %s340
      %p347 = scmp.eq.s32.totalorder %s36, 2
      %p348 = por %p346, %p347
      %p349 = scmp.ne.s32.totalorder %s340, %s341
      %p350 = scmp.eq.s32.totalorder %s36, 0
      %p351 = por %p349, %p350
      %p352 = scmp.ne.s32.totalorder %s340, %s341
      %p353 = scmp.eq.s32.totalorder %s37, 2
      %p354 = por %p352, %p353
      %p356 = scmp.ne.s32.totalorder %s341, %s355
      %p357 = scmp.eq.s32.totalorder %s37, 0
      %p358 = por %p356, %p357
      %s360 = sadd.s32 %s359, 1
      %p363 = scmp.eq.s32.totalorder %s31, 2
      %p364 = scmp.ne.s32.totalorder %s359, %s361
      %p365 = scmp.eq.s32.totalorder %s31, 0
      %p366 = por %p364, %p365
      %p367 = scmp.ne.s32.totalorder %s359, %s361
      %p368 = scmp.eq.s32.totalorder %s36, 2
      %p369 = por %p367, %p368
      %p370 = scmp.ne.s32.totalorder %s361, %s362
      %p371 = scmp.eq.s32.totalorder %s36, 0
      %p372 = por %p370, %p371
      %p373 = scmp.ne.s32.totalorder %s361, %s362
      %p374 = scmp.eq.s32.totalorder %s37, 2
      %p375 = por %p373, %p374
      %p377 = scmp.ne.s32.totalorder %s362, %s376
      %p378 = scmp.eq.s32.totalorder %s37, 0
      %p379 = por %p377, %p378
      %s381 = sadd.s32 %s380, 1
      %p384 = scmp.eq.s32.totalorder %s31, 2
      %p385 = scmp.ne.s32.totalorder %s380, %s382
      %p386 = scmp.eq.s32.totalorder %s31, 0
      %p387 = por %p385, %p386
      %p388 = scmp.ne.s32.totalorder %s380, %s382
      %p389 = scmp.eq.s32.totalorder %s36, 2
      %p390 = por %p388, %p389
      %p391 = scmp.ne.s32.totalorder %s382, %s383
      %p392 = scmp.eq.s32.totalorder %s36, 0
      %p393 = por %p391, %p392
      %p394 = scmp.ne.s32.totalorder %s382, %s383
      %p395 = scmp.eq.s32.totalorder %s37, 2
      %p396 = por %p394, %p395
      %p398 = scmp.ne.s32.totalorder %s383, %s397
      %p399 = scmp.eq.s32.totalorder %s37, 0
      %p400 = por %p398, %p399
      %s402 = sadd.s32 %s401, 1
      %p405 = scmp.eq.s32.totalorder %s31, 2
      %p406 = scmp.ne.s32.totalorder %s401, %s403
      %p407 = scmp.eq.s32.totalorder %s31, 0
      %p408 = por %p406, %p407
      %p409 = scmp.ne.s32.totalorder %s401, %s403
      %p410 = scmp.eq.s32.totalorder %s36, 2
      %p411 = por %p409, %p410
      %p412 = scmp.ne.s32.totalorder %s403, %s404
      %p413 = scmp.eq.s32.totalorder %s36, 0
      %p414 = por %p412, %p413
      %p415 = scmp.ne.s32.totalorder %s403, %s404
      %p416 = scmp.eq.s32.totalorder %s37, 2
      %p417 = por %p415, %p416
      %p419 = scmp.ne.s32.totalorder %s404, %s418
      %p420 = scmp.eq.s32.totalorder %s37, 0
      %p421 = por %p419, %p420
      %s423 = sadd.s32 %s422, 1
      %p426 = scmp.eq.s32.totalorder %s31, 2
      %p427 = scmp.ne.s32.totalorder %s422, %s424
      %p428 = scmp.eq.s32.totalorder %s31, 0
      %p429 = por %p427, %p428
      %p430 = scmp.ne.s32.totalorder %s422, %s424
      %p431 = scmp.eq.s32.totalorder %s36, 2
      %p432 = por %p430, %p431
      %p433 = scmp.ne.s32.totalorder %s424, %s425
      %p434 = scmp.eq.s32.totalorder %s36, 0
      %p435 = por %p433, %p434
      %p436 = scmp.ne.s32.totalorder %s424, %s425
      %p437 = scmp.eq.s32.totalorder %s37, 2
      %p438 = por %p436, %p437
      %p440 = scmp.ne.s32.totalorder %s425, %s439
      %p441 = scmp.eq.s32.totalorder %s37, 0
      %p442 = por %p440, %p441
      %s444 = sadd.s32 %s443, 1
      %p447 = scmp.eq.s32.totalorder %s31, 2
      %p448 = scmp.ne.s32.totalorder %s443, %s445
      %p449 = scmp.eq.s32.totalorder %s31, 0
      %p450 = por %p448, %p449
      %p451 = scmp.ne.s32.totalorder %s443, %s445
      %p452 = scmp.eq.s32.totalorder %s36, 2
      %p453 = por %p451, %p452
      %p454 = scmp.ne.s32.totalorder %s445, %s446
      %p455 = scmp.eq.s32.totalorder %s36, 0
      %p456 = por %p454, %p455
      %p457 = scmp.ne.s32.totalorder %s445, %s446
      %p458 = scmp.eq.s32.totalorder %s37, 2
      %p459 = por %p457, %p458
      %p461 = scmp.ne.s32.totalorder %s446, %s460
      %p462 = scmp.eq.s32.totalorder %s37, 0
      %p463 = por %p461, %p462
      %s464 = ssub.s32 %s31, %s38
      %p465 = scmp.eq.s32.totalorder %s464, 0
      %s467 = sadd.s32 %s466, 1
      %s468 = scalar_select %p465, %s466, %s467
      %p471 = pneg %p465
      %p472 = scmp.eq.s32.totalorder %s31, 2
      %p473 = por %p471, %p472
      %p474 = scmp.ne.s32.totalorder %s466, %s469
      %p475 = scmp.eq.s32.totalorder %s31, 0
      %p476 = por %p474, %p475
      %p477 = scmp.ne.s32.totalorder %s466, %s469
      %p478 = scmp.eq.s32.totalorder %s36, 2
      %p479 = por %p477, %p478
      %p480 = scmp.ne.s32.totalorder %s469, %s470
      %p481 = scmp.eq.s32.totalorder %s36, 0
      %p482 = por %p480, %p481
      %p483 = scmp.ne.s32.totalorder %s469, %s470
      %p484 = scmp.eq.s32.totalorder %s37, 2
      %p485 = por %p483, %p484
      %p487 = scmp.ne.s32.totalorder %s470, %s486
      %p488 = scmp.eq.s32.totalorder %s37, 0
      %p489 = por %p487, %p488
      %s490 = ssub.s32 %s31, %s38
      %p491 = scmp.eq.s32.totalorder %s490, 0
      %s493 = sadd.s32 %s492, 1
      %s494 = scalar_select %p491, %s492, %s493
      %p497 = pneg %p491
      %p498 = scmp.eq.s32.totalorder %s31, 2
      %p499 = por %p497, %p498
      %p500 = scmp.ne.s32.totalorder %s492, %s495
      %p501 = scmp.eq.s32.totalorder %s31, 0
      %p502 = por %p500, %p501
      %p503 = scmp.ne.s32.totalorder %s492, %s495
      %p504 = scmp.eq.s32.totalorder %s36, 2
      %p505 = por %p503, %p504
      %p506 = scmp.ne.s32.totalorder %s495, %s496
      %p507 = scmp.eq.s32.totalorder %s36, 0
      %p508 = por %p506, %p507
      %p509 = scmp.ne.s32.totalorder %s495, %s496
      %p510 = scmp.eq.s32.totalorder %s37, 2
      %p511 = por %p509, %p510
      %p513 = scmp.ne.s32.totalorder %s496, %s512
      %p514 = scmp.eq.s32.totalorder %s37, 0
      %p515 = por %p513, %p514
      %s517 = sadd.s32 %s516, 1
      %p520 = scmp.eq.s32.totalorder %s31, 2
      %p521 = scmp.ne.s32.totalorder %s516, %s518
      %p522 = scmp.eq.s32.totalorder %s31, 0
      %p523 = por %p521, %p522
      %p524 = scmp.ne.s32.totalorder %s516, %s518
      %p525 = scmp.eq.s32.totalorder %s36, 2
      %p526 = por %p524, %p525
      %p527 = scmp.ne.s32.totalorder %s518, %s519
      %p528 = scmp.eq.s32.totalorder %s36, 0
      %p529 = por %p527, %p528
      %p530 = scmp.ne.s32.totalorder %s518, %s519
      %p531 = scmp.eq.s32.totalorder %s37, 2
      %p532 = por %p530, %p531
      %p534 = scmp.ne.s32.totalorder %s519, %s533
      %p535 = scmp.eq.s32.totalorder %s37, 0
      %p536 = por %p534, %p535
      %p537 = scmp.le.s32.totalorder 1, %s31
      %p538 = scmp.lt.s32.totalorder %s31, 4
      %p539 = pnand %p537, %p538
      %p540 = pneg %p539
      // Predicated region
      $region9: #{recurrent_rgcn_forward.1} parent=5 // pred_check
        _
      $region10: #{recurrent_rgcn_forward.1} parent=5 // pred_check_branch
        %542 = sbr.rel (%p539) target = $region12
      $region11: #{recurrent_rgcn_forward.1} parent=5 // pred_region
        %s543 = ssub.s32 %s31, 1
        // Predicated region
        $region13: #{recurrent_rgcn_forward.1} parent=11 // pred_check
          %p544 = pneg %p78
        $region14: #{recurrent_rgcn_forward.1} parent=11 // pred_check_branch
          %546 = sbr.rel (%p544) target = $region16
        $region15: #{recurrent_rgcn_forward.1} parent=11 // pred_region
          _
        $region16: #{recurrent_rgcn_forward.1} parent=11 // pred_fallthru
          _
        // Predicated region
        $region17: #{recurrent_rgcn_forward.1} parent=11 // pred_check
          %p547 = pneg %p99
        $region18: #{recurrent_rgcn_forward.1} parent=11 // pred_check_branch
          %549 = sbr.rel (%p547) target = $region20
        $region19: #{recurrent_rgcn_forward.1} parent=11 // pred_region
          _
        $region20: #{recurrent_rgcn_forward.1} parent=11 // pred_fallthru
          _
        // Predicated region
        $region21: #{recurrent_rgcn_forward.1} parent=11 // pred_check
          %p550 = pneg %p120
        $region22: #{recurrent_rgcn_forward.1} parent=11 // pred_check_branch
          %552 = sbr.rel (%p550) target = $region24
        $region23: #{recurrent_rgcn_forward.1} parent=11 // pred_region
          _
        $region24: #{recurrent_rgcn_forward.1} parent=11 // pred_fallthru
          _
        // Predicated region
        $region25: #{recurrent_rgcn_forward.1} parent=11 // pred_check
          %p553 = pneg %p141
        $region26: #{recurrent_rgcn_forward.1} parent=11 // pred_check_branch
          %555 = sbr.rel (%p553) target = $region28
        $region27: #{recurrent_rgcn_forward.1} parent=11 // pred_region
          _
        $region28: #{recurrent_rgcn_forward.1} parent=11 // pred_fallthru
          _
        // Predicated region
        $region29: #{recurrent_rgcn_forward.1} parent=11 // pred_check
          %p556 = pneg %p162
        $region30: #{recurrent_rgcn_forward.1} parent=11 // pred_check_branch
          %558 = sbr.rel (%p556) target = $region32
        $region31: #{recurrent_rgcn_forward.1} parent=11 // pred_region
          _
        $region32: #{recurrent_rgcn_forward.1} parent=11 // pred_fallthru
          _
        // Predicated region
        $region33: #{recurrent_rgcn_forward.1} parent=11 // pred_check
          %p559 = pneg %p183
        $region34: #{recurrent_rgcn_forward.1} parent=11 // pred_check_branch
          %561 = sbr.rel (%p559) target = $region36
        $region35: #{recurrent_rgcn_forward.1} parent=11 // pred_region
          _
        $region36: #{recurrent_rgcn_forward.1} parent=11 // pred_fallthru
          _
        // Predicated region
        $region37: #{recurrent_rgcn_forward.1} parent=11 // pred_check
          %p562 = pneg %p204
        $region38: #{recurrent_rgcn_forward.1} parent=11 // pred_check_branch
          %564 = sbr.rel (%p562) target = $region40
        $region39: #{recurrent_rgcn_forward.1} parent=11 // pred_region
          _
        $region40: #{recurrent_rgcn_forward.1} parent=11 // pred_fallthru
          _
        // Predicated region
        $region41: #{recurrent_rgcn_forward.1} parent=11 // pred_check
          %p565 = pneg %p225
        $region42: #{recurrent_rgcn_forward.1} parent=11 // pred_check_branch
          %567 = sbr.rel (%p565) target = $region44
        $region43: #{recurrent_rgcn_forward.1} parent=11 // pred_region
          _
        $region44: #{recurrent_rgcn_forward.1} parent=11 // pred_fallthru
          _
        // Predicated region
        $region45: #{recurrent_rgcn_forward.1} parent=11 // pred_check
          %p568 = pneg %p246
        $region46: #{recurrent_rgcn_forward.1} parent=11 // pred_check_branch
          %570 = sbr.rel (%p568) target = $region48
        $region47: #{recurrent_rgcn_forward.1} parent=11 // pred_region
          _
        $region48: #{recurrent_rgcn_forward.1} parent=11 // pred_fallthru
          _
        // Predicated region
        $region49: #{recurrent_rgcn_forward.1} parent=11 // pred_check
          %p571 = pneg %p267
        $region50: #{recurrent_rgcn_forward.1} parent=11 // pred_check_branch
          %573 = sbr.rel (%p571) target = $region52
        $region51: #{recurrent_rgcn_forward.1} parent=11 // pred_region
          _
        $region52: #{recurrent_rgcn_forward.1} parent=11 // pred_fallthru
          _
        // Predicated region
        $region53: #{recurrent_rgcn_forward.1} parent=11 // pred_check
          %p574 = pneg %p288
        $region54: #{recurrent_rgcn_forward.1} parent=11 // pred_check_branch
          %576 = sbr.rel (%p574) target = $region56
        $region55: #{recurrent_rgcn_forward.1} parent=11 // pred_region
          _
        $region56: #{recurrent_rgcn_forward.1} parent=11 // pred_fallthru
          _
        // Predicated region
        $region57: #{recurrent_rgcn_forward.1} parent=11 // pred_check
          %p577 = pneg %p309
        $region58: #{recurrent_rgcn_forward.1} parent=11 // pred_check_branch
          %579 = sbr.rel (%p577) target = $region60
        $region59: #{recurrent_rgcn_forward.1} parent=11 // pred_region
          _
        $region60: #{recurrent_rgcn_forward.1} parent=11 // pred_fallthru
          _
        // Predicated region
        $region61: #{recurrent_rgcn_forward.1} parent=11 // pred_check
          %p580 = pneg %p330
        $region62: #{recurrent_rgcn_forward.1} parent=11 // pred_check_branch
          %582 = sbr.rel (%p580) target = $region64
        $region63: #{recurrent_rgcn_forward.1} parent=11 // pred_region
          _
        $region64: #{recurrent_rgcn_forward.1} parent=11 // pred_fallthru
          _
        // Predicated region
        $region65: #{recurrent_rgcn_forward.1} parent=11 // pred_check
          %p583 = pneg %p351
        $region66: #{recurrent_rgcn_forward.1} parent=11 // pred_check_branch
          %585 = sbr.rel (%p583) target = $region68
        $region67: #{recurrent_rgcn_forward.1} parent=11 // pred_region
          _
        $region68: #{recurrent_rgcn_forward.1} parent=11 // pred_fallthru
          _
        // Predicated region
        $region69: #{recurrent_rgcn_forward.1} parent=11 // pred_check
          %p586 = pneg %p372
        $region70: #{recurrent_rgcn_forward.1} parent=11 // pred_check_branch
          %588 = sbr.rel (%p586) target = $region72
        $region71: #{recurrent_rgcn_forward.1} parent=11 // pred_region
          _
        $region72: #{recurrent_rgcn_forward.1} parent=11 // pred_fallthru
          _
        // Predicated region
        $region73: #{recurrent_rgcn_forward.1} parent=11 // pred_check
          %p589 = pneg %p393
        $region74: #{recurrent_rgcn_forward.1} parent=11 // pred_check_branch
          %591 = sbr.rel (%p589) target = $region76
        $region75: #{recurrent_rgcn_forward.1} parent=11 // pred_region
          _
        $region76: #{recurrent_rgcn_forward.1} parent=11 // pred_fallthru
          _
        // Predicated region
        $region77: #{recurrent_rgcn_forward.1} parent=11 // pred_check
          %p592 = pneg %p414
        $region78: #{recurrent_rgcn_forward.1} parent=11 // pred_check_branch
          %594 = sbr.rel (%p592) target = $region80
        $region79: #{recurrent_rgcn_forward.1} parent=11 // pred_region
          _
        $region80: #{recurrent_rgcn_forward.1} parent=11 // pred_fallthru
          _
      $region12: #{recurrent_rgcn_forward.1} parent=5 // pred_fallthru
        _
      %p595 = scmp.lt.s32.totalorder %s31, 3
      // Predicated region
      $region81: #{recurrent_rgcn_forward.1} parent=5 // pred_check
        %p596 = pneg %p595
      $region82: #{recurrent_rgcn_forward.1} parent=5 // pred_check_branch
        %598 = sbr.rel (%p596) target = $region84
      $region83: #{recurrent_rgcn_forward.1} parent=5 // pred_region
        // Predicated region
        $region85: #{recurrent_rgcn_forward.1} parent=83 // pred_check
          %p599 = pneg %p51
        $region86: #{recurrent_rgcn_forward.1} parent=83 // pred_check_branch
          %601 = sbr.rel (%p599) target = $region88
        $region87: #{recurrent_rgcn_forward.1} parent=83 // pred_region
          %p602 = scmp.lt.s32.totalorder %s31, 2
          %s603 = scalar_select %p602, %s31, 2
          %s604 = smul.addr %s603, 16
          %s605 = smul.addr %s604, 4
          %s606 = scalar_lea.vmem %s0, %s605
        $region88: #{recurrent_rgcn_forward.1} parent=83 // pred_fallthru
          _
      $region84: #{recurrent_rgcn_forward.1} parent=5 // pred_fallthru
        _
      %p607 = scmp.le.s32.totalorder 1, %s31
      %p608 = scmp.lt.s32.totalorder %s31, 4
      %p609 = pnand %p607, %p608
      %p610 = pneg %p609
      // Predicated region
      $region89: #{recurrent_rgcn_forward.1} parent=5 // pred_check
        _
      $region90: #{recurrent_rgcn_forward.1} parent=5 // pred_check_branch
        %612 = sbr.rel (%p609) target = $region92
      $region91: #{recurrent_rgcn_forward.1} parent=5 // pred_region
        %s613 = ssub.s32 %s31, 1
        %p614 = scmp.lt.s32.totalorder %s36, 2
        %s615 = scalar_select %p614, %s36, 2
        %s616 = smul.addr %s615, 16
        %s617 = smul.addr %s616, 4
        %s618 = scalar_lea.vmem %s0, %s617
        %p619 = pneg %p57
        %p620 = pneg %p54
        %p621 = pneg %p78
        %p622 = pneg %p75
        %p623 = pneg %p99
        %p624 = pneg %p96
        %p625 = pneg %p120
        %p626 = pneg %p117
        %p627 = pneg %p141
        %p628 = pneg %p138
        %p629 = pneg %p162
        %p630 = pneg %p159
        %p631 = pneg %p183
        %p632 = pneg %p180
        %p633 = pneg %p204
        %p634 = pneg %p201
        %p635 = pneg %p225
        %p636 = pneg %p222
        %p637 = pneg %p246
        %p638 = pneg %p243
        %p639 = pneg %p267
        %p640 = pneg %p264
        %p641 = pneg %p288
        %p642 = pneg %p285
        %p643 = pneg %p309
        %p644 = pneg %p306
        %p645 = pneg %p330
        %p646 = pneg %p327
        %p647 = pneg %p351
        %p648 = pneg %p348
        %p649 = pneg %p372
        %p650 = pneg %p369
        %p651 = pneg %p393
        %p652 = pneg %p390
        %p653 = pneg %p414
        %p654 = pneg %p411
        %p655 = pneg %p435
        %p656 = pneg %p432
        %p657 = pneg %p456
        %p658 = pneg %p453
        %p659 = pneg %p482
        %p660 = pneg %p479
        %s661 = sand.u32 %s36, 1
        %s662 = scalar_lea.sflag [#allocation5], %s661
        %s663 = sand.u32 %s469, 1
        %s664 = smul.addr %s663, 128
        %s665 = scalar_lea.vmem [#allocation8], %s664
        %p666 = pneg %p508
        %p667 = pneg %p505
        %p668 = scmp.lt.s32.totalorder %s36, 2
        %s669 = scalar_select %p668, %s36, 2
        %s670 = smul.addr %s669, 2
        %s671 = smul.addr %s670, 8
        %s672 = scalar_lea.vmem %s21, %s671
        %p673 = pneg %p529
        %p674 = pneg %p526
        %p675 = scmp.lt.s32.totalorder %s36, 2
        %s676 = scalar_select %p675, %s36, 2
        %s677 = smul.addr %s676, 16
        %s678 = smul.addr %s677, 4
        %s679 = scalar_lea.vmem %s0, %s678
        %p680 = scmp.lt.s32.totalorder %s36, 2
        %s681 = scalar_select %p680, %s36, 2
        %s682 = smul.addr %s681, 2
        %s683 = smul.addr %s682, 8
        %s684 = scalar_lea.vmem %s21, %s683
        %p686 = scmp.eq.s32.totalorder %s36, 0
        // Predicated region
        $region93: #{recurrent_rgcn_forward.1} parent=91 // pred_check
          %p687 = pneg %p686
        $region94: #{recurrent_rgcn_forward.1} parent=91 // pred_check_branch
          %689 = sbr.rel (%p687) target = $region96
        $region95: #{recurrent_rgcn_forward.1} parent=91 // pred_region
          %v690 = vld [vmem:[%s4] sm:$0xff]
          %v691 = vld [vmem:[%s4 + $0x8] sm:$0xff]
          %v692 = vld [vmem:[%s4 + $0x10] sm:$0xff]
          %v693 = vld [vmem:[%s4 + $0x18] sm:$0xff]
          %v694 = vld [vmem:[%s4 + $0x20] sm:$0xff]
          %v695 = vld [vmem:[%s4 + $0x28] sm:$0xff]
          %v696 = vld [vmem:[%s4 + $0x30] sm:$0xff]
          %v697 = vld [vmem:[%s4 + $0x38] sm:$0xff]
          %v698 = vld [vmem:[%s4 + $0x40] sm:$0xff]
          %v699 = vld [vmem:[%s4 + $0x48] sm:$0xff]
          %v700 = vld [vmem:[%s4 + $0x50] sm:$0xff]
          %v701 = vld [vmem:[%s4 + $0x58] sm:$0xff]
          %v702 = vld [vmem:[%s4 + $0x60] sm:$0xff]
          %v703 = vld [vmem:[%s4 + $0x68] sm:$0xff]
          %v704 = vld [vmem:[%s4 + $0x70] sm:$0xff]
          %v705 = vld [vmem:[%s4 + $0x78] sm:$0xff]
          %v706 = vmul.f32 %v690, %v690
          %v707 = vmul.f32 %v691, %v691
          %v708 = vmul.f32 %v692, %v692
          %v709 = vmul.f32 %v693, %v693
          %v710 = vmul.f32 %v694, %v694
          %v711 = vmul.f32 %v695, %v695
          %v712 = vmul.f32 %v696, %v696
          %v713 = vmul.f32 %v697, %v697
          %v714 = vmul.f32 %v698, %v698
          %v715 = vmul.f32 %v699, %v699
          %v716 = vmul.f32 %v700, %v700
          %v717 = vmul.f32 %v701, %v701
          %v718 = vmul.f32 %v702, %v702
          %v719 = vmul.f32 %v703, %v703
          %v720 = vmul.f32 %v704, %v704
          %v721 = vmul.f32 %v705, %v705
          %722 = vadd.xlane.f32.xlu0 %v706
          %v723 = vpop.xlane.xlu0 %722
          %724 = vadd.xlane.f32.xlu0 %v707
          %v725 = vpop.xlane.xlu0 %724
          %726 = vadd.xlane.f32.xlu0 %v708
          %v727 = vpop.xlane.xlu0 %726
          %728 = vadd.xlane.f32.xlu0 %v709
          %v729 = vpop.xlane.xlu0 %728
          %730 = vadd.xlane.f32.xlu0 %v710
          %v731 = vpop.xlane.xlu0 %730
          %732 = vadd.xlane.f32.xlu0 %v711
          %v733 = vpop.xlane.xlu0 %732
          %734 = vadd.xlane.f32.xlu0 %v712
          %v735 = vpop.xlane.xlu0 %734
          %736 = vadd.xlane.f32.xlu0 %v713
          %v737 = vpop.xlane.xlu0 %736
          %738 = vadd.xlane.f32.xlu0 %v714
          %v739 = vpop.xlane.xlu0 %738
          %740 = vadd.xlane.f32.xlu0 %v715
          %v741 = vpop.xlane.xlu0 %740
          %742 = vadd.xlane.f32.xlu0 %v716
          %v743 = vpop.xlane.xlu0 %742
          %744 = vadd.xlane.f32.xlu0 %v717
          %v745 = vpop.xlane.xlu0 %744
          %746 = vadd.xlane.f32.xlu0 %v718
          %v747 = vpop.xlane.xlu0 %746
          %748 = vadd.xlane.f32.xlu0 %v719
          %v749 = vpop.xlane.xlu0 %748
          %750 = vadd.xlane.f32.xlu0 %v720
          %v751 = vpop.xlane.xlu0 %750
          %752 = vadd.xlane.f32.xlu0 %v721
          %v753 = vpop.xlane.xlu0 %752
          %v754 = vmax.f32 %v723, 1e-24
          %v755 = vmax.f32 %v725, 1e-24
          %v756 = vmax.f32 %v727, 1e-24
          %v757 = vmax.f32 %v729, 1e-24
          %v758 = vmax.f32 %v731, 1e-24
          %v759 = vmax.f32 %v733, 1e-24
          %v760 = vmax.f32 %v735, 1e-24
          %v761 = vmax.f32 %v737, 1e-24
          %v762 = vmax.f32 %v739, 1e-24
          %v763 = vmax.f32 %v741, 1e-24
          %v764 = vmax.f32 %v743, 1e-24
          %v765 = vmax.f32 %v745, 1e-24
          %v766 = vmax.f32 %v747, 1e-24
          %v767 = vmax.f32 %v749, 1e-24
          %v768 = vmax.f32 %v751, 1e-24
          %v769 = vmax.f32 %v753, 1e-24
          %v770 = vrsqrt.pop %v754
          %v771 = vrsqrt.pop %v755
          %v772 = vrsqrt.pop %v756
          %v773 = vrsqrt.pop %v757
          %v774 = vrsqrt.pop %v758
          %v775 = vrsqrt.pop %v759
          %v776 = vrsqrt.pop %v760
          %v777 = vrsqrt.pop %v761
          %v778 = vrsqrt.pop %v762
          %v779 = vrsqrt.pop %v763
          %v780 = vrsqrt.pop %v764
          %v781 = vrsqrt.pop %v765
          %v782 = vrsqrt.pop %v766
          %v783 = vrsqrt.pop %v767
          %v784 = vrsqrt.pop %v768
          %v785 = vrsqrt.pop %v769
          %v786 = vmul.f32 %v690, %v770
          %v787 = vmul.f32 %v691, %v771
          %v788 = vmul.f32 %v692, %v772
          %v789 = vmul.f32 %v693, %v773
          %v790 = vmul.f32 %v694, %v774
          %v791 = vmul.f32 %v695, %v775
          %v792 = vmul.f32 %v696, %v776
          %v793 = vmul.f32 %v697, %v777
          %v794 = vmul.f32 %v698, %v778
          %v795 = vmul.f32 %v699, %v779
          %v796 = vmul.f32 %v700, %v780
          %v797 = vmul.f32 %v701, %v781
          %v798 = vmul.f32 %v702, %v782
          %v799 = vmul.f32 %v703, %v783
          %v800 = vmul.f32 %v704, %v784
          %v801 = vmul.f32 %v705, %v785
          %802 = vst [vmem:[#allocation2] sm:$0xff] %v786
          %803 = vst [vmem:[#allocation2 + $0x8] sm:$0xff] %v787
          %804 = vst [vmem:[#allocation2 + $0x10] sm:$0xff] %v788
          %805 = vst [vmem:[#allocation2 + $0x18] sm:$0xff] %v789
          %806 = vst [vmem:[#allocation2 + $0x20] sm:$0xff] %v790
          %807 = vst [vmem:[#allocation2 + $0x28] sm:$0xff] %v791
          %808 = vst [vmem:[#allocation2 + $0x30] sm:$0xff] %v792
          %809 = vst [vmem:[#allocation2 + $0x38] sm:$0xff] %v793
          %810 = vst [vmem:[#allocation2 + $0x40] sm:$0xff] %v794
          %811 = vst [vmem:[#allocation2 + $0x48] sm:$0xff] %v795
          %812 = vst [vmem:[#allocation2 + $0x50] sm:$0xff] %v796
          %813 = vst [vmem:[#allocation2 + $0x58] sm:$0xff] %v797
          %814 = vst [vmem:[#allocation2 + $0x60] sm:$0xff] %v798
          %815 = vst [vmem:[#allocation2 + $0x68] sm:$0xff] %v799
          %816 = vst [vmem:[#allocation2 + $0x70] sm:$0xff] %v800
          %817 = vst [vmem:[#allocation2 + $0x78] sm:$0xff] %v801
          %818 = vst [vmem:[#allocation3] sm:$0xff] 0.0
          %819 = vst [vmem:[#allocation3 + $0x8] sm:$0xff] 0.0
          %820 = vst [vmem:[#allocation3 + $0x10] sm:$0xff] 0.0
          %821 = vst [vmem:[#allocation3 + $0x18] sm:$0xff] 0.0
          %822 = vst [vmem:[#allocation3 + $0x20] sm:$0xff] 0.0
          %823 = vst [vmem:[#allocation3 + $0x28] sm:$0xff] 0.0
          %824 = vst [vmem:[#allocation3 + $0x30] sm:$0xff] 0.0
          %825 = vst [vmem:[#allocation3 + $0x38] sm:$0xff] 0.0
          %826 = vst [vmem:[#allocation3 + $0x40] sm:$0xff] 0.0
          %827 = vst [vmem:[#allocation3 + $0x48] sm:$0xff] 0.0
          %828 = vst [vmem:[#allocation3 + $0x50] sm:$0xff] 0.0
          %829 = vst [vmem:[#allocation3 + $0x58] sm:$0xff] 0.0
          %830 = vst [vmem:[#allocation3 + $0x60] sm:$0xff] 0.0
          %831 = vst [vmem:[#allocation3 + $0x68] sm:$0xff] 0.0
          %832 = vst [vmem:[#allocation3 + $0x70] sm:$0xff] 0.0
          %833 = vst [vmem:[#allocation3 + $0x78] sm:$0xff] 0.0
          %v834 = vpack.c.bf16 %v787, %v786
          %v835 = vpack.c.bf16 %v789, %v788
          %v836 = vpack.c.bf16 %v791, %v790
          %v837 = vpack.c.bf16 %v793, %v792
          %v838 = vpack.c.bf16 %v795, %v794
          %v839 = vpack.c.bf16 %v797, %v796
          %v840 = vpack.c.bf16 %v799, %v798
          %v841 = vpack.c.bf16 %v801, %v800
          %v842 = vld [vmem:[%s3] sm:$0xf]
          %v843 = vld [vmem:[%s3 + $0x4] sm:$0xf]
          %v844 = vld [vmem:[%s3 + $0x8] sm:$0xf]
          %v845 = vld [vmem:[%s3 + $0xc] sm:$0xf]
          %v846 = vld [vmem:[%s3 + $0x10] sm:$0xf]
          %v847 = vld [vmem:[%s3 + $0x14] sm:$0xf]
          %v848 = vld [vmem:[%s3 + $0x18] sm:$0xf]
          %v849 = vld [vmem:[%s3 + $0x1c] sm:$0xf]
          %v850 = vld [vmem:[%s3 + $0x20] sm:$0xf]
          %v851 = vld [vmem:[%s3 + $0x24] sm:$0xf]
          %v852 = vld [vmem:[%s3 + $0x28] sm:$0xf]
          %v853 = vld [vmem:[%s3 + $0x2c] sm:$0xf]
          %v854 = vld [vmem:[%s3 + $0x30] sm:$0xf]
          %v855 = vld [vmem:[%s3 + $0x34] sm:$0xf]
          %v856 = vld [vmem:[%s3 + $0x38] sm:$0xf]
          %v857 = vld [vmem:[%s3 + $0x3c] sm:$0xf]
          %v874 = vunpack.c.l.b16 %v842
          %v875 = vunpack.c.l.b16 %v843
          %v876 = vunpack.c.l.b16 %v844
          %v877 = vunpack.c.l.b16 %v845
          %v878 = vunpack.c.l.b16 %v846
          %v879 = vunpack.c.l.b16 %v847
          %v880 = vunpack.c.l.b16 %v848
          %v881 = vunpack.c.l.b16 %v849
          %v882 = vunpack.c.l.b16 %v850
          %v883 = vunpack.c.l.b16 %v851
          %v884 = vunpack.c.l.b16 %v852
          %v885 = vunpack.c.l.b16 %v853
          %v886 = vunpack.c.l.b16 %v854
          %v887 = vunpack.c.l.b16 %v855
          %v888 = vunpack.c.l.b16 %v856
          %v889 = vunpack.c.l.b16 %v857
          %v890 = vpack.c.b16 %v875, %v874
          %v891 = vpack.c.b16 %v877, %v876
          %v892 = vpack.c.b16 %v879, %v878
          %v893 = vpack.c.b16 %v881, %v880
          %v894 = vpack.c.b16 %v883, %v882
          %v895 = vpack.c.b16 %v885, %v884
          %v896 = vpack.c.b16 %v887, %v886
          %v897 = vpack.c.b16 %v889, %v888
          %906 = vmatprep.subr.bf16.mxu0 0
          %907 = vmatpush1.bf16.msra.mxu0 %v841
          %908 = vmatprep.subr.bf16.mxu0 0
          %909 = vmatpush1.bf16.msra.mxu0 %v840
          %910 = vmatprep.subr.bf16.mxu0 0
          %911 = vmatpush1.bf16.msra.mxu0 %v839
          %912 = vmatprep.subr.bf16.mxu0 0
          %913 = vmatpush1.bf16.msra.mxu0 %v838
          %914 = vmatprep.subr.bf16.mxu0 0
          %915 = vmatpush1.bf16.msra.mxu0 %v837
          %916 = vmatprep.subr.bf16.mxu0 0
          %917 = vmatpush1.bf16.msra.mxu0 %v836
          %918 = vmatprep.subr.bf16.mxu0 0
          %919 = vmatpush1.bf16.msra.mxu0 %v835
          %920 = vmatprep.subr.bf16.mxu0 0
          %921 = vmatpush1.bf16.msra.mxu0 %v834
          %922 = vmatprep.subr.bf16.mxu0 0
          %923 = vmatpush2.bf16.msra.mxu0 0
          %924 = vmatprep.subr.bf16.mxu0 0
          %925 = vmatpush2.bf16.msra.mxu0 0
          %926 = vmatprep.subr.bf16.mxu0 0
          %927 = vmatpush2.bf16.msra.mxu0 0
          %928 = vmatprep.subr.bf16.mxu0 0
          %929 = vmatpush2.bf16.msra.mxu0 0
          %930 = vmatprep.subr.bf16.mxu0 0
          %931 = vmatpush2.bf16.msra.mxu0 0
          %932 = vmatprep.subr.bf16.mxu0 0
          %933 = vmatpush2.bf16.msra.mxu0 0
          %934 = vmatprep.subr.bf16.mxu0 0
          %935 = vmatpush2.bf16.msra.mxu0 0
          %936 = vmatprep.subr.bf16.mxu0 0
          %937 = vmatpush2.bf16.msra.mxu0 0
          %938 = vmatprep.mubr.bf16.mxu0 0
          %939 = vmatmul.mubr.bf16.gmra.mxu0 %v890
          %v940 = vpop.f32.mrf.mxu0
          %v941 = vadd.f32 0.0, %v940
          %v942 = vpop.f32.mrf.mxu0
          %v943 = vpop.f32.mrf.mxu0
          %v944 = vadd.f32 0.0, %v943
          %v945 = vpop.f32.mrf.mxu0
          %946 = vmatprep.mubr.bf16.mxu0 0
          %947 = vmatmul.mubr.bf16.gmra.mxu0 %v891
          %v948 = vpop.f32.mrf.mxu0
          %v949 = vadd.f32 0.0, %v948
          %v950 = vpop.f32.mrf.mxu0
          %v951 = vpop.f32.mrf.mxu0
          %v952 = vadd.f32 0.0, %v951
          %v953 = vpop.f32.mrf.mxu0
          %954 = vmatprep.mubr.bf16.mxu0 0
          %955 = vmatmul.mubr.bf16.gmra.mxu0 %v892
          %v956 = vpop.f32.mrf.mxu0
          %v957 = vadd.f32 0.0, %v956
          %v958 = vpop.f32.mrf.mxu0
          %v959 = vpop.f32.mrf.mxu0
          %v960 = vadd.f32 0.0, %v959
          %v961 = vpop.f32.mrf.mxu0
          %962 = vmatprep.mubr.bf16.mxu0 0
          %963 = vmatmul.mubr.bf16.gmra.mxu0 %v893
          %v964 = vpop.f32.mrf.mxu0
          %v965 = vadd.f32 0.0, %v964
          %v966 = vpop.f32.mrf.mxu0
          %v967 = vpop.f32.mrf.mxu0
          %v968 = vadd.f32 0.0, %v967
          %v969 = vpop.f32.mrf.mxu0
          %970 = vmatprep.mubr.bf16.mxu0 0
          %971 = vmatmul.mubr.bf16.gmra.mxu0 %v894
          %v972 = vpop.f32.mrf.mxu0
          %v973 = vadd.f32 0.0, %v972
          %v974 = vpop.f32.mrf.mxu0
          %v975 = vpop.f32.mrf.mxu0
          %v976 = vadd.f32 0.0, %v975
          %v977 = vpop.f32.mrf.mxu0
          %978 = vmatprep.mubr.bf16.mxu0 0
          %979 = vmatmul.mubr.bf16.gmra.mxu0 %v895
          %v980 = vpop.f32.mrf.mxu0
          %v981 = vadd.f32 0.0, %v980
          %v982 = vpop.f32.mrf.mxu0
          %v983 = vpop.f32.mrf.mxu0
          %v984 = vadd.f32 0.0, %v983
          %v985 = vpop.f32.mrf.mxu0
          %986 = vmatprep.mubr.bf16.mxu0 0
          %987 = vmatmul.mubr.bf16.gmra.mxu0 %v896
          %v988 = vpop.f32.mrf.mxu0
          %v989 = vadd.f32 0.0, %v988
          %v990 = vpop.f32.mrf.mxu0
          %v991 = vpop.f32.mrf.mxu0
          %v992 = vadd.f32 0.0, %v991
          %v993 = vpop.f32.mrf.mxu0
          %994 = vmatprep.mubr.bf16.mxu0 0
          %995 = vmatmul.mubr.bf16.gmra.mxu0 %v897
          %v996 = vpop.f32.mrf.mxu0
          %v997 = vadd.f32 0.0, %v996
          %v998 = vpop.f32.mrf.mxu0
          %v999 = vpop.f32.mrf.mxu0
          %v1000 = vadd.f32 0.0, %v999
          %v1001 = vpop.f32.mrf.mxu0
          %1002 = vdwg.mxu0
          %v1003 = vpack.c.bf16 %v944, %v941
          %v1004 = vpack.c.bf16 %v952, %v949
          %v1005 = vpack.c.bf16 %v960, %v957
          %v1006 = vpack.c.bf16 %v968, %v965
          %v1007 = vpack.c.bf16 %v976, %v973
          %v1008 = vpack.c.bf16 %v984, %v981
          %v1009 = vpack.c.bf16 %v992, %v989
          %v1010 = vpack.c.bf16 %v1000, %v997
          %v1011 = vld [vmem:[%s9] sm:$0xf]
          %v1012 = vld [vmem:[%s9 + $0x4] sm:$0xf]
          %v1013 = vld [vmem:[%s9 + $0x8] sm:$0xf]
          %v1014 = vld [vmem:[%s9 + $0xc] sm:$0xf]
          %v1015 = vld [vmem:[%s9 + $0x10] sm:$0xf]
          %v1016 = vld [vmem:[%s9 + $0x14] sm:$0xf]
          %v1017 = vld [vmem:[%s9 + $0x18] sm:$0xf]
          %v1018 = vld [vmem:[%s9 + $0x1c] sm:$0xf]
          %v1019 = vld [vmem:[%s9 + $0x20] sm:$0xf]
          %v1020 = vld [vmem:[%s9 + $0x24] sm:$0xf]
          %v1021 = vld [vmem:[%s9 + $0x28] sm:$0xf]
          %v1022 = vld [vmem:[%s9 + $0x2c] sm:$0xf]
          %v1023 = vld [vmem:[%s9 + $0x30] sm:$0xf]
          %v1024 = vld [vmem:[%s9 + $0x34] sm:$0xf]
          %v1025 = vld [vmem:[%s9 + $0x38] sm:$0xf]
          %v1026 = vld [vmem:[%s9 + $0x3c] sm:$0xf]
          %v1027 = vld [vmem:[%s9 + $0x40] sm:$0xf]
          %v1028 = vld [vmem:[%s9 + $0x44] sm:$0xf]
          %v1029 = vld [vmem:[%s9 + $0x48] sm:$0xf]
          %v1030 = vld [vmem:[%s9 + $0x4c] sm:$0xf]
          %v1031 = vld [vmem:[%s9 + $0x50] sm:$0xf]
          %v1032 = vld [vmem:[%s9 + $0x54] sm:$0xf]
          %v1033 = vld [vmem:[%s9 + $0x58] sm:$0xf]
          %v1034 = vld [vmem:[%s9 + $0x5c] sm:$0xf]
          %v1035 = vld [vmem:[%s9 + $0x60] sm:$0xf]
          %v1036 = vld [vmem:[%s9 + $0x64] sm:$0xf]
          %v1037 = vld [vmem:[%s9 + $0x68] sm:$0xf]
          %v1038 = vld [vmem:[%s9 + $0x6c] sm:$0xf]
          %v1039 = vld [vmem:[%s9 + $0x70] sm:$0xf]
          %v1040 = vld [vmem:[%s9 + $0x74] sm:$0xf]
          %v1041 = vld [vmem:[%s9 + $0x78] sm:$0xf]
          %v1042 = vld [vmem:[%s9 + $0x7c] sm:$0xf]
          %v1075 = vunpack.c.l.b16 %v1011
          %v1076 = vunpack.c.l.b16 %v1012
          %v1077 = vunpack.c.l.b16 %v1013
          %v1078 = vunpack.c.l.b16 %v1014
          %v1079 = vunpack.c.l.b16 %v1015
          %v1080 = vunpack.c.l.b16 %v1016
          %v1081 = vunpack.c.l.b16 %v1017
          %v1082 = vunpack.c.l.b16 %v1018
          %v1083 = vunpack.c.l.b16 %v1019
          %v1084 = vunpack.c.l.b16 %v1020
          %v1085 = vunpack.c.l.b16 %v1021
          %v1086 = vunpack.c.l.b16 %v1022
          %v1087 = vunpack.c.l.b16 %v1023
          %v1088 = vunpack.c.l.b16 %v1024
          %v1089 = vunpack.c.l.b16 %v1025
          %v1090 = vunpack.c.l.b16 %v1026
          %v1091 = vunpack.c.l.b16 %v1027
          %v1092 = vunpack.c.l.b16 %v1028
          %v1093 = vunpack.c.l.b16 %v1029
          %v1094 = vunpack.c.l.b16 %v1030
          %v1095 = vunpack.c.l.b16 %v1031
          %v1096 = vunpack.c.l.b16 %v1032
          %v1097 = vunpack.c.l.b16 %v1033
          %v1098 = vunpack.c.l.b16 %v1034
          %v1099 = vunpack.c.l.b16 %v1035
          %v1100 = vunpack.c.l.b16 %v1036
          %v1101 = vunpack.c.l.b16 %v1037
          %v1102 = vunpack.c.l.b16 %v1038
          %v1103 = vunpack.c.l.b16 %v1039
          %v1104 = vunpack.c.l.b16 %v1040
          %v1105 = vunpack.c.l.b16 %v1041
          %v1106 = vunpack.c.l.b16 %v1042
          %v1107 = vpack.c.b16 %v1076, %v1075
          %v1108 = vpack.c.b16 %v1078, %v1077
          %v1109 = vpack.c.b16 %v1080, %v1079
          %v1110 = vpack.c.b16 %v1082, %v1081
          %v1111 = vpack.c.b16 %v1084, %v1083
          %v1112 = vpack.c.b16 %v1086, %v1085
          %v1113 = vpack.c.b16 %v1088, %v1087
          %v1114 = vpack.c.b16 %v1090, %v1089
          %v1115 = vpack.c.b16 %v1092, %v1091
          %v1116 = vpack.c.b16 %v1094, %v1093
          %v1117 = vpack.c.b16 %v1096, %v1095
          %v1118 = vpack.c.b16 %v1098, %v1097
          %v1119 = vpack.c.b16 %v1100, %v1099
          %v1120 = vpack.c.b16 %v1102, %v1101
          %v1121 = vpack.c.b16 %v1104, %v1103
          %v1122 = vpack.c.b16 %v1106, %v1105
          %1139 = vmatprep.subr.bf16.mxu0 0
          %1140 = vmatpush1.bf16.msra.mxu0 %v1114
          %1141 = vmatprep.subr.bf16.mxu0 0
          %1142 = vmatpush1.bf16.msra.mxu0 %v1113
          %1143 = vmatprep.subr.bf16.mxu0 0
          %1144 = vmatpush1.bf16.msra.mxu0 %v1112
          %1145 = vmatprep.subr.bf16.mxu0 0
          %1146 = vmatpush1.bf16.msra.mxu0 %v1111
          %1147 = vmatprep.subr.bf16.mxu0 0
          %1148 = vmatpush1.bf16.msra.mxu0 %v1110
          %1149 = vmatprep.subr.bf16.mxu0 0
          %1150 = vmatpush1.bf16.msra.mxu0 %v1109
          %1151 = vmatprep.subr.bf16.mxu0 0
          %1152 = vmatpush1.bf16.msra.mxu0 %v1108
          %1153 = vmatprep.subr.bf16.mxu0 0
          %1154 = vmatpush1.bf16.msra.mxu0 %v1107
          %1155 = vmatprep.subr.bf16.mxu0 0
          %1156 = vmatpush2.bf16.msra.mxu0 %v1122
          %1157 = vmatprep.subr.bf16.mxu0 0
          %1158 = vmatpush2.bf16.msra.mxu0 %v1121
          %1159 = vmatprep.subr.bf16.mxu0 0
          %1160 = vmatpush2.bf16.msra.mxu0 %v1120
          %1161 = vmatprep.subr.bf16.mxu0 0
          %1162 = vmatpush2.bf16.msra.mxu0 %v1119
          %1163 = vmatprep.subr.bf16.mxu0 0
          %1164 = vmatpush2.bf16.msra.mxu0 %v1118
          %1165 = vmatprep.subr.bf16.mxu0 0
          %1166 = vmatpush2.bf16.msra.mxu0 %v1117
          %1167 = vmatprep.subr.bf16.mxu0 0
          %1168 = vmatpush2.bf16.msra.mxu0 %v1116
          %1169 = vmatprep.subr.bf16.mxu0 0
          %1170 = vmatpush2.bf16.msra.mxu0 %v1115
          %1171 = vmatprep.mubr.bf16.mxu0 %v834
          %1172 = vmatmul.mubr.bf16.gmra.mxu0 %v1003
          %v1173 = vpop.f32.mrf.mxu0
          %v1174 = vadd.f32 0.0, %v1173
          %v1175 = vpop.f32.mrf.mxu0
          %v1176 = vpop.f32.mrf.mxu0
          %v1177 = vadd.f32 0.0, %v1176
          %v1178 = vpop.f32.mrf.mxu0
          %1179 = vmatprep.mubr.bf16.mxu0 %v835
          %1180 = vmatmul.mubr.bf16.gmra.mxu0 %v1004
          %v1181 = vpop.f32.mrf.mxu0
          %v1182 = vadd.f32 0.0, %v1181
          %v1183 = vpop.f32.mrf.mxu0
          %v1184 = vpop.f32.mrf.mxu0
          %v1185 = vadd.f32 0.0, %v1184
          %v1186 = vpop.f32.mrf.mxu0
          %1187 = vmatprep.mubr.bf16.mxu0 %v836
          %1188 = vmatmul.mubr.bf16.gmra.mxu0 %v1005
          %v1189 = vpop.f32.mrf.mxu0
          %v1190 = vadd.f32 0.0, %v1189
          %v1191 = vpop.f32.mrf.mxu0
          %v1192 = vpop.f32.mrf.mxu0
          %v1193 = vadd.f32 0.0, %v1192
          %v1194 = vpop.f32.mrf.mxu0
          %1195 = vmatprep.mubr.bf16.mxu0 %v837
          %1196 = vmatmul.mubr.bf16.gmra.mxu0 %v1006
          %v1197 = vpop.f32.mrf.mxu0
          %v1198 = vadd.f32 0.0, %v1197
          %v1199 = vpop.f32.mrf.mxu0
          %v1200 = vpop.f32.mrf.mxu0
          %v1201 = vadd.f32 0.0, %v1200
          %v1202 = vpop.f32.mrf.mxu0
          %1203 = vmatprep.mubr.bf16.mxu0 %v838
          %1204 = vmatmul.mubr.bf16.gmra.mxu0 %v1007
          %v1205 = vpop.f32.mrf.mxu0
          %v1206 = vadd.f32 0.0, %v1205
          %v1207 = vpop.f32.mrf.mxu0
          %v1208 = vpop.f32.mrf.mxu0
          %v1209 = vadd.f32 0.0, %v1208
          %v1210 = vpop.f32.mrf.mxu0
          %1211 = vmatprep.mubr.bf16.mxu0 %v839
          %1212 = vmatmul.mubr.bf16.gmra.mxu0 %v1008
          %v1213 = vpop.f32.mrf.mxu0
          %v1214 = vadd.f32 0.0, %v1213
          %v1215 = vpop.f32.mrf.mxu0
          %v1216 = vpop.f32.mrf.mxu0
          %v1217 = vadd.f32 0.0, %v1216
          %v1218 = vpop.f32.mrf.mxu0
          %1219 = vmatprep.mubr.bf16.mxu0 %v840
          %1220 = vmatmul.mubr.bf16.gmra.mxu0 %v1009
          %v1221 = vpop.f32.mrf.mxu0
          %v1222 = vadd.f32 0.0, %v1221
          %v1223 = vpop.f32.mrf.mxu0
          %v1224 = vpop.f32.mrf.mxu0
          %v1225 = vadd.f32 0.0, %v1224
          %v1226 = vpop.f32.mrf.mxu0
          %1227 = vmatprep.mubr.bf16.mxu0 %v841
          %1228 = vmatmul.mubr.bf16.gmra.mxu0 %v1010
          %v1229 = vpop.f32.mrf.mxu0
          %v1230 = vadd.f32 0.0, %v1229
          %v1231 = vpop.f32.mrf.mxu0
          %v1232 = vpop.f32.mrf.mxu0
          %v1233 = vadd.f32 0.0, %v1232
          %v1234 = vpop.f32.mrf.mxu0
          %1235 = vdwg.mxu0
          %vm1236 = vcmp.ge.f32.partialorder %v1174, 0.0
          %vm1237 = vcmp.ge.f32.partialorder %v1177, 0.0
          %vm1238 = vcmp.ge.f32.partialorder %v1182, 0.0
          %vm1239 = vcmp.ge.f32.partialorder %v1185, 0.0
          %vm1240 = vcmp.ge.f32.partialorder %v1190, 0.0
          %vm1241 = vcmp.ge.f32.partialorder %v1193, 0.0
          %vm1242 = vcmp.ge.f32.partialorder %v1198, 0.0
          %vm1243 = vcmp.ge.f32.partialorder %v1201, 0.0
          %vm1244 = vcmp.ge.f32.partialorder %v1206, 0.0
          %vm1245 = vcmp.ge.f32.partialorder %v1209, 0.0
          %vm1246 = vcmp.ge.f32.partialorder %v1214, 0.0
          %vm1247 = vcmp.ge.f32.partialorder %v1217, 0.0
          %vm1248 = vcmp.ge.f32.partialorder %v1222, 0.0
          %vm1249 = vcmp.ge.f32.partialorder %v1225, 0.0
          %vm1250 = vcmp.ge.f32.partialorder %v1230, 0.0
          %vm1251 = vcmp.ge.f32.partialorder %v1233, 0.0
          %v1252 = vmul.f32 %v1174, 0.22916667
          %v1253 = vmul.f32 %v1177, 0.22916667
          %v1254 = vmul.f32 %v1182, 0.22916667
          %v1255 = vmul.f32 %v1185, 0.22916667
          %v1256 = vmul.f32 %v1190, 0.22916667
          %v1257 = vmul.f32 %v1193, 0.22916667
          %v1258 = vmul.f32 %v1198, 0.22916667
          %v1259 = vmul.f32 %v1201, 0.22916667
          %v1260 = vmul.f32 %v1206, 0.22916667
          %v1261 = vmul.f32 %v1209, 0.22916667
          %v1262 = vmul.f32 %v1214, 0.22916667
          %v1263 = vmul.f32 %v1217, 0.22916667
          %v1264 = vmul.f32 %v1222, 0.22916667
          %v1265 = vmul.f32 %v1225, 0.22916667
          %v1266 = vmul.f32 %v1230, 0.22916667
          %v1267 = vmul.f32 %v1233, 0.22916667
          %v1268 = vsel %vm1236, %v1174, %v1252
          %v1269 = vsel %vm1237, %v1177, %v1253
          %v1270 = vsel %vm1238, %v1182, %v1254
          %v1271 = vsel %vm1239, %v1185, %v1255
          %v1272 = vsel %vm1240, %v1190, %v1256
          %v1273 = vsel %vm1241, %v1193, %v1257
          %v1274 = vsel %vm1242, %v1198, %v1258
          %v1275 = vsel %vm1243, %v1201, %v1259
          %v1276 = vsel %vm1244, %v1206, %v1260
          %v1277 = vsel %vm1245, %v1209, %v1261
          %v1278 = vsel %vm1246, %v1214, %v1262
          %v1279 = vsel %vm1247, %v1217, %v1263
          %v1280 = vsel %vm1248, %v1222, %v1264
          %v1281 = vsel %vm1249, %v1225, %v1265
          %v1282 = vsel %vm1250, %v1230, %v1266
          %v1283 = vsel %vm1251, %v1233, %v1267
          %v1284 = vmul.f32 %v1268, %v1268
          %v1285 = vmul.f32 %v1269, %v1269
          %v1286 = vmul.f32 %v1270, %v1270
          %v1287 = vmul.f32 %v1271, %v1271
          %v1288 = vmul.f32 %v1272, %v1272
          %v1289 = vmul.f32 %v1273, %v1273
          %v1290 = vmul.f32 %v1274, %v1274
          %v1291 = vmul.f32 %v1275, %v1275
          %v1292 = vmul.f32 %v1276, %v1276
          %v1293 = vmul.f32 %v1277, %v1277
          %v1294 = vmul.f32 %v1278, %v1278
          %v1295 = vmul.f32 %v1279, %v1279
          %v1296 = vmul.f32 %v1280, %v1280
          %v1297 = vmul.f32 %v1281, %v1281
          %v1298 = vmul.f32 %v1282, %v1282
          %v1299 = vmul.f32 %v1283, %v1283
          %1300 = vadd.xlane.f32.xlu0 %v1284
          %v1301 = vpop.xlane.xlu0 %1300
          %1302 = vadd.xlane.f32.xlu0 %v1285
          %v1303 = vpop.xlane.xlu0 %1302
          %1304 = vadd.xlane.f32.xlu0 %v1286
          %v1305 = vpop.xlane.xlu0 %1304
          %1306 = vadd.xlane.f32.xlu0 %v1287
          %v1307 = vpop.xlane.xlu0 %1306
          %1308 = vadd.xlane.f32.xlu0 %v1288
          %v1309 = vpop.xlane.xlu0 %1308
          %1310 = vadd.xlane.f32.xlu0 %v1289
          %v1311 = vpop.xlane.xlu0 %1310
          %1312 = vadd.xlane.f32.xlu0 %v1290
          %v1313 = vpop.xlane.xlu0 %1312
          %1314 = vadd.xlane.f32.xlu0 %v1291
          %v1315 = vpop.xlane.xlu0 %1314
          %1316 = vadd.xlane.f32.xlu0 %v1292
          %v1317 = vpop.xlane.xlu0 %1316
          %1318 = vadd.xlane.f32.xlu0 %v1293
          %v1319 = vpop.xlane.xlu0 %1318
          %1320 = vadd.xlane.f32.xlu0 %v1294
          %v1321 = vpop.xlane.xlu0 %1320
          %1322 = vadd.xlane.f32.xlu0 %v1295
          %v1323 = vpop.xlane.xlu0 %1322
          %1324 = vadd.xlane.f32.xlu0 %v1296
          %v1325 = vpop.xlane.xlu0 %1324
          %1326 = vadd.xlane.f32.xlu0 %v1297
          %v1327 = vpop.xlane.xlu0 %1326
          %1328 = vadd.xlane.f32.xlu0 %v1298
          %v1329 = vpop.xlane.xlu0 %1328
          %1330 = vadd.xlane.f32.xlu0 %v1299
          %v1331 = vpop.xlane.xlu0 %1330
          %v1332 = vmax.f32 %v1301, 1e-24
          %v1333 = vmax.f32 %v1303, 1e-24
          %v1334 = vmax.f32 %v1305, 1e-24
          %v1335 = vmax.f32 %v1307, 1e-24
          %v1336 = vmax.f32 %v1309, 1e-24
          %v1337 = vmax.f32 %v1311, 1e-24
          %v1338 = vmax.f32 %v1313, 1e-24
          %v1339 = vmax.f32 %v1315, 1e-24
          %v1340 = vmax.f32 %v1317, 1e-24
          %v1341 = vmax.f32 %v1319, 1e-24
          %v1342 = vmax.f32 %v1321, 1e-24
          %v1343 = vmax.f32 %v1323, 1e-24
          %v1344 = vmax.f32 %v1325, 1e-24
          %v1345 = vmax.f32 %v1327, 1e-24
          %v1346 = vmax.f32 %v1329, 1e-24
          %v1347 = vmax.f32 %v1331, 1e-24
          %v1348 = vrsqrt.pop %v1332
          %v1349 = vrsqrt.pop %v1333
          %v1350 = vrsqrt.pop %v1334
          %v1351 = vrsqrt.pop %v1335
          %v1352 = vrsqrt.pop %v1336
          %v1353 = vrsqrt.pop %v1337
          %v1354 = vrsqrt.pop %v1338
          %v1355 = vrsqrt.pop %v1339
          %v1356 = vrsqrt.pop %v1340
          %v1357 = vrsqrt.pop %v1341
          %v1358 = vrsqrt.pop %v1342
          %v1359 = vrsqrt.pop %v1343
          %v1360 = vrsqrt.pop %v1344
          %v1361 = vrsqrt.pop %v1345
          %v1362 = vrsqrt.pop %v1346
          %v1363 = vrsqrt.pop %v1347
          %v1364 = vmul.f32 %v1268, %v1348
          %v1365 = vmul.f32 %v1269, %v1349
          %v1366 = vmul.f32 %v1270, %v1350
          %v1367 = vmul.f32 %v1271, %v1351
          %v1368 = vmul.f32 %v1272, %v1352
          %v1369 = vmul.f32 %v1273, %v1353
          %v1370 = vmul.f32 %v1274, %v1354
          %v1371 = vmul.f32 %v1275, %v1355
          %v1372 = vmul.f32 %v1276, %v1356
          %v1373 = vmul.f32 %v1277, %v1357
          %v1374 = vmul.f32 %v1278, %v1358
          %v1375 = vmul.f32 %v1279, %v1359
          %v1376 = vmul.f32 %v1280, %v1360
          %v1377 = vmul.f32 %v1281, %v1361
          %v1378 = vmul.f32 %v1282, %v1362
          %v1379 = vmul.f32 %v1283, %v1363
          %v1380 = vld [vmem:[%s5] sm:$0xff]
          %v1381 = vld [vmem:[%s5 + $0x8] sm:$0xff]
          %v1382 = vmul.f32 %v1380, %v1380
          %v1383 = vmul.f32 %v1381, %v1381
          %1384 = vadd.xlane.f32.xlu0 %v1382
          %v1385 = vpop.xlane.xlu0 %1384
          %1386 = vadd.xlane.f32.xlu0 %v1383
          %v1387 = vpop.xlane.xlu0 %1386
          %v1388 = vmax.f32 %v1385, 1e-24
          %v1389 = vmax.f32 %v1387, 1e-24
          %v1390 = vrsqrt.pop %v1388
          %v1391 = vrsqrt.pop %v1389
          %v1392 = vmul.f32 %v1380, %v1390
          %v1393 = vmul.f32 %v1381, %v1391
          %1394 = vst [vmem:[#allocation6] sm:$0xff] %v1392
          %1395 = vst [vmem:[#allocation6 + $0x8] sm:$0xff] %v1393
          %v1396 = vld [vmem:[%s6] sm:$0xff]
          %v1397 = vld [vmem:[%s6 + $0x8] sm:$0xff]
          %v1398 = vld [vmem:[%s6 + $0x10] sm:$0xff]
          %v1399 = vld [vmem:[%s6 + $0x18] sm:$0xff]
          %v1400 = vld [vmem:[%s6 + $0x20] sm:$0xff]
          %v1401 = vld [vmem:[%s6 + $0x28] sm:$0xff]
          %v1402 = vld [vmem:[%s6 + $0x30] sm:$0xff]
          %v1403 = vld [vmem:[%s6 + $0x38] sm:$0xff]
          %v1404 = vld [vmem:[%s6 + $0x40] sm:$0xff]
          %v1405 = vld [vmem:[%s6 + $0x48] sm:$0xff]
          %v1406 = vld [vmem:[%s6 + $0x50] sm:$0xff]
          %v1407 = vld [vmem:[%s6 + $0x58] sm:$0xff]
          %v1408 = vld [vmem:[%s6 + $0x60] sm:$0xff]
          %v1409 = vld [vmem:[%s6 + $0x68] sm:$0xff]
          %v1410 = vld [vmem:[%s6 + $0x70] sm:$0xff]
          %v1411 = vld [vmem:[%s6 + $0x78] sm:$0xff]
          %v1412 = vadd.f32 %v1396, %v1364
          %v1413 = vadd.f32 %v1397, %v1365
          %v1414 = vadd.f32 %v1398, %v1366
          %v1415 = vadd.f32 %v1399, %v1367
          %v1416 = vadd.f32 %v1400, %v1368
          %v1417 = vadd.f32 %v1401, %v1369
          %v1418 = vadd.f32 %v1402, %v1370
          %v1419 = vadd.f32 %v1403, %v1371
          %v1420 = vadd.f32 %v1404, %v1372
          %v1421 = vadd.f32 %v1405, %v1373
          %v1422 = vadd.f32 %v1406, %v1374
          %v1423 = vadd.f32 %v1407, %v1375
          %v1424 = vadd.f32 %v1408, %v1376
          %v1425 = vadd.f32 %v1409, %v1377
          %v1426 = vadd.f32 %v1410, %v1378
          %v1427 = vadd.f32 %v1411, %v1379
          %v1428 = vpack.c.bf16 %v1413, %v1412
          %v1429 = vpack.c.bf16 %v1415, %v1414
          %v1430 = vpack.c.bf16 %v1417, %v1416
          %v1431 = vpack.c.bf16 %v1419, %v1418
          %v1432 = vpack.c.bf16 %v1421, %v1420
          %v1433 = vpack.c.bf16 %v1423, %v1422
          %v1434 = vpack.c.bf16 %v1425, %v1424
          %v1435 = vpack.c.bf16 %v1427, %v1426
          %v1436 = vld [vmem:[%s12] sm:$0xf]
          %v1437 = vld [vmem:[%s12 + $0x4] sm:$0xf]
          %v1438 = vld [vmem:[%s12 + $0x8] sm:$0xf]
          %v1439 = vld [vmem:[%s12 + $0xc] sm:$0xf]
          %v1440 = vld [vmem:[%s12 + $0x10] sm:$0xf]
          %v1441 = vld [vmem:[%s12 + $0x14] sm:$0xf]
          %v1442 = vld [vmem:[%s12 + $0x18] sm:$0xf]
          %v1443 = vld [vmem:[%s12 + $0x1c] sm:$0xf]
          %v1444 = vld [vmem:[%s12 + $0x20] sm:$0xf]
          %v1445 = vld [vmem:[%s12 + $0x24] sm:$0xf]
          %v1446 = vld [vmem:[%s12 + $0x28] sm:$0xf]
          %v1447 = vld [vmem:[%s12 + $0x2c] sm:$0xf]
          %v1448 = vld [vmem:[%s12 + $0x30] sm:$0xf]
          %v1449 = vld [vmem:[%s12 + $0x34] sm:$0xf]
          %v1450 = vld [vmem:[%s12 + $0x38] sm:$0xf]
          %v1451 = vld [vmem:[%s12 + $0x3c] sm:$0xf]
          %v1452 = vld [vmem:[%s13] sm:$0x1]
          %v1454 = vlaneseq
          %v1455 = vshrl.u32 %v1454, 7
          %v1456 = vsub.s32 0, %v1455
          %v1457 = vrot.slane %v1452, %v1456
          %v1475 = vunpack.c.l.b16 %v1436
          %v1476 = vunpack.c.l.b16 %v1437
          %v1477 = vunpack.c.l.b16 %v1438
          %v1478 = vunpack.c.l.b16 %v1439
          %v1479 = vunpack.c.l.b16 %v1440
          %v1480 = vunpack.c.l.b16 %v1441
          %v1481 = vunpack.c.l.b16 %v1442
          %v1482 = vunpack.c.l.b16 %v1443
          %v1483 = vunpack.c.l.b16 %v1444
          %v1484 = vunpack.c.l.b16 %v1445
          %v1485 = vunpack.c.l.b16 %v1446
          %v1486 = vunpack.c.l.b16 %v1447
          %v1487 = vunpack.c.l.b16 %v1448
          %v1488 = vunpack.c.l.b16 %v1449
          %v1489 = vunpack.c.l.b16 %v1450
          %v1490 = vunpack.c.l.b16 %v1451
          %v1491 = vpack.c.b16 %v1476, %v1475
          %v1492 = vpack.c.b16 %v1478, %v1477
          %v1493 = vpack.c.b16 %v1480, %v1479
          %v1494 = vpack.c.b16 %v1482, %v1481
          %v1495 = vpack.c.b16 %v1484, %v1483
          %v1496 = vpack.c.b16 %v1486, %v1485
          %v1497 = vpack.c.b16 %v1488, %v1487
          %v1498 = vpack.c.b16 %v1490, %v1489
          %1507 = vmatprep.subr.bf16.mxu0 0
          %1508 = vmatpush1.bf16.msra.mxu0 %v1498
          %1509 = vmatprep.subr.bf16.mxu0 0
          %1510 = vmatpush1.bf16.msra.mxu0 %v1497
          %1511 = vmatprep.subr.bf16.mxu0 0
          %1512 = vmatpush1.bf16.msra.mxu0 %v1496
          %1513 = vmatprep.subr.bf16.mxu0 0
          %1514 = vmatpush1.bf16.msra.mxu0 %v1495
          %1515 = vmatprep.subr.bf16.mxu0 0
          %1516 = vmatpush1.bf16.msra.mxu0 %v1494
          %1517 = vmatprep.subr.bf16.mxu0 0
          %1518 = vmatpush1.bf16.msra.mxu0 %v1493
          %1519 = vmatprep.subr.bf16.mxu0 0
          %1520 = vmatpush1.bf16.msra.mxu0 %v1492
          %1521 = vmatprep.subr.bf16.mxu0 0
          %1522 = vmatpush1.bf16.msra.mxu0 %v1491
          %1523 = vmatprep.subr.bf16.mxu0 0
          %1524 = vmatpush2.bf16.msra.mxu0 0
          %1525 = vmatprep.subr.bf16.mxu0 0
          %1526 = vmatpush2.bf16.msra.mxu0 0
          %1527 = vmatprep.subr.bf16.mxu0 0
          %1528 = vmatpush2.bf16.msra.mxu0 0
          %1529 = vmatprep.subr.bf16.mxu0 0
          %1530 = vmatpush2.bf16.msra.mxu0 0
          %1531 = vmatprep.subr.bf16.mxu0 0
          %1532 = vmatpush2.bf16.msra.mxu0 0
          %1533 = vmatprep.subr.bf16.mxu0 0
          %1534 = vmatpush2.bf16.msra.mxu0 0
          %1535 = vmatprep.subr.bf16.mxu0 0
          %1536 = vmatpush2.bf16.msra.mxu0 0
          %1537 = vmatprep.subr.bf16.mxu0 0
          %1538 = vmatpush2.bf16.msra.mxu0 0
          %1539 = vmatprep.mubr.bf16.mxu0 0
          %1540 = vmatmul.mubr.bf16.gmra.mxu0 %v1428
          %v1541 = vpop.f32.mrf.mxu0
          %v1542 = vadd.f32 %v1457, %v1541
          %v1543 = vpop.f32.mrf.mxu0
          %v1544 = vpop.f32.mrf.mxu0
          %v1545 = vadd.f32 %v1457, %v1544
          %v1546 = vpop.f32.mrf.mxu0
          %1547 = vmatprep.mubr.bf16.mxu0 0
          %1548 = vmatmul.mubr.bf16.gmra.mxu0 %v1429
          %v1549 = vpop.f32.mrf.mxu0
          %v1550 = vadd.f32 %v1457, %v1549
          %v1551 = vpop.f32.mrf.mxu0
          %v1552 = vpop.f32.mrf.mxu0
          %v1553 = vadd.f32 %v1457, %v1552
          %v1554 = vpop.f32.mrf.mxu0
          %1555 = vmatprep.mubr.bf16.mxu0 0
          %1556 = vmatmul.mubr.bf16.gmra.mxu0 %v1430
          %v1557 = vpop.f32.mrf.mxu0
          %v1558 = vadd.f32 %v1457, %v1557
          %v1559 = vpop.f32.mrf.mxu0
          %v1560 = vpop.f32.mrf.mxu0
          %v1561 = vadd.f32 %v1457, %v1560
          %v1562 = vpop.f32.mrf.mxu0
          %1563 = vmatprep.mubr.bf16.mxu0 0
          %1564 = vmatmul.mubr.bf16.gmra.mxu0 %v1431
          %v1565 = vpop.f32.mrf.mxu0
          %v1566 = vadd.f32 %v1457, %v1565
          %v1567 = vpop.f32.mrf.mxu0
          %v1568 = vpop.f32.mrf.mxu0
          %v1569 = vadd.f32 %v1457, %v1568
          %v1570 = vpop.f32.mrf.mxu0
          %1571 = vmatprep.mubr.bf16.mxu0 0
          %1572 = vmatmul.mubr.bf16.gmra.mxu0 %v1432
          %v1573 = vpop.f32.mrf.mxu0
          %v1574 = vadd.f32 %v1457, %v1573
          %v1575 = vpop.f32.mrf.mxu0
          %v1576 = vpop.f32.mrf.mxu0
          %v1577 = vadd.f32 %v1457, %v1576
          %v1578 = vpop.f32.mrf.mxu0
          %1579 = vmatprep.mubr.bf16.mxu0 0
          %1580 = vmatmul.mubr.bf16.gmra.mxu0 %v1433
          %v1581 = vpop.f32.mrf.mxu0
          %v1582 = vadd.f32 %v1457, %v1581
          %v1583 = vpop.f32.mrf.mxu0
          %v1584 = vpop.f32.mrf.mxu0
          %v1585 = vadd.f32 %v1457, %v1584
          %v1586 = vpop.f32.mrf.mxu0
          %1587 = vmatprep.mubr.bf16.mxu0 0
          %1588 = vmatmul.mubr.bf16.gmra.mxu0 %v1434
          %v1589 = vpop.f32.mrf.mxu0
          %v1590 = vadd.f32 %v1457, %v1589
          %v1591 = vpop.f32.mrf.mxu0
          %v1592 = vpop.f32.mrf.mxu0
          %v1593 = vadd.f32 %v1457, %v1592
          %v1594 = vpop.f32.mrf.mxu0
          %1595 = vmatprep.mubr.bf16.mxu0 0
          %1596 = vmatmul.mubr.bf16.gmra.mxu0 %v1435
          %v1597 = vpop.f32.mrf.mxu0
          %v1598 = vadd.f32 %v1457, %v1597
          %v1599 = vpop.f32.mrf.mxu0
          %v1600 = vpop.f32.mrf.mxu0
          %v1601 = vadd.f32 %v1457, %v1600
          %v1602 = vpop.f32.mrf.mxu0
          %1603 = vdwg.mxu0
          %1604 = vmax.xlane.f32.xlu0 %v1542
          %v1605 = vpop.xlane.xlu0 %1604
          %1606 = vmax.xlane.f32.xlu0 %v1545
          %v1607 = vpop.xlane.xlu0 %1606
          %1608 = vmax.xlane.f32.xlu0 %v1550
          %v1609 = vpop.xlane.xlu0 %1608
          %1610 = vmax.xlane.f32.xlu0 %v1553
          %v1611 = vpop.xlane.xlu0 %1610
          %1612 = vmax.xlane.f32.xlu0 %v1558
          %v1613 = vpop.xlane.xlu0 %1612
          %1614 = vmax.xlane.f32.xlu0 %v1561
          %v1615 = vpop.xlane.xlu0 %1614
          %1616 = vmax.xlane.f32.xlu0 %v1566
          %v1617 = vpop.xlane.xlu0 %1616
          %1618 = vmax.xlane.f32.xlu0 %v1569
          %v1619 = vpop.xlane.xlu0 %1618
          %1620 = vmax.xlane.f32.xlu0 %v1574
          %v1621 = vpop.xlane.xlu0 %1620
          %1622 = vmax.xlane.f32.xlu0 %v1577
          %v1623 = vpop.xlane.xlu0 %1622
          %1624 = vmax.xlane.f32.xlu0 %v1582
          %v1625 = vpop.xlane.xlu0 %1624
          %1626 = vmax.xlane.f32.xlu0 %v1585
          %v1627 = vpop.xlane.xlu0 %1626
          %1628 = vmax.xlane.f32.xlu0 %v1590
          %v1629 = vpop.xlane.xlu0 %1628
          %1630 = vmax.xlane.f32.xlu0 %v1593
          %v1631 = vpop.xlane.xlu0 %1630
          %1632 = vmax.xlane.f32.xlu0 %v1598
          %v1633 = vpop.xlane.xlu0 %1632
          %1634 = vmax.xlane.f32.xlu0 %v1601
          %v1635 = vpop.xlane.xlu0 %1634
          %v1636 = vsub.f32 %v1542, %v1605
          %v1637 = vsub.f32 %v1545, %v1607
          %v1638 = vsub.f32 %v1550, %v1609
          %v1639 = vsub.f32 %v1553, %v1611
          %v1640 = vsub.f32 %v1558, %v1613
          %v1641 = vsub.f32 %v1561, %v1615
          %v1642 = vsub.f32 %v1566, %v1617
          %v1643 = vsub.f32 %v1569, %v1619
          %v1644 = vsub.f32 %v1574, %v1621
          %v1645 = vsub.f32 %v1577, %v1623
          %v1646 = vsub.f32 %v1582, %v1625
          %v1647 = vsub.f32 %v1585, %v1627
          %v1648 = vsub.f32 %v1590, %v1629
          %v1649 = vsub.f32 %v1593, %v1631
          %v1650 = vsub.f32 %v1598, %v1633
          %v1651 = vsub.f32 %v1601, %v1635
          %v1652 = vmul.f32 %v1636, 1.442695
          %v1653 = vpow.pop %v1652
          %v1654 = vmul.f32 %v1637, 1.442695
          %v1655 = vpow.pop %v1654
          %v1656 = vmul.f32 %v1638, 1.442695
          %v1657 = vpow.pop %v1656
          %v1658 = vmul.f32 %v1639, 1.442695
          %v1659 = vpow.pop %v1658
          %v1660 = vmul.f32 %v1640, 1.442695
          %v1661 = vpow.pop %v1660
          %v1662 = vmul.f32 %v1641, 1.442695
          %v1663 = vpow.pop %v1662
          %v1664 = vmul.f32 %v1642, 1.442695
          %v1665 = vpow.pop %v1664
          %v1666 = vmul.f32 %v1643, 1.442695
          %v1667 = vpow.pop %v1666
          %v1668 = vmul.f32 %v1644, 1.442695
          %v1669 = vpow.pop %v1668
          %v1670 = vmul.f32 %v1645, 1.442695
          %v1671 = vpow.pop %v1670
          %v1672 = vmul.f32 %v1646, 1.442695
          %v1673 = vpow.pop %v1672
          %v1674 = vmul.f32 %v1647, 1.442695
          %v1675 = vpow.pop %v1674
          %v1676 = vmul.f32 %v1648, 1.442695
          %v1677 = vpow.pop %v1676
          %v1678 = vmul.f32 %v1649, 1.442695
          %v1679 = vpow.pop %v1678
          %v1680 = vmul.f32 %v1650, 1.442695
          %v1681 = vpow.pop %v1680
          %v1682 = vmul.f32 %v1651, 1.442695
          %v1683 = vpow.pop %v1682
          %1684 = vadd.xlane.f32.xlu0 %v1653
          %v1685 = vpop.xlane.xlu0 %1684
          %1686 = vadd.xlane.f32.xlu0 %v1655
          %v1687 = vpop.xlane.xlu0 %1686
          %1688 = vadd.xlane.f32.xlu0 %v1657
          %v1689 = vpop.xlane.xlu0 %1688
          %1690 = vadd.xlane.f32.xlu0 %v1659
          %v1691 = vpop.xlane.xlu0 %1690
          %1692 = vadd.xlane.f32.xlu0 %v1661
          %v1693 = vpop.xlane.xlu0 %1692
          %1694 = vadd.xlane.f32.xlu0 %v1663
          %v1695 = vpop.xlane.xlu0 %1694
          %1696 = vadd.xlane.f32.xlu0 %v1665
          %v1697 = vpop.xlane.xlu0 %1696
          %1698 = vadd.xlane.f32.xlu0 %v1667
          %v1699 = vpop.xlane.xlu0 %1698
          %1700 = vadd.xlane.f32.xlu0 %v1669
          %v1701 = vpop.xlane.xlu0 %1700
          %1702 = vadd.xlane.f32.xlu0 %v1671
          %v1703 = vpop.xlane.xlu0 %1702
          %1704 = vadd.xlane.f32.xlu0 %v1673
          %v1705 = vpop.xlane.xlu0 %1704
          %1706 = vadd.xlane.f32.xlu0 %v1675
          %v1707 = vpop.xlane.xlu0 %1706
          %1708 = vadd.xlane.f32.xlu0 %v1677
          %v1709 = vpop.xlane.xlu0 %1708
          %1710 = vadd.xlane.f32.xlu0 %v1679
          %v1711 = vpop.xlane.xlu0 %1710
          %1712 = vadd.xlane.f32.xlu0 %v1681
          %v1713 = vpop.xlane.xlu0 %1712
          %1714 = vadd.xlane.f32.xlu0 %v1683
          %v1715 = vpop.xlane.xlu0 %1714
          %v1716 = vrcp.pop %v1685
          %v1717 = vrcp.pop %v1687
          %v1718 = vrcp.pop %v1689
          %v1719 = vrcp.pop %v1691
          %v1720 = vrcp.pop %v1693
          %v1721 = vrcp.pop %v1695
          %v1722 = vrcp.pop %v1697
          %v1723 = vrcp.pop %v1699
          %v1724 = vrcp.pop %v1701
          %v1725 = vrcp.pop %v1703
          %v1726 = vrcp.pop %v1705
          %v1727 = vrcp.pop %v1707
          %v1728 = vrcp.pop %v1709
          %v1729 = vrcp.pop %v1711
          %v1730 = vrcp.pop %v1713
          %v1731 = vrcp.pop %v1715
          %v1732 = vmul.f32 %v1653, %v1716
          %v1733 = vmul.f32 %v1655, %v1717
          %v1734 = vmul.f32 %v1657, %v1718
          %v1735 = vmul.f32 %v1659, %v1719
          %v1736 = vmul.f32 %v1661, %v1720
          %v1737 = vmul.f32 %v1663, %v1721
          %v1738 = vmul.f32 %v1665, %v1722
          %v1739 = vmul.f32 %v1667, %v1723
          %v1740 = vmul.f32 %v1669, %v1724
          %v1741 = vmul.f32 %v1671, %v1725
          %v1742 = vmul.f32 %v1673, %v1726
          %v1743 = vmul.f32 %v1675, %v1727
          %v1744 = vmul.f32 %v1677, %v1728
          %v1745 = vmul.f32 %v1679, %v1729
          %v1746 = vmul.f32 %v1681, %v1730
          %v1747 = vmul.f32 %v1683, %v1731
          %v1748 = vmul.f32 %v1732, %v1364
          %v1749 = vmul.f32 %v1733, %v1365
          %v1750 = vmul.f32 %v1734, %v1366
          %v1751 = vmul.f32 %v1735, %v1367
          %v1752 = vmul.f32 %v1736, %v1368
          %v1753 = vmul.f32 %v1737, %v1369
          %v1754 = vmul.f32 %v1738, %v1370
          %v1755 = vmul.f32 %v1739, %v1371
          %v1756 = vmul.f32 %v1740, %v1372
          %v1757 = vmul.f32 %v1741, %v1373
          %v1758 = vmul.f32 %v1742, %v1374
          %v1759 = vmul.f32 %v1743, %v1375
          %v1760 = vmul.f32 %v1744, %v1376
          %v1761 = vmul.f32 %v1745, %v1377
          %v1762 = vmul.f32 %v1746, %v1378
          %v1763 = vmul.f32 %v1747, %v1379
          %v1764 = vmul.f32 %v1748, %v1748
          %v1765 = vmul.f32 %v1749, %v1749
          %v1766 = vmul.f32 %v1750, %v1750
          %v1767 = vmul.f32 %v1751, %v1751
          %v1768 = vmul.f32 %v1752, %v1752
          %v1769 = vmul.f32 %v1753, %v1753
          %v1770 = vmul.f32 %v1754, %v1754
          %v1771 = vmul.f32 %v1755, %v1755
          %v1772 = vmul.f32 %v1756, %v1756
          %v1773 = vmul.f32 %v1757, %v1757
          %v1774 = vmul.f32 %v1758, %v1758
          %v1775 = vmul.f32 %v1759, %v1759
          %v1776 = vmul.f32 %v1760, %v1760
          %v1777 = vmul.f32 %v1761, %v1761
          %v1778 = vmul.f32 %v1762, %v1762
          %v1779 = vmul.f32 %v1763, %v1763
          %1780 = vadd.xlane.f32.xlu0 %v1764
          %v1781 = vpop.xlane.xlu0 %1780
          %1782 = vadd.xlane.f32.xlu0 %v1765
          %v1783 = vpop.xlane.xlu0 %1782
          %1784 = vadd.xlane.f32.xlu0 %v1766
          %v1785 = vpop.xlane.xlu0 %1784
          %1786 = vadd.xlane.f32.xlu0 %v1767
          %v1787 = vpop.xlane.xlu0 %1786
          %1788 = vadd.xlane.f32.xlu0 %v1768
          %v1789 = vpop.xlane.xlu0 %1788
          %1790 = vadd.xlane.f32.xlu0 %v1769
          %v1791 = vpop.xlane.xlu0 %1790
          %1792 = vadd.xlane.f32.xlu0 %v1770
          %v1793 = vpop.xlane.xlu0 %1792
          %1794 = vadd.xlane.f32.xlu0 %v1771
          %v1795 = vpop.xlane.xlu0 %1794
          %1796 = vadd.xlane.f32.xlu0 %v1772
          %v1797 = vpop.xlane.xlu0 %1796
          %1798 = vadd.xlane.f32.xlu0 %v1773
          %v1799 = vpop.xlane.xlu0 %1798
          %1800 = vadd.xlane.f32.xlu0 %v1774
          %v1801 = vpop.xlane.xlu0 %1800
          %1802 = vadd.xlane.f32.xlu0 %v1775
          %v1803 = vpop.xlane.xlu0 %1802
          %1804 = vadd.xlane.f32.xlu0 %v1776
          %v1805 = vpop.xlane.xlu0 %1804
          %1806 = vadd.xlane.f32.xlu0 %v1777
          %v1807 = vpop.xlane.xlu0 %1806
          %1808 = vadd.xlane.f32.xlu0 %v1778
          %v1809 = vpop.xlane.xlu0 %1808
          %1810 = vadd.xlane.f32.xlu0 %v1779
          %v1811 = vpop.xlane.xlu0 %1810
          %v1812 = vmax.f32 %v1781, 1e-24
          %v1813 = vmax.f32 %v1783, 1e-24
          %v1814 = vmax.f32 %v1785, 1e-24
          %v1815 = vmax.f32 %v1787, 1e-24
          %v1816 = vmax.f32 %v1789, 1e-24
          %v1817 = vmax.f32 %v1791, 1e-24
          %v1818 = vmax.f32 %v1793, 1e-24
          %v1819 = vmax.f32 %v1795, 1e-24
          %v1820 = vmax.f32 %v1797, 1e-24
          %v1821 = vmax.f32 %v1799, 1e-24
          %v1822 = vmax.f32 %v1801, 1e-24
          %v1823 = vmax.f32 %v1803, 1e-24
          %v1824 = vmax.f32 %v1805, 1e-24
          %v1825 = vmax.f32 %v1807, 1e-24
          %v1826 = vmax.f32 %v1809, 1e-24
          %v1827 = vmax.f32 %v1811, 1e-24
          %v1828 = vrsqrt.pop %v1812
          %v1829 = vrsqrt.pop %v1813
          %v1830 = vrsqrt.pop %v1814
          %v1831 = vrsqrt.pop %v1815
          %v1832 = vrsqrt.pop %v1816
          %v1833 = vrsqrt.pop %v1817
          %v1834 = vrsqrt.pop %v1818
          %v1835 = vrsqrt.pop %v1819
          %v1836 = vrsqrt.pop %v1820
          %v1837 = vrsqrt.pop %v1821
          %v1838 = vrsqrt.pop %v1822
          %v1839 = vrsqrt.pop %v1823
          %v1840 = vrsqrt.pop %v1824
          %v1841 = vrsqrt.pop %v1825
          %v1842 = vrsqrt.pop %v1826
          %v1843 = vrsqrt.pop %v1827
          %v1844 = vmul.f32 %v1748, %v1828
          %v1845 = vmul.f32 %v1749, %v1829
          %v1846 = vmul.f32 %v1750, %v1830
          %v1847 = vmul.f32 %v1751, %v1831
          %v1848 = vmul.f32 %v1752, %v1832
          %v1849 = vmul.f32 %v1753, %v1833
          %v1850 = vmul.f32 %v1754, %v1834
          %v1851 = vmul.f32 %v1755, %v1835
          %v1852 = vmul.f32 %v1756, %v1836
          %v1853 = vmul.f32 %v1757, %v1837
          %v1854 = vmul.f32 %v1758, %v1838
          %v1855 = vmul.f32 %v1759, %v1839
          %v1856 = vmul.f32 %v1760, %v1840
          %v1857 = vmul.f32 %v1761, %v1841
          %v1858 = vmul.f32 %v1762, %v1842
          %v1859 = vmul.f32 %v1763, %v1843
          %1860 = vst [vmem:[#allocation4] sm:$0xff] %v1844
          %1861 = vst [vmem:[#allocation4 + $0x8] sm:$0xff] %v1845
          %1862 = vst [vmem:[#allocation4 + $0x10] sm:$0xff] %v1846
          %1863 = vst [vmem:[#allocation4 + $0x18] sm:$0xff] %v1847
          %1864 = vst [vmem:[#allocation4 + $0x20] sm:$0xff] %v1848
          %1865 = vst [vmem:[#allocation4 + $0x28] sm:$0xff] %v1849
          %1866 = vst [vmem:[#allocation4 + $0x30] sm:$0xff] %v1850
          %1867 = vst [vmem:[#allocation4 + $0x38] sm:$0xff] %v1851
          %1868 = vst [vmem:[#allocation4 + $0x40] sm:$0xff] %v1852
          %1869 = vst [vmem:[#allocation4 + $0x48] sm:$0xff] %v1853
          %1870 = vst [vmem:[#allocation4 + $0x50] sm:$0xff] %v1854
          %1871 = vst [vmem:[#allocation4 + $0x58] sm:$0xff] %v1855
          %1872 = vst [vmem:[#allocation4 + $0x60] sm:$0xff] %v1856
          %1873 = vst [vmem:[#allocation4 + $0x68] sm:$0xff] %v1857
          %1874 = vst [vmem:[#allocation4 + $0x70] sm:$0xff] %v1858
          %1875 = vst [vmem:[#allocation4 + $0x78] sm:$0xff] %v1859
        $region96: #{recurrent_rgcn_forward.1} parent=91 // pred_fallthru
          _
        %v1876 = vld [vmem:[#allocation2] sm:$0xff]
        %v1877 = vld [vmem:[#allocation2 + $0x8] sm:$0xff]
        %v1878 = vld [vmem:[#allocation2 + $0x10] sm:$0xff]
        %v1879 = vld [vmem:[#allocation2 + $0x18] sm:$0xff]
        %v1880 = vld [vmem:[#allocation2 + $0x20] sm:$0xff]
        %v1881 = vld [vmem:[#allocation2 + $0x28] sm:$0xff]
        %v1882 = vld [vmem:[#allocation2 + $0x30] sm:$0xff]
        %v1883 = vld [vmem:[#allocation2 + $0x38] sm:$0xff]
        %v1884 = vld [vmem:[#allocation2 + $0x40] sm:$0xff]
        %v1885 = vld [vmem:[#allocation2 + $0x48] sm:$0xff]
        %v1886 = vld [vmem:[#allocation2 + $0x50] sm:$0xff]
        %v1887 = vld [vmem:[#allocation2 + $0x58] sm:$0xff]
        %v1888 = vld [vmem:[#allocation2 + $0x60] sm:$0xff]
        %v1889 = vld [vmem:[#allocation2 + $0x68] sm:$0xff]
        %v1890 = vld [vmem:[#allocation2 + $0x70] sm:$0xff]
        %v1891 = vld [vmem:[#allocation2 + $0x78] sm:$0xff]
        %v1892 = vpack.c.bf16 %v1877, %v1876
        %v1893 = vpack.c.bf16 %v1879, %v1878
        %v1894 = vpack.c.bf16 %v1881, %v1880
        %v1895 = vpack.c.bf16 %v1883, %v1882
        %v1896 = vpack.c.bf16 %v1885, %v1884
        %v1897 = vpack.c.bf16 %v1887, %v1886
        %v1898 = vpack.c.bf16 %v1889, %v1888
        %v1899 = vpack.c.bf16 %v1891, %v1890
        %v1900 = vld [vmem:[%s7] sm:$0xf]
        %v1901 = vld [vmem:[%s7 + $0x4] sm:$0xf]
        %v1902 = vld [vmem:[%s7 + $0x8] sm:$0xf]
        %v1903 = vld [vmem:[%s7 + $0xc] sm:$0xf]
        %v1904 = vld [vmem:[%s7 + $0x10] sm:$0xf]
        %v1905 = vld [vmem:[%s7 + $0x14] sm:$0xf]
        %v1906 = vld [vmem:[%s7 + $0x18] sm:$0xf]
        %v1907 = vld [vmem:[%s7 + $0x1c] sm:$0xf]
        %v1908 = vld [vmem:[%s7 + $0x20] sm:$0xf]
        %v1909 = vld [vmem:[%s7 + $0x24] sm:$0xf]
        %v1910 = vld [vmem:[%s7 + $0x28] sm:$0xf]
        %v1911 = vld [vmem:[%s7 + $0x2c] sm:$0xf]
        %v1912 = vld [vmem:[%s7 + $0x30] sm:$0xf]
        %v1913 = vld [vmem:[%s7 + $0x34] sm:$0xf]
        %v1914 = vld [vmem:[%s7 + $0x38] sm:$0xf]
        %v1915 = vld [vmem:[%s7 + $0x3c] sm:$0xf]
        %s1916 = scalar_lea.vmem %s2, %s36
        %v1917 = vld [vmem:[%s1916] sm:$0x1]
        %v1919 = vlaneseq
        %v1920 = vshrl.u32 %v1919, 7
        %v1921 = vsub.s32 0, %v1920
        %v1922 = vrot.slane %v1917, %v1921
        %v1940 = vunpack.c.l.b16 %v1900
        %v1941 = vunpack.c.l.b16 %v1901
        %v1942 = vunpack.c.l.b16 %v1902
        %v1943 = vunpack.c.l.b16 %v1903
        %v1944 = vunpack.c.l.b16 %v1904
        %v1945 = vunpack.c.l.b16 %v1905
        %v1946 = vunpack.c.l.b16 %v1906
        %v1947 = vunpack.c.l.b16 %v1907
        %v1948 = vunpack.c.l.b16 %v1908
        %v1949 = vunpack.c.l.b16 %v1909
        %v1950 = vunpack.c.l.b16 %v1910
        %v1951 = vunpack.c.l.b16 %v1911
        %v1952 = vunpack.c.l.b16 %v1912
        %v1953 = vunpack.c.l.b16 %v1913
        %v1954 = vunpack.c.l.b16 %v1914
        %v1955 = vunpack.c.l.b16 %v1915
        %v1956 = vpack.c.b16 %v1941, %v1940
        %v1957 = vpack.c.b16 %v1943, %v1942
        %v1958 = vpack.c.b16 %v1945, %v1944
        %v1959 = vpack.c.b16 %v1947, %v1946
        %v1960 = vpack.c.b16 %v1949, %v1948
        %v1961 = vpack.c.b16 %v1951, %v1950
        %v1962 = vpack.c.b16 %v1953, %v1952
        %v1963 = vpack.c.b16 %v1955, %v1954
        %1972 = vmatprep.subr.bf16.mxu0 0
        %1973 = vmatpush1.bf16.msra.mxu0 %v1963
        %1974 = vmatprep.subr.bf16.mxu0 0
        %1975 = vmatpush1.bf16.msra.mxu0 %v1962
        %1976 = vmatprep.subr.bf16.mxu0 0
        %1977 = vmatpush1.bf16.msra.mxu0 %v1961
        %1978 = vmatprep.subr.bf16.mxu0 0
        %1979 = vmatpush1.bf16.msra.mxu0 %v1960
        %1980 = vmatprep.subr.bf16.mxu0 0
        %1981 = vmatpush1.bf16.msra.mxu0 %v1959
        %1982 = vmatprep.subr.bf16.mxu0 0
        %1983 = vmatpush1.bf16.msra.mxu0 %v1958
        %1984 = vmatprep.subr.bf16.mxu0 0
        %1985 = vmatpush1.bf16.msra.mxu0 %v1957
        %1986 = vmatprep.subr.bf16.mxu0 0
        %1987 = vmatpush1.bf16.msra.mxu0 %v1956
        %1988 = vmatprep.subr.bf16.mxu0 0
        %1989 = vmatpush2.bf16.msra.mxu0 0
        %1990 = vmatprep.subr.bf16.mxu0 0
        %1991 = vmatpush2.bf16.msra.mxu0 0
        %1992 = vmatprep.subr.bf16.mxu0 0
        %1993 = vmatpush2.bf16.msra.mxu0 0
        %1994 = vmatprep.subr.bf16.mxu0 0
        %1995 = vmatpush2.bf16.msra.mxu0 0
        %1996 = vmatprep.subr.bf16.mxu0 0
        %1997 = vmatpush2.bf16.msra.mxu0 0
        %1998 = vmatprep.subr.bf16.mxu0 0
        %1999 = vmatpush2.bf16.msra.mxu0 0
        %2000 = vmatprep.subr.bf16.mxu0 0
        %2001 = vmatpush2.bf16.msra.mxu0 0
        %2002 = vmatprep.subr.bf16.mxu0 0
        %2003 = vmatpush2.bf16.msra.mxu0 0
        %2004 = vmatprep.mubr.bf16.mxu0 0
        %2005 = vmatmul.mubr.bf16.gmra.mxu0 %v1892
        %v2006 = vpop.f32.mrf.mxu0
        %v2007 = vadd.f32 %v1922, %v2006
        %v2008 = vpop.f32.mrf.mxu0
        %v2009 = vpop.f32.mrf.mxu0
        %v2010 = vadd.f32 %v1922, %v2009
        %v2011 = vpop.f32.mrf.mxu0
        %2012 = vmatprep.mubr.bf16.mxu0 0
        %2013 = vmatmul.mubr.bf16.gmra.mxu0 %v1893
        %v2014 = vpop.f32.mrf.mxu0
        %v2015 = vadd.f32 %v1922, %v2014
        %v2016 = vpop.f32.mrf.mxu0
        %v2017 = vpop.f32.mrf.mxu0
        %v2018 = vadd.f32 %v1922, %v2017
        %v2019 = vpop.f32.mrf.mxu0
        %2020 = vmatprep.mubr.bf16.mxu0 0
        %2021 = vmatmul.mubr.bf16.gmra.mxu0 %v1894
        %v2022 = vpop.f32.mrf.mxu0
        %v2023 = vadd.f32 %v1922, %v2022
        %v2024 = vpop.f32.mrf.mxu0
        %v2025 = vpop.f32.mrf.mxu0
        %v2026 = vadd.f32 %v1922, %v2025
        %v2027 = vpop.f32.mrf.mxu0
        %2028 = vmatprep.mubr.bf16.mxu0 0
        %2029 = vmatmul.mubr.bf16.gmra.mxu0 %v1895
        %v2030 = vpop.f32.mrf.mxu0
        %v2031 = vadd.f32 %v1922, %v2030
        %v2032 = vpop.f32.mrf.mxu0
        %v2033 = vpop.f32.mrf.mxu0
        %v2034 = vadd.f32 %v1922, %v2033
        %v2035 = vpop.f32.mrf.mxu0
        %2036 = vmatprep.mubr.bf16.mxu0 0
        %2037 = vmatmul.mubr.bf16.gmra.mxu0 %v1896
        %v2038 = vpop.f32.mrf.mxu0
        %v2039 = vadd.f32 %v1922, %v2038
        %v2040 = vpop.f32.mrf.mxu0
        %v2041 = vpop.f32.mrf.mxu0
        %v2042 = vadd.f32 %v1922, %v2041
        %v2043 = vpop.f32.mrf.mxu0
        %2044 = vmatprep.mubr.bf16.mxu0 0
        %2045 = vmatmul.mubr.bf16.gmra.mxu0 %v1897
        %v2046 = vpop.f32.mrf.mxu0
        %v2047 = vadd.f32 %v1922, %v2046
        %v2048 = vpop.f32.mrf.mxu0
        %v2049 = vpop.f32.mrf.mxu0
        %v2050 = vadd.f32 %v1922, %v2049
        %v2051 = vpop.f32.mrf.mxu0
        %2052 = vmatprep.mubr.bf16.mxu0 0
        %2053 = vmatmul.mubr.bf16.gmra.mxu0 %v1898
        %v2054 = vpop.f32.mrf.mxu0
        %v2055 = vadd.f32 %v1922, %v2054
        %v2056 = vpop.f32.mrf.mxu0
        %v2057 = vpop.f32.mrf.mxu0
        %v2058 = vadd.f32 %v1922, %v2057
        %v2059 = vpop.f32.mrf.mxu0
        %2060 = vmatprep.mubr.bf16.mxu0 0
        %2061 = vmatmul.mubr.bf16.gmra.mxu0 %v1899
        %v2062 = vpop.f32.mrf.mxu0
        %v2063 = vadd.f32 %v1922, %v2062
        %v2064 = vpop.f32.mrf.mxu0
        %v2065 = vpop.f32.mrf.mxu0
        %v2066 = vadd.f32 %v1922, %v2065
        %v2067 = vpop.f32.mrf.mxu0
        %2068 = vdwg.mxu0
        %v2069 = vpack.c.bf16 %v2010, %v2007
        %v2070 = vpack.c.bf16 %v2018, %v2015
        %v2071 = vpack.c.bf16 %v2026, %v2023
        %v2072 = vpack.c.bf16 %v2034, %v2031
        %v2073 = vpack.c.bf16 %v2042, %v2039
        %v2074 = vpack.c.bf16 %v2050, %v2047
        %v2075 = vpack.c.bf16 %v2058, %v2055
        %v2076 = vpack.c.bf16 %v2066, %v2063
        %s2077 = scalar_select %p686, 1, 0
        %v2078 = vstv %s2077
        %vm2079 = vcmp.eq.s32.totalorder %v2078, 1
        %v2080 = vsel %vm2079, %v2007, %v1876
        %v2081 = vsel %vm2079, %v2010, %v1877
        %v2082 = vsel %vm2079, %v2015, %v1878
        %v2083 = vsel %vm2079, %v2018, %v1879
        %v2084 = vsel %vm2079, %v2023, %v1880
        %v2085 = vsel %vm2079, %v2026, %v1881
        %v2086 = vsel %vm2079, %v2031, %v1882
        %v2087 = vsel %vm2079, %v2034, %v1883
        %v2088 = vsel %vm2079, %v2039, %v1884
        %v2089 = vsel %vm2079, %v2042, %v1885
        %v2090 = vsel %vm2079, %v2047, %v1886
        %v2091 = vsel %vm2079, %v2050, %v1887
        %v2092 = vsel %vm2079, %v2055, %v1888
        %v2093 = vsel %vm2079, %v2058, %v1889
        %v2094 = vsel %vm2079, %v2063, %v1890
        %v2095 = vsel %vm2079, %v2066, %v1891
        %v2096 = vld [vmem:[%s5] sm:$0xff]
        %v2097 = vld [vmem:[%s5 + $0x8] sm:$0xff]
        %s2098 = smul.u32 %s36, 2
        %s2099 = smul.addr %s2098, 4
        %s2100 = scalar_lea.vmem %s1, %s2099
        %v2101 = vld [vmem:[%s2100] sm:$0xf]
        %v2102 = vld [vmem:[%s2100 + $0x4] sm:$0xf]
        %v2105 = vunpack.c.l.b16 %v2101
        %v2106 = vunpack.c.l.b16 %v2102
        %v2107 = vpack.c.b16 %v2106, %v2105
        %2109 = vmatprep.subr.bf16.mxu0 0
        %2110 = vmatpush1.bf16.msra.mxu0 %v2076
        %2111 = vmatprep.subr.bf16.mxu0 0
        %2112 = vmatpush1.bf16.msra.mxu0 %v2075
        %2113 = vmatprep.subr.bf16.mxu0 0
        %2114 = vmatpush1.bf16.msra.mxu0 %v2074
        %2115 = vmatprep.subr.bf16.mxu0 0
        %2116 = vmatpush1.bf16.msra.mxu0 %v2073
        %2117 = vmatprep.subr.bf16.mxu0 0
        %2118 = vmatpush1.bf16.msra.mxu0 %v2072
        %2119 = vmatprep.subr.bf16.mxu0 0
        %2120 = vmatpush1.bf16.msra.mxu0 %v2071
        %2121 = vmatprep.subr.bf16.mxu0 0
        %2122 = vmatpush1.bf16.msra.mxu0 %v2070
        %2123 = vmatprep.subr.bf16.mxu0 0
        %2124 = vmatpush1.bf16.msra.mxu0 %v2069
        %2125 = vmatprep.subr.bf16.mxu0 0
        %2126 = vmatpush2.bf16.msra.mxu0 0
        %2127 = vmatprep.subr.bf16.mxu0 0
        %2128 = vmatpush2.bf16.msra.mxu0 0
        %2129 = vmatprep.subr.bf16.mxu0 0
        %2130 = vmatpush2.bf16.msra.mxu0 0
        %2131 = vmatprep.subr.bf16.mxu0 0
        %2132 = vmatpush2.bf16.msra.mxu0 0
        %2133 = vmatprep.subr.bf16.mxu0 0
        %2134 = vmatpush2.bf16.msra.mxu0 0
        %2135 = vmatprep.subr.bf16.mxu0 0
        %2136 = vmatpush2.bf16.msra.mxu0 0
        %2137 = vmatprep.subr.bf16.mxu0 0
        %2138 = vmatpush2.bf16.msra.mxu0 0
        %2139 = vmatprep.subr.bf16.mxu0 0
        %2140 = vmatpush2.bf16.msra.mxu0 0
        %2141 = vmatprep.mubr.bf16.mxu0 0
        %2142 = vmatmul.mubr.bf16.gmra.mxu0 %v2107
        %v2143 = vpop.f32.mrf.mxu0
        %v2144 = vadd.f32 0.0, %v2143
        %v2145 = vpop.f32.mrf.mxu0
        %v2146 = vpop.f32.mrf.mxu0
        %v2147 = vadd.f32 0.0, %v2146
        %v2148 = vpop.f32.mrf.mxu0
        %2149 = vdwg.mxu0
        %v2150 = vadd.f32 %v2096, %v2144
        %v2151 = vadd.f32 %v2097, %v2147
        %v2152 = vld [vmem:[%s679] sm:$0xf]
        %v2153 = vld [vmem:[%s679 + $0x4] sm:$0xf]
        %v2154 = vld [vmem:[%s679 + $0x8] sm:$0xf]
        %v2155 = vld [vmem:[%s679 + $0xc] sm:$0xf]
        %v2156 = vld [vmem:[%s679 + $0x10] sm:$0xf]
        %v2157 = vld [vmem:[%s679 + $0x14] sm:$0xf]
        %v2158 = vld [vmem:[%s679 + $0x18] sm:$0xf]
        %v2159 = vld [vmem:[%s679 + $0x1c] sm:$0xf]
        %v2160 = vld [vmem:[%s679 + $0x20] sm:$0xf]
        %v2161 = vld [vmem:[%s679 + $0x24] sm:$0xf]
        %v2162 = vld [vmem:[%s679 + $0x28] sm:$0xf]
        %v2163 = vld [vmem:[%s679 + $0x2c] sm:$0xf]
        %v2164 = vld [vmem:[%s679 + $0x30] sm:$0xf]
        %v2165 = vld [vmem:[%s679 + $0x34] sm:$0xf]
        %v2166 = vld [vmem:[%s679 + $0x38] sm:$0xf]
        %v2167 = vld [vmem:[%s679 + $0x3c] sm:$0xf]
        %v2184 = vunpack.c.l.b16 %v2152
        %v2185 = vunpack.c.l.b16 %v2153
        %v2186 = vunpack.c.l.b16 %v2154
        %v2187 = vunpack.c.l.b16 %v2155
        %v2188 = vunpack.c.l.b16 %v2156
        %v2189 = vunpack.c.l.b16 %v2157
        %v2190 = vunpack.c.l.b16 %v2158
        %v2191 = vunpack.c.l.b16 %v2159
        %v2192 = vunpack.c.l.b16 %v2160
        %v2193 = vunpack.c.l.b16 %v2161
        %v2194 = vunpack.c.l.b16 %v2162
        %v2195 = vunpack.c.l.b16 %v2163
        %v2196 = vunpack.c.l.b16 %v2164
        %v2197 = vunpack.c.l.b16 %v2165
        %v2198 = vunpack.c.l.b16 %v2166
        %v2199 = vunpack.c.l.b16 %v2167
        %v2200 = vpack.c.b16 %v2185, %v2184
        %v2201 = vpack.c.b16 %v2187, %v2186
        %v2202 = vpack.c.b16 %v2189, %v2188
        %v2203 = vpack.c.b16 %v2191, %v2190
        %v2204 = vpack.c.b16 %v2193, %v2192
        %v2205 = vpack.c.b16 %v2195, %v2194
        %v2206 = vpack.c.b16 %v2197, %v2196
        %v2207 = vpack.c.b16 %v2199, %v2198
        %2216 = vmatprep.subr.bf16.mxu0 0
        %2217 = vmatpush1.bf16.msra.mxu0 %v2076
        %2218 = vmatprep.subr.bf16.mxu0 0
        %2219 = vmatpush1.bf16.msra.mxu0 %v2075
        %2220 = vmatprep.subr.bf16.mxu0 0
        %2221 = vmatpush1.bf16.msra.mxu0 %v2074
        %2222 = vmatprep.subr.bf16.mxu0 0
        %2223 = vmatpush1.bf16.msra.mxu0 %v2073
        %2224 = vmatprep.subr.bf16.mxu0 0
        %2225 = vmatpush1.bf16.msra.mxu0 %v2072
        %2226 = vmatprep.subr.bf16.mxu0 0
        %2227 = vmatpush1.bf16.msra.mxu0 %v2071
        %2228 = vmatprep.subr.bf16.mxu0 0
        %2229 = vmatpush1.bf16.msra.mxu0 %v2070
        %2230 = vmatprep.subr.bf16.mxu0 0
        %2231 = vmatpush1.bf16.msra.mxu0 %v2069
        %2232 = vmatprep.subr.bf16.mxu0 0
        %2233 = vmatpush2.bf16.msra.mxu0 0
        %2234 = vmatprep.subr.bf16.mxu0 0
        %2235 = vmatpush2.bf16.msra.mxu0 0
        %2236 = vmatprep.subr.bf16.mxu0 0
        %2237 = vmatpush2.bf16.msra.mxu0 0
        %2238 = vmatprep.subr.bf16.mxu0 0
        %2239 = vmatpush2.bf16.msra.mxu0 0
        %2240 = vmatprep.subr.bf16.mxu0 0
        %2241 = vmatpush2.bf16.msra.mxu0 0
        %2242 = vmatprep.subr.bf16.mxu0 0
        %2243 = vmatpush2.bf16.msra.mxu0 0
        %2244 = vmatprep.subr.bf16.mxu0 0
        %2245 = vmatpush2.bf16.msra.mxu0 0
        %2246 = vmatprep.subr.bf16.mxu0 0
        %2247 = vmatpush2.bf16.msra.mxu0 0
        %2248 = vmatprep.mubr.bf16.mxu0 0
        %2249 = vmatmul.mubr.bf16.gmra.mxu0 %v2200
        %v2250 = vpop.f32.mrf.mxu0
        %v2251 = vadd.f32 0.0, %v2250
        %v2252 = vpop.f32.mrf.mxu0
        %v2253 = vpop.f32.mrf.mxu0
        %v2254 = vadd.f32 0.0, %v2253
        %v2255 = vpop.f32.mrf.mxu0
        %2256 = vmatprep.mubr.bf16.mxu0 0
        %2257 = vmatmul.mubr.bf16.gmra.mxu0 %v2201
        %v2258 = vpop.f32.mrf.mxu0
        %v2259 = vadd.f32 0.0, %v2258
        %v2260 = vpop.f32.mrf.mxu0
        %v2261 = vpop.f32.mrf.mxu0
        %v2262 = vadd.f32 0.0, %v2261
        %v2263 = vpop.f32.mrf.mxu0
        %2264 = vmatprep.mubr.bf16.mxu0 0
        %2265 = vmatmul.mubr.bf16.gmra.mxu0 %v2202
        %v2266 = vpop.f32.mrf.mxu0
        %v2267 = vadd.f32 0.0, %v2266
        %v2268 = vpop.f32.mrf.mxu0
        %v2269 = vpop.f32.mrf.mxu0
        %v2270 = vadd.f32 0.0, %v2269
        %v2271 = vpop.f32.mrf.mxu0
        %2272 = vmatprep.mubr.bf16.mxu0 0
        %2273 = vmatmul.mubr.bf16.gmra.mxu0 %v2203
        %v2274 = vpop.f32.mrf.mxu0
        %v2275 = vadd.f32 0.0, %v2274
        %v2276 = vpop.f32.mrf.mxu0
        %v2277 = vpop.f32.mrf.mxu0
        %v2278 = vadd.f32 0.0, %v2277
        %v2279 = vpop.f32.mrf.mxu0
        %2280 = vmatprep.mubr.bf16.mxu0 0
        %2281 = vmatmul.mubr.bf16.gmra.mxu0 %v2204
        %v2282 = vpop.f32.mrf.mxu0
        %v2283 = vadd.f32 0.0, %v2282
        %v2284 = vpop.f32.mrf.mxu0
        %v2285 = vpop.f32.mrf.mxu0
        %v2286 = vadd.f32 0.0, %v2285
        %v2287 = vpop.f32.mrf.mxu0
        %2288 = vmatprep.mubr.bf16.mxu0 0
        %2289 = vmatmul.mubr.bf16.gmra.mxu0 %v2205
        %v2290 = vpop.f32.mrf.mxu0
        %v2291 = vadd.f32 0.0, %v2290
        %v2292 = vpop.f32.mrf.mxu0
        %v2293 = vpop.f32.mrf.mxu0
        %v2294 = vadd.f32 0.0, %v2293
        %v2295 = vpop.f32.mrf.mxu0
        %2296 = vmatprep.mubr.bf16.mxu0 0
        %2297 = vmatmul.mubr.bf16.gmra.mxu0 %v2206
        %v2298 = vpop.f32.mrf.mxu0
        %v2299 = vadd.f32 0.0, %v2298
        %v2300 = vpop.f32.mrf.mxu0
        %v2301 = vpop.f32.mrf.mxu0
        %v2302 = vadd.f32 0.0, %v2301
        %v2303 = vpop.f32.mrf.mxu0
        %2304 = vmatprep.mubr.bf16.mxu0 0
        %2305 = vmatmul.mubr.bf16.gmra.mxu0 %v2207
        %v2306 = vpop.f32.mrf.mxu0
        %v2307 = vadd.f32 0.0, %v2306
        %v2308 = vpop.f32.mrf.mxu0
        %v2309 = vpop.f32.mrf.mxu0
        %v2310 = vadd.f32 0.0, %v2309
        %v2311 = vpop.f32.mrf.mxu0
        %2312 = vdwg.mxu0
        %v2313 = vpack.c.bf16 %v2254, %v2251
        %v2314 = vpack.c.bf16 %v2262, %v2259
        %v2315 = vpack.c.bf16 %v2270, %v2267
        %v2316 = vpack.c.bf16 %v2278, %v2275
        %v2317 = vpack.c.bf16 %v2286, %v2283
        %v2318 = vpack.c.bf16 %v2294, %v2291
        %v2319 = vpack.c.bf16 %v2302, %v2299
        %v2320 = vpack.c.bf16 %v2310, %v2307
        %v2321 = vld [vmem:[%s8] sm:$0xf]
        %v2322 = vld [vmem:[%s8 + $0x4] sm:$0xf]
        %v2323 = vld [vmem:[%s8 + $0x8] sm:$0xf]
        %v2324 = vld [vmem:[%s8 + $0xc] sm:$0xf]
        %v2325 = vld [vmem:[%s8 + $0x10] sm:$0xf]
        %v2326 = vld [vmem:[%s8 + $0x14] sm:$0xf]
        %v2327 = vld [vmem:[%s8 + $0x18] sm:$0xf]
        %v2328 = vld [vmem:[%s8 + $0x1c] sm:$0xf]
        %v2329 = vld [vmem:[%s8 + $0x20] sm:$0xf]
        %v2330 = vld [vmem:[%s8 + $0x24] sm:$0xf]
        %v2331 = vld [vmem:[%s8 + $0x28] sm:$0xf]
        %v2332 = vld [vmem:[%s8 + $0x2c] sm:$0xf]
        %v2333 = vld [vmem:[%s8 + $0x30] sm:$0xf]
        %v2334 = vld [vmem:[%s8 + $0x34] sm:$0xf]
        %v2335 = vld [vmem:[%s8 + $0x38] sm:$0xf]
        %v2336 = vld [vmem:[%s8 + $0x3c] sm:$0xf]
        %v2337 = vld [vmem:[%s8 + $0x40] sm:$0xf]
        %v2338 = vld [vmem:[%s8 + $0x44] sm:$0xf]
        %v2339 = vld [vmem:[%s8 + $0x48] sm:$0xf]
        %v2340 = vld [vmem:[%s8 + $0x4c] sm:$0xf]
        %v2341 = vld [vmem:[%s8 + $0x50] sm:$0xf]
        %v2342 = vld [vmem:[%s8 + $0x54] sm:$0xf]
        %v2343 = vld [vmem:[%s8 + $0x58] sm:$0xf]
        %v2344 = vld [vmem:[%s8 + $0x5c] sm:$0xf]
        %v2345 = vld [vmem:[%s8 + $0x60] sm:$0xf]
        %v2346 = vld [vmem:[%s8 + $0x64] sm:$0xf]
        %v2347 = vld [vmem:[%s8 + $0x68] sm:$0xf]
        %v2348 = vld [vmem:[%s8 + $0x6c] sm:$0xf]
        %v2349 = vld [vmem:[%s8 + $0x70] sm:$0xf]
        %v2350 = vld [vmem:[%s8 + $0x74] sm:$0xf]
        %v2351 = vld [vmem:[%s8 + $0x78] sm:$0xf]
        %v2352 = vld [vmem:[%s8 + $0x7c] sm:$0xf]
        %v2385 = vunpack.c.l.b16 %v2321
        %v2386 = vunpack.c.l.b16 %v2322
        %v2387 = vunpack.c.l.b16 %v2323
        %v2388 = vunpack.c.l.b16 %v2324
        %v2389 = vunpack.c.l.b16 %v2325
        %v2390 = vunpack.c.l.b16 %v2326
        %v2391 = vunpack.c.l.b16 %v2327
        %v2392 = vunpack.c.l.b16 %v2328
        %v2393 = vunpack.c.l.b16 %v2329
        %v2394 = vunpack.c.l.b16 %v2330
        %v2395 = vunpack.c.l.b16 %v2331
        %v2396 = vunpack.c.l.b16 %v2332
        %v2397 = vunpack.c.l.b16 %v2333
        %v2398 = vunpack.c.l.b16 %v2334
        %v2399 = vunpack.c.l.b16 %v2335
        %v2400 = vunpack.c.l.b16 %v2336
        %v2401 = vunpack.c.l.b16 %v2337
        %v2402 = vunpack.c.l.b16 %v2338
        %v2403 = vunpack.c.l.b16 %v2339
        %v2404 = vunpack.c.l.b16 %v2340
        %v2405 = vunpack.c.l.b16 %v2341
        %v2406 = vunpack.c.l.b16 %v2342
        %v2407 = vunpack.c.l.b16 %v2343
        %v2408 = vunpack.c.l.b16 %v2344
        %v2409 = vunpack.c.l.b16 %v2345
        %v2410 = vunpack.c.l.b16 %v2346
        %v2411 = vunpack.c.l.b16 %v2347
        %v2412 = vunpack.c.l.b16 %v2348
        %v2413 = vunpack.c.l.b16 %v2349
        %v2414 = vunpack.c.l.b16 %v2350
        %v2415 = vunpack.c.l.b16 %v2351
        %v2416 = vunpack.c.l.b16 %v2352
        %v2417 = vpack.c.b16 %v2386, %v2385
        %v2418 = vpack.c.b16 %v2388, %v2387
        %v2419 = vpack.c.b16 %v2390, %v2389
        %v2420 = vpack.c.b16 %v2392, %v2391
        %v2421 = vpack.c.b16 %v2394, %v2393
        %v2422 = vpack.c.b16 %v2396, %v2395
        %v2423 = vpack.c.b16 %v2398, %v2397
        %v2424 = vpack.c.b16 %v2400, %v2399
        %v2425 = vpack.c.b16 %v2402, %v2401
        %v2426 = vpack.c.b16 %v2404, %v2403
        %v2427 = vpack.c.b16 %v2406, %v2405
        %v2428 = vpack.c.b16 %v2408, %v2407
        %v2429 = vpack.c.b16 %v2410, %v2409
        %v2430 = vpack.c.b16 %v2412, %v2411
        %v2431 = vpack.c.b16 %v2414, %v2413
        %v2432 = vpack.c.b16 %v2416, %v2415
        %2449 = vmatprep.subr.bf16.mxu0 0
        %2450 = vmatpush1.bf16.msra.mxu0 %v2424
        %2451 = vmatprep.subr.bf16.mxu0 0
        %2452 = vmatpush1.bf16.msra.mxu0 %v2423
        %2453 = vmatprep.subr.bf16.mxu0 0
        %2454 = vmatpush1.bf16.msra.mxu0 %v2422
        %2455 = vmatprep.subr.bf16.mxu0 0
        %2456 = vmatpush1.bf16.msra.mxu0 %v2421
        %2457 = vmatprep.subr.bf16.mxu0 0
        %2458 = vmatpush1.bf16.msra.mxu0 %v2420
        %2459 = vmatprep.subr.bf16.mxu0 0
        %2460 = vmatpush1.bf16.msra.mxu0 %v2419
        %2461 = vmatprep.subr.bf16.mxu0 0
        %2462 = vmatpush1.bf16.msra.mxu0 %v2418
        %2463 = vmatprep.subr.bf16.mxu0 0
        %2464 = vmatpush1.bf16.msra.mxu0 %v2417
        %2465 = vmatprep.subr.bf16.mxu0 0
        %2466 = vmatpush2.bf16.msra.mxu0 %v2432
        %2467 = vmatprep.subr.bf16.mxu0 0
        %2468 = vmatpush2.bf16.msra.mxu0 %v2431
        %2469 = vmatprep.subr.bf16.mxu0 0
        %2470 = vmatpush2.bf16.msra.mxu0 %v2430
        %2471 = vmatprep.subr.bf16.mxu0 0
        %2472 = vmatpush2.bf16.msra.mxu0 %v2429
        %2473 = vmatprep.subr.bf16.mxu0 0
        %2474 = vmatpush2.bf16.msra.mxu0 %v2428
        %2475 = vmatprep.subr.bf16.mxu0 0
        %2476 = vmatpush2.bf16.msra.mxu0 %v2427
        %2477 = vmatprep.subr.bf16.mxu0 0
        %2478 = vmatpush2.bf16.msra.mxu0 %v2426
        %2479 = vmatprep.subr.bf16.mxu0 0
        %2480 = vmatpush2.bf16.msra.mxu0 %v2425
        %2481 = vmatprep.mubr.bf16.mxu0 %v2069
        %2482 = vmatmul.mubr.bf16.gmra.mxu0 %v2313
        %v2483 = vpop.f32.mrf.mxu0
        %v2484 = vadd.f32 0.0, %v2483
        %v2485 = vpop.f32.mrf.mxu0
        %v2486 = vpop.f32.mrf.mxu0
        %v2487 = vadd.f32 0.0, %v2486
        %v2488 = vpop.f32.mrf.mxu0
        %2489 = vmatprep.mubr.bf16.mxu0 %v2070
        %2490 = vmatmul.mubr.bf16.gmra.mxu0 %v2314
        %v2491 = vpop.f32.mrf.mxu0
        %v2492 = vadd.f32 0.0, %v2491
        %v2493 = vpop.f32.mrf.mxu0
        %v2494 = vpop.f32.mrf.mxu0
        %v2495 = vadd.f32 0.0, %v2494
        %v2496 = vpop.f32.mrf.mxu0
        %2497 = vmatprep.mubr.bf16.mxu0 %v2071
        %2498 = vmatmul.mubr.bf16.gmra.mxu0 %v2315
        %v2499 = vpop.f32.mrf.mxu0
        %v2500 = vadd.f32 0.0, %v2499
        %v2501 = vpop.f32.mrf.mxu0
        %v2502 = vpop.f32.mrf.mxu0
        %v2503 = vadd.f32 0.0, %v2502
        %v2504 = vpop.f32.mrf.mxu0
        %2505 = vmatprep.mubr.bf16.mxu0 %v2072
        %2506 = vmatmul.mubr.bf16.gmra.mxu0 %v2316
        %v2507 = vpop.f32.mrf.mxu0
        %v2508 = vadd.f32 0.0, %v2507
        %v2509 = vpop.f32.mrf.mxu0
        %v2510 = vpop.f32.mrf.mxu0
        %v2511 = vadd.f32 0.0, %v2510
        %v2512 = vpop.f32.mrf.mxu0
        %2513 = vmatprep.mubr.bf16.mxu0 %v2073
        %2514 = vmatmul.mubr.bf16.gmra.mxu0 %v2317
        %v2515 = vpop.f32.mrf.mxu0
        %v2516 = vadd.f32 0.0, %v2515
        %v2517 = vpop.f32.mrf.mxu0
        %v2518 = vpop.f32.mrf.mxu0
        %v2519 = vadd.f32 0.0, %v2518
        %v2520 = vpop.f32.mrf.mxu0
        %2521 = vmatprep.mubr.bf16.mxu0 %v2074
        %2522 = vmatmul.mubr.bf16.gmra.mxu0 %v2318
        %v2523 = vpop.f32.mrf.mxu0
        %v2524 = vadd.f32 0.0, %v2523
        %v2525 = vpop.f32.mrf.mxu0
        %v2526 = vpop.f32.mrf.mxu0
        %v2527 = vadd.f32 0.0, %v2526
        %v2528 = vpop.f32.mrf.mxu0
        %2529 = vmatprep.mubr.bf16.mxu0 %v2075
        %2530 = vmatmul.mubr.bf16.gmra.mxu0 %v2319
        %v2531 = vpop.f32.mrf.mxu0
        %v2532 = vadd.f32 0.0, %v2531
        %v2533 = vpop.f32.mrf.mxu0
        %v2534 = vpop.f32.mrf.mxu0
        %v2535 = vadd.f32 0.0, %v2534
        %v2536 = vpop.f32.mrf.mxu0
        %2537 = vmatprep.mubr.bf16.mxu0 %v2076
        %2538 = vmatmul.mubr.bf16.gmra.mxu0 %v2320
        %v2539 = vpop.f32.mrf.mxu0
        %v2540 = vadd.f32 0.0, %v2539
        %v2541 = vpop.f32.mrf.mxu0
        %v2542 = vpop.f32.mrf.mxu0
        %v2543 = vadd.f32 0.0, %v2542
        %v2544 = vpop.f32.mrf.mxu0
        %2545 = vdwg.mxu0
        %vm2546 = vcmp.ge.f32.partialorder %v2484, 0.0
        %vm2547 = vcmp.ge.f32.partialorder %v2487, 0.0
        %vm2548 = vcmp.ge.f32.partialorder %v2492, 0.0
        %vm2549 = vcmp.ge.f32.partialorder %v2495, 0.0
        %vm2550 = vcmp.ge.f32.partialorder %v2500, 0.0
        %vm2551 = vcmp.ge.f32.partialorder %v2503, 0.0
        %vm2552 = vcmp.ge.f32.partialorder %v2508, 0.0
        %vm2553 = vcmp.ge.f32.partialorder %v2511, 0.0
        %vm2554 = vcmp.ge.f32.partialorder %v2516, 0.0
        %vm2555 = vcmp.ge.f32.partialorder %v2519, 0.0
        %vm2556 = vcmp.ge.f32.partialorder %v2524, 0.0
        %vm2557 = vcmp.ge.f32.partialorder %v2527, 0.0
        %vm2558 = vcmp.ge.f32.partialorder %v2532, 0.0
        %vm2559 = vcmp.ge.f32.partialorder %v2535, 0.0
        %vm2560 = vcmp.ge.f32.partialorder %v2540, 0.0
        %vm2561 = vcmp.ge.f32.partialorder %v2543, 0.0
        %v2562 = vmul.f32 %v2484, 0.22916667
        %v2563 = vmul.f32 %v2487, 0.22916667
        %v2564 = vmul.f32 %v2492, 0.22916667
        %v2565 = vmul.f32 %v2495, 0.22916667
        %v2566 = vmul.f32 %v2500, 0.22916667
        %v2567 = vmul.f32 %v2503, 0.22916667
        %v2568 = vmul.f32 %v2508, 0.22916667
        %v2569 = vmul.f32 %v2511, 0.22916667
        %v2570 = vmul.f32 %v2516, 0.22916667
        %v2571 = vmul.f32 %v2519, 0.22916667
        %v2572 = vmul.f32 %v2524, 0.22916667
        %v2573 = vmul.f32 %v2527, 0.22916667
        %v2574 = vmul.f32 %v2532, 0.22916667
        %v2575 = vmul.f32 %v2535, 0.22916667
        %v2576 = vmul.f32 %v2540, 0.22916667
        %v2577 = vmul.f32 %v2543, 0.22916667
        %v2578 = vsel %vm2546, %v2484, %v2562
        %v2579 = vsel %vm2547, %v2487, %v2563
        %v2580 = vsel %vm2548, %v2492, %v2564
        %v2581 = vsel %vm2549, %v2495, %v2565
        %v2582 = vsel %vm2550, %v2500, %v2566
        %v2583 = vsel %vm2551, %v2503, %v2567
        %v2584 = vsel %vm2552, %v2508, %v2568
        %v2585 = vsel %vm2553, %v2511, %v2569
        %v2586 = vsel %vm2554, %v2516, %v2570
        %v2587 = vsel %vm2555, %v2519, %v2571
        %v2588 = vsel %vm2556, %v2524, %v2572
        %v2589 = vsel %vm2557, %v2527, %v2573
        %v2590 = vsel %vm2558, %v2532, %v2574
        %v2591 = vsel %vm2559, %v2535, %v2575
        %v2592 = vsel %vm2560, %v2540, %v2576
        %v2593 = vsel %vm2561, %v2543, %v2577
        %v2594 = vmul.f32 %v2578, %v2578
        %v2595 = vmul.f32 %v2579, %v2579
        %v2596 = vmul.f32 %v2580, %v2580
        %v2597 = vmul.f32 %v2581, %v2581
        %v2598 = vmul.f32 %v2582, %v2582
        %v2599 = vmul.f32 %v2583, %v2583
        %v2600 = vmul.f32 %v2584, %v2584
        %v2601 = vmul.f32 %v2585, %v2585
        %v2602 = vmul.f32 %v2586, %v2586
        %v2603 = vmul.f32 %v2587, %v2587
        %v2604 = vmul.f32 %v2588, %v2588
        %v2605 = vmul.f32 %v2589, %v2589
        %v2606 = vmul.f32 %v2590, %v2590
        %v2607 = vmul.f32 %v2591, %v2591
        %v2608 = vmul.f32 %v2592, %v2592
        %v2609 = vmul.f32 %v2593, %v2593
        %2610 = vadd.xlane.f32.xlu0 %v2594
        %v2611 = vpop.xlane.xlu0 %2610
        %2612 = vadd.xlane.f32.xlu0 %v2595
        %v2613 = vpop.xlane.xlu0 %2612
        %2614 = vadd.xlane.f32.xlu0 %v2596
        %v2615 = vpop.xlane.xlu0 %2614
        %2616 = vadd.xlane.f32.xlu0 %v2597
        %v2617 = vpop.xlane.xlu0 %2616
        %2618 = vadd.xlane.f32.xlu0 %v2598
        %v2619 = vpop.xlane.xlu0 %2618
        %2620 = vadd.xlane.f32.xlu0 %v2599
        %v2621 = vpop.xlane.xlu0 %2620
        %2622 = vadd.xlane.f32.xlu0 %v2600
        %v2623 = vpop.xlane.xlu0 %2622
        %2624 = vadd.xlane.f32.xlu0 %v2601
        %v2625 = vpop.xlane.xlu0 %2624
        %2626 = vadd.xlane.f32.xlu0 %v2602
        %v2627 = vpop.xlane.xlu0 %2626
        %2628 = vadd.xlane.f32.xlu0 %v2603
        %v2629 = vpop.xlane.xlu0 %2628
        %2630 = vadd.xlane.f32.xlu0 %v2604
        %v2631 = vpop.xlane.xlu0 %2630
        %2632 = vadd.xlane.f32.xlu0 %v2605
        %v2633 = vpop.xlane.xlu0 %2632
        %2634 = vadd.xlane.f32.xlu0 %v2606
        %v2635 = vpop.xlane.xlu0 %2634
        %2636 = vadd.xlane.f32.xlu0 %v2607
        %v2637 = vpop.xlane.xlu0 %2636
        %2638 = vadd.xlane.f32.xlu0 %v2608
        %v2639 = vpop.xlane.xlu0 %2638
        %2640 = vadd.xlane.f32.xlu0 %v2609
        %v2641 = vpop.xlane.xlu0 %2640
        %v2642 = vmax.f32 %v2611, 1e-24
        %v2643 = vmax.f32 %v2613, 1e-24
        %v2644 = vmax.f32 %v2615, 1e-24
        %v2645 = vmax.f32 %v2617, 1e-24
        %v2646 = vmax.f32 %v2619, 1e-24
        %v2647 = vmax.f32 %v2621, 1e-24
        %v2648 = vmax.f32 %v2623, 1e-24
        %v2649 = vmax.f32 %v2625, 1e-24
        %v2650 = vmax.f32 %v2627, 1e-24
        %v2651 = vmax.f32 %v2629, 1e-24
        %v2652 = vmax.f32 %v2631, 1e-24
        %v2653 = vmax.f32 %v2633, 1e-24
        %v2654 = vmax.f32 %v2635, 1e-24
        %v2655 = vmax.f32 %v2637, 1e-24
        %v2656 = vmax.f32 %v2639, 1e-24
        %v2657 = vmax.f32 %v2641, 1e-24
        %v2658 = vrsqrt.pop %v2642
        %v2659 = vrsqrt.pop %v2643
        %v2660 = vrsqrt.pop %v2644
        %v2661 = vrsqrt.pop %v2645
        %v2662 = vrsqrt.pop %v2646
        %v2663 = vrsqrt.pop %v2647
        %v2664 = vrsqrt.pop %v2648
        %v2665 = vrsqrt.pop %v2649
        %v2666 = vrsqrt.pop %v2650
        %v2667 = vrsqrt.pop %v2651
        %v2668 = vrsqrt.pop %v2652
        %v2669 = vrsqrt.pop %v2653
        %v2670 = vrsqrt.pop %v2654
        %v2671 = vrsqrt.pop %v2655
        %v2672 = vrsqrt.pop %v2656
        %v2673 = vrsqrt.pop %v2657
        %v2674 = vmul.f32 %v2578, %v2658
        %v2675 = vmul.f32 %v2579, %v2659
        %v2676 = vmul.f32 %v2580, %v2660
        %v2677 = vmul.f32 %v2581, %v2661
        %v2678 = vmul.f32 %v2582, %v2662
        %v2679 = vmul.f32 %v2583, %v2663
        %v2680 = vmul.f32 %v2584, %v2664
        %v2681 = vmul.f32 %v2585, %v2665
        %v2682 = vmul.f32 %v2586, %v2666
        %v2683 = vmul.f32 %v2587, %v2667
        %v2684 = vmul.f32 %v2588, %v2668
        %v2685 = vmul.f32 %v2589, %v2669
        %v2686 = vmul.f32 %v2590, %v2670
        %v2687 = vmul.f32 %v2591, %v2671
        %v2688 = vmul.f32 %v2592, %v2672
        %v2689 = vmul.f32 %v2593, %v2673
        %v2690 = vpack.c.bf16 %v2675, %v2674
        %v2691 = vpack.c.bf16 %v2677, %v2676
        %v2692 = vpack.c.bf16 %v2679, %v2678
        %v2693 = vpack.c.bf16 %v2681, %v2680
        %v2694 = vpack.c.bf16 %v2683, %v2682
        %v2695 = vpack.c.bf16 %v2685, %v2684
        %v2696 = vpack.c.bf16 %v2687, %v2686
        %v2697 = vpack.c.bf16 %v2689, %v2688
        %v2698 = vpack.c.bf16 %v2081, %v2080
        %v2699 = vpack.c.bf16 %v2083, %v2082
        %v2700 = vpack.c.bf16 %v2085, %v2084
        %v2701 = vpack.c.bf16 %v2087, %v2086
        %v2702 = vpack.c.bf16 %v2089, %v2088
        %v2703 = vpack.c.bf16 %v2091, %v2090
        %v2704 = vpack.c.bf16 %v2093, %v2092
        %v2705 = vpack.c.bf16 %v2095, %v2094
        %v2706 = vld [vmem:[%s14] sm:$0xff]
        %v2707 = vld [vmem:[%s14 + $0x8] sm:$0xff]
        %v2708 = vld [vmem:[%s14 + $0x10] sm:$0xff]
        %v2709 = vld [vmem:[%s14 + $0x18] sm:$0xff]
        %v2710 = vld [vmem:[%s14 + $0x20] sm:$0xff]
        %v2711 = vld [vmem:[%s14 + $0x28] sm:$0xff]
        %v2712 = vld [vmem:[%s14 + $0x30] sm:$0xff]
        %v2713 = vld [vmem:[%s14 + $0x38] sm:$0xff]
        %v2714 = vld [vmem:[%s14 + $0x40] sm:$0xff]
        %v2715 = vld [vmem:[%s14 + $0x48] sm:$0xff]
        %v2716 = vld [vmem:[%s14 + $0x50] sm:$0xff]
        %v2717 = vld [vmem:[%s14 + $0x58] sm:$0xff]
        %v2718 = vld [vmem:[%s14 + $0x60] sm:$0xff]
        %v2719 = vld [vmem:[%s14 + $0x68] sm:$0xff]
        %v2720 = vld [vmem:[%s14 + $0x70] sm:$0xff]
        %v2721 = vld [vmem:[%s14 + $0x78] sm:$0xff]
        %v2722 = vld [vmem:[%s14 + $0x80] sm:$0xff]
        %v2723 = vld [vmem:[%s14 + $0x88] sm:$0xff]
        %v2724 = vld [vmem:[%s14 + $0x90] sm:$0xff]
        %v2725 = vld [vmem:[%s14 + $0x98] sm:$0xff]
        %v2726 = vld [vmem:[%s14 + $0xa0] sm:$0xff]
        %v2727 = vld [vmem:[%s14 + $0xa8] sm:$0xff]
        %v2728 = vld [vmem:[%s14 + $0xb0] sm:$0xff]
        %v2729 = vld [vmem:[%s14 + $0xb8] sm:$0xff]
        %v2730 = vld [vmem:[%s14 + $0xc0] sm:$0xff]
        %v2731 = vld [vmem:[%s14 + $0xc8] sm:$0xff]
        %v2732 = vld [vmem:[%s14 + $0xd0] sm:$0xff]
        %v2733 = vld [vmem:[%s14 + $0xd8] sm:$0xff]
        %v2734 = vld [vmem:[%s14 + $0xe0] sm:$0xff]
        %v2735 = vld [vmem:[%s14 + $0xe8] sm:$0xff]
        %v2736 = vld [vmem:[%s14 + $0xf0] sm:$0xff]
        %v2737 = vld [vmem:[%s14 + $0xf8] sm:$0xff]
        %v2738 = vld [vmem:[%s14 + $0x100] sm:$0xff]
        %v2739 = vld [vmem:[%s14 + $0x108] sm:$0xff]
        %v2740 = vld [vmem:[%s14 + $0x110] sm:$0xff]
        %v2741 = vld [vmem:[%s14 + $0x118] sm:$0xff]
        %v2742 = vld [vmem:[%s14 + $0x120] sm:$0xff]
        %v2743 = vld [vmem:[%s14 + $0x128] sm:$0xff]
        %v2744 = vld [vmem:[%s14 + $0x130] sm:$0xff]
        %v2745 = vld [vmem:[%s14 + $0x138] sm:$0xff]
        %v2746 = vld [vmem:[%s14 + $0x140] sm:$0xff]
        %v2747 = vld [vmem:[%s14 + $0x148] sm:$0xff]
        %v2748 = vld [vmem:[%s14 + $0x150] sm:$0xff]
        %v2749 = vld [vmem:[%s14 + $0x158] sm:$0xff]
        %v2750 = vld [vmem:[%s14 + $0x160] sm:$0xff]
        %v2751 = vld [vmem:[%s14 + $0x168] sm:$0xff]
        %v2752 = vld [vmem:[%s14 + $0x170] sm:$0xff]
        %v2753 = vld [vmem:[%s14 + $0x178] sm:$0xff]
        %v2754 = vld [vmem:[%s14 + $0x180] sm:$0xff]
        %v2755 = vld [vmem:[%s14 + $0x188] sm:$0xff]
        %v2756 = vld [vmem:[%s14 + $0x190] sm:$0xff]
        %v2757 = vld [vmem:[%s14 + $0x198] sm:$0xff]
        %v2758 = vld [vmem:[%s14 + $0x1a0] sm:$0xff]
        %v2759 = vld [vmem:[%s14 + $0x1a8] sm:$0xff]
        %v2760 = vld [vmem:[%s14 + $0x1b0] sm:$0xff]
        %v2761 = vld [vmem:[%s14 + $0x1b8] sm:$0xff]
        %v2762 = vld [vmem:[%s14 + $0x1c0] sm:$0xff]
        %v2763 = vld [vmem:[%s14 + $0x1c8] sm:$0xff]
        %v2764 = vld [vmem:[%s14 + $0x1d0] sm:$0xff]
        %v2765 = vld [vmem:[%s14 + $0x1d8] sm:$0xff]
        %v2766 = vld [vmem:[%s14 + $0x1e0] sm:$0xff]
        %v2767 = vld [vmem:[%s14 + $0x1e8] sm:$0xff]
        %v2768 = vld [vmem:[%s14 + $0x1f0] sm:$0xff]
        %v2769 = vld [vmem:[%s14 + $0x1f8] sm:$0xff]
        %v2770 = vld [vmem:[%s15] sm:$0xf]
        %v2772 = vlaneseq
        %v2773 = vshrl.u32 %v2772, 7
        %v2774 = vsub.s32 0, %v2773
        %v2775 = vrot.slane %v2770, %v2774
        %v2776 = vlaneseq
        %v2777 = vshrl.u32 %v2776, 7
        %v2778 = vsub.s32 1, %v2777
        %v2779 = vrot.slane %v2770, %v2778
        %v2780 = vlaneseq
        %v2781 = vshrl.u32 %v2780, 7
        %v2782 = vsub.s32 2, %v2781
        %v2783 = vrot.slane %v2770, %v2782
        %v2784 = vlaneseq
        %v2785 = vshrl.u32 %v2784, 7
        %v2786 = vsub.s32 3, %v2785
        %v2787 = vrot.slane %v2770, %v2786
        %v2856 = vunpack.c.l.b16 %v2706
        %v2857 = vunpack.c.h.b16 %v2706
        %v2858 = vunpack.c.l.b16 %v2707
        %v2859 = vunpack.c.h.b16 %v2707
        %v2860 = vunpack.c.l.b16 %v2708
        %v2861 = vunpack.c.h.b16 %v2708
        %v2862 = vunpack.c.l.b16 %v2709
        %v2863 = vunpack.c.h.b16 %v2709
        %v2864 = vunpack.c.l.b16 %v2710
        %v2865 = vunpack.c.h.b16 %v2710
        %v2866 = vunpack.c.l.b16 %v2711
        %v2867 = vunpack.c.h.b16 %v2711
        %v2868 = vunpack.c.l.b16 %v2712
        %v2869 = vunpack.c.h.b16 %v2712
        %v2870 = vunpack.c.l.b16 %v2713
        %v2871 = vunpack.c.h.b16 %v2713
        %v2872 = vunpack.c.l.b16 %v2714
        %v2873 = vunpack.c.h.b16 %v2714
        %v2874 = vunpack.c.l.b16 %v2715
        %v2875 = vunpack.c.h.b16 %v2715
        %v2876 = vunpack.c.l.b16 %v2716
        %v2877 = vunpack.c.h.b16 %v2716
        %v2878 = vunpack.c.l.b16 %v2717
        %v2879 = vunpack.c.h.b16 %v2717
        %v2880 = vunpack.c.l.b16 %v2718
        %v2881 = vunpack.c.h.b16 %v2718
        %v2882 = vunpack.c.l.b16 %v2719
        %v2883 = vunpack.c.h.b16 %v2719
        %v2884 = vunpack.c.l.b16 %v2720
        %v2885 = vunpack.c.h.b16 %v2720
        %v2886 = vunpack.c.l.b16 %v2721
        %v2887 = vunpack.c.h.b16 %v2721
        %v2888 = vunpack.c.l.b16 %v2722
        %v2889 = vunpack.c.h.b16 %v2722
        %v2890 = vunpack.c.l.b16 %v2723
        %v2891 = vunpack.c.h.b16 %v2723
        %v2892 = vunpack.c.l.b16 %v2724
        %v2893 = vunpack.c.h.b16 %v2724
        %v2894 = vunpack.c.l.b16 %v2725
        %v2895 = vunpack.c.h.b16 %v2725
        %v2896 = vunpack.c.l.b16 %v2726
        %v2897 = vunpack.c.h.b16 %v2726
        %v2898 = vunpack.c.l.b16 %v2727
        %v2899 = vunpack.c.h.b16 %v2727
        %v2900 = vunpack.c.l.b16 %v2728
        %v2901 = vunpack.c.h.b16 %v2728
        %v2902 = vunpack.c.l.b16 %v2729
        %v2903 = vunpack.c.h.b16 %v2729
        %v2904 = vunpack.c.l.b16 %v2730
        %v2905 = vunpack.c.h.b16 %v2730
        %v2906 = vunpack.c.l.b16 %v2731
        %v2907 = vunpack.c.h.b16 %v2731
        %v2908 = vunpack.c.l.b16 %v2732
        %v2909 = vunpack.c.h.b16 %v2732
        %v2910 = vunpack.c.l.b16 %v2733
        %v2911 = vunpack.c.h.b16 %v2733
        %v2912 = vunpack.c.l.b16 %v2734
        %v2913 = vunpack.c.h.b16 %v2734
        %v2914 = vunpack.c.l.b16 %v2735
        %v2915 = vunpack.c.h.b16 %v2735
        %v2916 = vunpack.c.l.b16 %v2736
        %v2917 = vunpack.c.h.b16 %v2736
        %v2918 = vunpack.c.l.b16 %v2737
        %v2919 = vunpack.c.h.b16 %v2737
        %v2920 = vunpack.c.l.b16 %v2738
        %v2921 = vunpack.c.h.b16 %v2738
        %v2922 = vunpack.c.l.b16 %v2739
        %v2923 = vunpack.c.h.b16 %v2739
        %v2924 = vunpack.c.l.b16 %v2740
        %v2925 = vunpack.c.h.b16 %v2740
        %v2926 = vunpack.c.l.b16 %v2741
        %v2927 = vunpack.c.h.b16 %v2741
        %v2928 = vunpack.c.l.b16 %v2742
        %v2929 = vunpack.c.h.b16 %v2742
        %v2930 = vunpack.c.l.b16 %v2743
        %v2931 = vunpack.c.h.b16 %v2743
        %v2932 = vunpack.c.l.b16 %v2744
        %v2933 = vunpack.c.h.b16 %v2744
        %v2934 = vunpack.c.l.b16 %v2745
        %v2935 = vunpack.c.h.b16 %v2745
        %v2936 = vunpack.c.l.b16 %v2746
        %v2937 = vunpack.c.h.b16 %v2746
        %v2938 = vunpack.c.l.b16 %v2747
        %v2939 = vunpack.c.h.b16 %v2747
        %v2940 = vunpack.c.l.b16 %v2748
        %v2941 = vunpack.c.h.b16 %v2748
        %v2942 = vunpack.c.l.b16 %v2749
        %v2943 = vunpack.c.h.b16 %v2749
        %v2944 = vunpack.c.l.b16 %v2750
        %v2945 = vunpack.c.h.b16 %v2750
        %v2946 = vunpack.c.l.b16 %v2751
        %v2947 = vunpack.c.h.b16 %v2751
        %v2948 = vunpack.c.l.b16 %v2752
        %v2949 = vunpack.c.h.b16 %v2752
        %v2950 = vunpack.c.l.b16 %v2753
        %v2951 = vunpack.c.h.b16 %v2753
        %v2952 = vunpack.c.l.b16 %v2754
        %v2953 = vunpack.c.h.b16 %v2754
        %v2954 = vunpack.c.l.b16 %v2755
        %v2955 = vunpack.c.h.b16 %v2755
        %v2956 = vunpack.c.l.b16 %v2756
        %v2957 = vunpack.c.h.b16 %v2756
        %v2958 = vunpack.c.l.b16 %v2757
        %v2959 = vunpack.c.h.b16 %v2757
        %v2960 = vunpack.c.l.b16 %v2758
        %v2961 = vunpack.c.h.b16 %v2758
        %v2962 = vunpack.c.l.b16 %v2759
        %v2963 = vunpack.c.h.b16 %v2759
        %v2964 = vunpack.c.l.b16 %v2760
        %v2965 = vunpack.c.h.b16 %v2760
        %v2966 = vunpack.c.l.b16 %v2761
        %v2967 = vunpack.c.h.b16 %v2761
        %v2968 = vunpack.c.l.b16 %v2762
        %v2969 = vunpack.c.h.b16 %v2762
        %v2970 = vunpack.c.l.b16 %v2763
        %v2971 = vunpack.c.h.b16 %v2763
        %v2972 = vunpack.c.l.b16 %v2764
        %v2973 = vunpack.c.h.b16 %v2764
        %v2974 = vunpack.c.l.b16 %v2765
        %v2975 = vunpack.c.h.b16 %v2765
        %v2976 = vunpack.c.l.b16 %v2766
        %v2977 = vunpack.c.h.b16 %v2766
        %v2978 = vunpack.c.l.b16 %v2767
        %v2979 = vunpack.c.h.b16 %v2767
        %v2980 = vunpack.c.l.b16 %v2768
        %v2981 = vunpack.c.h.b16 %v2768
        %v2982 = vunpack.c.l.b16 %v2769
        %v2983 = vunpack.c.h.b16 %v2769
        %v2984 = vpack.c.b16 %v2860, %v2856
        %v2985 = vpack.c.b16 %v2861, %v2857
        %v2986 = vpack.c.b16 %v2862, %v2858
        %v2987 = vpack.c.b16 %v2863, %v2859
        %v2988 = vpack.c.b16 %v2868, %v2864
        %v2989 = vpack.c.b16 %v2869, %v2865
        %v2990 = vpack.c.b16 %v2870, %v2866
        %v2991 = vpack.c.b16 %v2871, %v2867
        %v2992 = vpack.c.b16 %v2876, %v2872
        %v2993 = vpack.c.b16 %v2877, %v2873
        %v2994 = vpack.c.b16 %v2878, %v2874
        %v2995 = vpack.c.b16 %v2879, %v2875
        %v2996 = vpack.c.b16 %v2884, %v2880
        %v2997 = vpack.c.b16 %v2885, %v2881
        %v2998 = vpack.c.b16 %v2886, %v2882
        %v2999 = vpack.c.b16 %v2887, %v2883
        %v3000 = vpack.c.b16 %v2892, %v2888
        %v3001 = vpack.c.b16 %v2893, %v2889
        %v3002 = vpack.c.b16 %v2894, %v2890
        %v3003 = vpack.c.b16 %v2895, %v2891
        %v3004 = vpack.c.b16 %v2900, %v2896
        %v3005 = vpack.c.b16 %v2901, %v2897
        %v3006 = vpack.c.b16 %v2902, %v2898
        %v3007 = vpack.c.b16 %v2903, %v2899
        %v3008 = vpack.c.b16 %v2908, %v2904
        %v3009 = vpack.c.b16 %v2909, %v2905
        %v3010 = vpack.c.b16 %v2910, %v2906
        %v3011 = vpack.c.b16 %v2911, %v2907
        %v3012 = vpack.c.b16 %v2916, %v2912
        %v3013 = vpack.c.b16 %v2917, %v2913
        %v3014 = vpack.c.b16 %v2918, %v2914
        %v3015 = vpack.c.b16 %v2919, %v2915
        %v3016 = vpack.c.b16 %v2924, %v2920
        %v3017 = vpack.c.b16 %v2925, %v2921
        %v3018 = vpack.c.b16 %v2926, %v2922
        %v3019 = vpack.c.b16 %v2927, %v2923
        %v3020 = vpack.c.b16 %v2932, %v2928
        %v3021 = vpack.c.b16 %v2933, %v2929
        %v3022 = vpack.c.b16 %v2934, %v2930
        %v3023 = vpack.c.b16 %v2935, %v2931
        %v3024 = vpack.c.b16 %v2940, %v2936
        %v3025 = vpack.c.b16 %v2941, %v2937
        %v3026 = vpack.c.b16 %v2942, %v2938
        %v3027 = vpack.c.b16 %v2943, %v2939
        %v3028 = vpack.c.b16 %v2948, %v2944
        %v3029 = vpack.c.b16 %v2949, %v2945
        %v3030 = vpack.c.b16 %v2950, %v2946
        %v3031 = vpack.c.b16 %v2951, %v2947
        %v3032 = vpack.c.b16 %v2956, %v2952
        %v3033 = vpack.c.b16 %v2957, %v2953
        %v3034 = vpack.c.b16 %v2958, %v2954
        %v3035 = vpack.c.b16 %v2959, %v2955
        %v3036 = vpack.c.b16 %v2964, %v2960
        %v3037 = vpack.c.b16 %v2965, %v2961
        %v3038 = vpack.c.b16 %v2966, %v2962
        %v3039 = vpack.c.b16 %v2967, %v2963
        %v3040 = vpack.c.b16 %v2972, %v2968
        %v3041 = vpack.c.b16 %v2973, %v2969
        %v3042 = vpack.c.b16 %v2974, %v2970
        %v3043 = vpack.c.b16 %v2975, %v2971
        %v3044 = vpack.c.b16 %v2980, %v2976
        %v3045 = vpack.c.b16 %v2981, %v2977
        %v3046 = vpack.c.b16 %v2982, %v2978
        %v3047 = vpack.c.b16 %v2983, %v2979
        %3112 = vmatprep.subr.bf16.mxu0 %v3013
        %3113 = vmatpush1.bf16.msra.mxu0 %v3012
        %3114 = vmatprep.subr.bf16.mxu0 %v3009
        %3115 = vmatpush1.bf16.msra.mxu0 %v3008
        %3116 = vmatprep.subr.bf16.mxu0 %v3005
        %3117 = vmatpush1.bf16.msra.mxu0 %v3004
        %3118 = vmatprep.subr.bf16.mxu0 %v3001
        %3119 = vmatpush1.bf16.msra.mxu0 %v3000
        %3120 = vmatprep.subr.bf16.mxu0 %v2997
        %3121 = vmatpush1.bf16.msra.mxu0 %v2996
        %3122 = vmatprep.subr.bf16.mxu0 %v2993
        %3123 = vmatpush1.bf16.msra.mxu0 %v2992
        %3124 = vmatprep.subr.bf16.mxu0 %v2989
        %3125 = vmatpush1.bf16.msra.mxu0 %v2988
        %3126 = vmatprep.subr.bf16.mxu0 %v2985
        %3127 = vmatpush1.bf16.msra.mxu0 %v2984
        %3128 = vmatprep.subr.bf16.mxu0 %v3045
        %3129 = vmatpush2.bf16.msra.mxu0 %v3044
        %3130 = vmatprep.subr.bf16.mxu0 %v3041
        %3131 = vmatpush2.bf16.msra.mxu0 %v3040
        %3132 = vmatprep.subr.bf16.mxu0 %v3037
        %3133 = vmatpush2.bf16.msra.mxu0 %v3036
        %3134 = vmatprep.subr.bf16.mxu0 %v3033
        %3135 = vmatpush2.bf16.msra.mxu0 %v3032
        %3136 = vmatprep.subr.bf16.mxu0 %v3029
        %3137 = vmatpush2.bf16.msra.mxu0 %v3028
        %3138 = vmatprep.subr.bf16.mxu0 %v3025
        %3139 = vmatpush2.bf16.msra.mxu0 %v3024
        %3140 = vmatprep.subr.bf16.mxu0 %v3021
        %3141 = vmatpush2.bf16.msra.mxu0 %v3020
        %3142 = vmatprep.subr.bf16.mxu0 %v3017
        %3143 = vmatpush2.bf16.msra.mxu0 %v3016
        %3144 = vmatprep.mubr.bf16.mxu0 %v2698
        %3145 = vmatmul.mubr.bf16.gmra.mxu0 %v2690
        %v3146 = vpop.f32.mrf.mxu0
        %v3147 = vadd.f32 %v2775, %v3146
        %v3148 = vpop.f32.mrf.mxu0
        %v3149 = vadd.f32 %v2779, %v3148
        %v3150 = vpop.f32.mrf.mxu0
        %v3151 = vadd.f32 %v2775, %v3150
        %v3152 = vpop.f32.mrf.mxu0
        %v3153 = vadd.f32 %v2779, %v3152
        %3154 = vmatprep.mubr.bf16.mxu0 %v2699
        %3155 = vmatmul.mubr.bf16.gmra.mxu0 %v2691
        %v3156 = vpop.f32.mrf.mxu0
        %v3157 = vadd.f32 %v2775, %v3156
        %v3158 = vpop.f32.mrf.mxu0
        %v3159 = vadd.f32 %v2779, %v3158
        %v3160 = vpop.f32.mrf.mxu0
        %v3161 = vadd.f32 %v2775, %v3160
        %v3162 = vpop.f32.mrf.mxu0
        %v3163 = vadd.f32 %v2779, %v3162
        %3164 = vmatprep.mubr.bf16.mxu0 %v2700
        %3165 = vmatmul.mubr.bf16.gmra.mxu0 %v2692
        %v3166 = vpop.f32.mrf.mxu0
        %v3167 = vadd.f32 %v2775, %v3166
        %v3168 = vpop.f32.mrf.mxu0
        %v3169 = vadd.f32 %v2779, %v3168
        %v3170 = vpop.f32.mrf.mxu0
        %v3171 = vadd.f32 %v2775, %v3170
        %v3172 = vpop.f32.mrf.mxu0
        %v3173 = vadd.f32 %v2779, %v3172
        %3174 = vmatprep.mubr.bf16.mxu0 %v2701
        %3175 = vmatmul.mubr.bf16.gmra.mxu0 %v2693
        %v3176 = vpop.f32.mrf.mxu0
        %v3177 = vadd.f32 %v2775, %v3176
        %v3178 = vpop.f32.mrf.mxu0
        %v3179 = vadd.f32 %v2779, %v3178
        %v3180 = vpop.f32.mrf.mxu0
        %v3181 = vadd.f32 %v2775, %v3180
        %v3182 = vpop.f32.mrf.mxu0
        %v3183 = vadd.f32 %v2779, %v3182
        %3184 = vmatprep.mubr.bf16.mxu0 %v2702
        %3185 = vmatmul.mubr.bf16.gmra.mxu0 %v2694
        %v3186 = vpop.f32.mrf.mxu0
        %v3187 = vadd.f32 %v2775, %v3186
        %v3188 = vpop.f32.mrf.mxu0
        %v3189 = vadd.f32 %v2779, %v3188
        %v3190 = vpop.f32.mrf.mxu0
        %v3191 = vadd.f32 %v2775, %v3190
        %v3192 = vpop.f32.mrf.mxu0
        %v3193 = vadd.f32 %v2779, %v3192
        %3194 = vmatprep.mubr.bf16.mxu0 %v2703
        %3195 = vmatmul.mubr.bf16.gmra.mxu0 %v2695
        %v3196 = vpop.f32.mrf.mxu0
        %v3197 = vadd.f32 %v2775, %v3196
        %v3198 = vpop.f32.mrf.mxu0
        %v3199 = vadd.f32 %v2779, %v3198
        %v3200 = vpop.f32.mrf.mxu0
        %v3201 = vadd.f32 %v2775, %v3200
        %v3202 = vpop.f32.mrf.mxu0
        %v3203 = vadd.f32 %v2779, %v3202
        %3204 = vmatprep.mubr.bf16.mxu0 %v2704
        %3205 = vmatmul.mubr.bf16.gmra.mxu0 %v2696
        %v3206 = vpop.f32.mrf.mxu0
        %v3207 = vadd.f32 %v2775, %v3206
        %v3208 = vpop.f32.mrf.mxu0
        %v3209 = vadd.f32 %v2779, %v3208
        %v3210 = vpop.f32.mrf.mxu0
        %v3211 = vadd.f32 %v2775, %v3210
        %v3212 = vpop.f32.mrf.mxu0
        %v3213 = vadd.f32 %v2779, %v3212
        %3214 = vmatprep.mubr.bf16.mxu0 %v2705
        %3215 = vmatmul.mubr.bf16.gmra.mxu0 %v2697
        %v3216 = vpop.f32.mrf.mxu0
        %v3217 = vadd.f32 %v2775, %v3216
        %v3218 = vpop.f32.mrf.mxu0
        %v3219 = vadd.f32 %v2779, %v3218
        %v3220 = vpop.f32.mrf.mxu0
        %v3221 = vadd.f32 %v2775, %v3220
        %v3222 = vpop.f32.mrf.mxu0
        %v3223 = vadd.f32 %v2779, %v3222
        %3224 = vdwg.mxu0
        %3225 = vmatprep.subr.bf16.mxu0 %v3015
        %3226 = vmatpush1.bf16.msra.mxu0 %v3014
        %3227 = vmatprep.subr.bf16.mxu0 %v3011
        %3228 = vmatpush1.bf16.msra.mxu0 %v3010
        %3229 = vmatprep.subr.bf16.mxu0 %v3007
        %3230 = vmatpush1.bf16.msra.mxu0 %v3006
        %3231 = vmatprep.subr.bf16.mxu0 %v3003
        %3232 = vmatpush1.bf16.msra.mxu0 %v3002
        %3233 = vmatprep.subr.bf16.mxu0 %v2999
        %3234 = vmatpush1.bf16.msra.mxu0 %v2998
        %3235 = vmatprep.subr.bf16.mxu0 %v2995
        %3236 = vmatpush1.bf16.msra.mxu0 %v2994
        %3237 = vmatprep.subr.bf16.mxu0 %v2991
        %3238 = vmatpush1.bf16.msra.mxu0 %v2990
        %3239 = vmatprep.subr.bf16.mxu0 %v2987
        %3240 = vmatpush1.bf16.msra.mxu0 %v2986
        %3241 = vmatprep.subr.bf16.mxu0 %v3047
        %3242 = vmatpush2.bf16.msra.mxu0 %v3046
        %3243 = vmatprep.subr.bf16.mxu0 %v3043
        %3244 = vmatpush2.bf16.msra.mxu0 %v3042
        %3245 = vmatprep.subr.bf16.mxu0 %v3039
        %3246 = vmatpush2.bf16.msra.mxu0 %v3038
        %3247 = vmatprep.subr.bf16.mxu0 %v3035
        %3248 = vmatpush2.bf16.msra.mxu0 %v3034
        %3249 = vmatprep.subr.bf16.mxu0 %v3031
        %3250 = vmatpush2.bf16.msra.mxu0 %v3030
        %3251 = vmatprep.subr.bf16.mxu0 %v3027
        %3252 = vmatpush2.bf16.msra.mxu0 %v3026
        %3253 = vmatprep.subr.bf16.mxu0 %v3023
        %3254 = vmatpush2.bf16.msra.mxu0 %v3022
        %3255 = vmatprep.subr.bf16.mxu0 %v3019
        %3256 = vmatpush2.bf16.msra.mxu0 %v3018
        %3257 = vmatprep.mubr.bf16.mxu0 %v2698
        %3258 = vmatmul.mubr.bf16.gmra.mxu0 %v2690
        %v3259 = vpop.f32.mrf.mxu0
        %v3260 = vadd.f32 %v2783, %v3259
        %v3261 = vpop.f32.mrf.mxu0
        %v3262 = vadd.f32 %v2787, %v3261
        %v3263 = vpop.f32.mrf.mxu0
        %v3264 = vadd.f32 %v2783, %v3263
        %v3265 = vpop.f32.mrf.mxu0
        %v3266 = vadd.f32 %v2787, %v3265
        %3267 = vmatprep.mubr.bf16.mxu0 %v2699
        %3268 = vmatmul.mubr.bf16.gmra.mxu0 %v2691
        %v3269 = vpop.f32.mrf.mxu0
        %v3270 = vadd.f32 %v2783, %v3269
        %v3271 = vpop.f32.mrf.mxu0
        %v3272 = vadd.f32 %v2787, %v3271
        %v3273 = vpop.f32.mrf.mxu0
        %v3274 = vadd.f32 %v2783, %v3273
        %v3275 = vpop.f32.mrf.mxu0
        %v3276 = vadd.f32 %v2787, %v3275
        %3277 = vmatprep.mubr.bf16.mxu0 %v2700
        %3278 = vmatmul.mubr.bf16.gmra.mxu0 %v2692
        %v3279 = vpop.f32.mrf.mxu0
        %v3280 = vadd.f32 %v2783, %v3279
        %v3281 = vpop.f32.mrf.mxu0
        %v3282 = vadd.f32 %v2787, %v3281
        %v3283 = vpop.f32.mrf.mxu0
        %v3284 = vadd.f32 %v2783, %v3283
        %v3285 = vpop.f32.mrf.mxu0
        %v3286 = vadd.f32 %v2787, %v3285
        %3287 = vmatprep.mubr.bf16.mxu0 %v2701
        %3288 = vmatmul.mubr.bf16.gmra.mxu0 %v2693
        %v3289 = vpop.f32.mrf.mxu0
        %v3290 = vadd.f32 %v2783, %v3289
        %v3291 = vpop.f32.mrf.mxu0
        %v3292 = vadd.f32 %v2787, %v3291
        %v3293 = vpop.f32.mrf.mxu0
        %v3294 = vadd.f32 %v2783, %v3293
        %v3295 = vpop.f32.mrf.mxu0
        %v3296 = vadd.f32 %v2787, %v3295
        %3297 = vmatprep.mubr.bf16.mxu0 %v2702
        %3298 = vmatmul.mubr.bf16.gmra.mxu0 %v2694
        %v3299 = vpop.f32.mrf.mxu0
        %v3300 = vadd.f32 %v2783, %v3299
        %v3301 = vpop.f32.mrf.mxu0
        %v3302 = vadd.f32 %v2787, %v3301
        %v3303 = vpop.f32.mrf.mxu0
        %v3304 = vadd.f32 %v2783, %v3303
        %v3305 = vpop.f32.mrf.mxu0
        %v3306 = vadd.f32 %v2787, %v3305
        %3307 = vmatprep.mubr.bf16.mxu0 %v2703
        %3308 = vmatmul.mubr.bf16.gmra.mxu0 %v2695
        %v3309 = vpop.f32.mrf.mxu0
        %v3310 = vadd.f32 %v2783, %v3309
        %v3311 = vpop.f32.mrf.mxu0
        %v3312 = vadd.f32 %v2787, %v3311
        %v3313 = vpop.f32.mrf.mxu0
        %v3314 = vadd.f32 %v2783, %v3313
        %v3315 = vpop.f32.mrf.mxu0
        %v3316 = vadd.f32 %v2787, %v3315
        %3317 = vmatprep.mubr.bf16.mxu0 %v2704
        %3318 = vmatmul.mubr.bf16.gmra.mxu0 %v2696
        %v3319 = vpop.f32.mrf.mxu0
        %v3320 = vadd.f32 %v2783, %v3319
        %v3321 = vpop.f32.mrf.mxu0
        %v3322 = vadd.f32 %v2787, %v3321
        %v3323 = vpop.f32.mrf.mxu0
        %v3324 = vadd.f32 %v2783, %v3323
        %v3325 = vpop.f32.mrf.mxu0
        %v3326 = vadd.f32 %v2787, %v3325
        %3327 = vmatprep.mubr.bf16.mxu0 %v2705
        %3328 = vmatmul.mubr.bf16.gmra.mxu0 %v2697
        %v3329 = vpop.f32.mrf.mxu0
        %v3330 = vadd.f32 %v2783, %v3329
        %v3331 = vpop.f32.mrf.mxu0
        %v3332 = vadd.f32 %v2787, %v3331
        %v3333 = vpop.f32.mrf.mxu0
        %v3334 = vadd.f32 %v2783, %v3333
        %v3335 = vpop.f32.mrf.mxu0
        %v3336 = vadd.f32 %v2787, %v3335
        %3337 = vdwg.mxu0
        %v3338 = vxor.u32 %v3147, 2147483648
        %v3339 = vxor.u32 %v3149, 2147483648
        %v3340 = vxor.u32 %v3151, 2147483648
        %v3341 = vxor.u32 %v3153, 2147483648
        %v3342 = vxor.u32 %v3157, 2147483648
        %v3343 = vxor.u32 %v3159, 2147483648
        %v3344 = vxor.u32 %v3161, 2147483648
        %v3345 = vxor.u32 %v3163, 2147483648
        %v3346 = vxor.u32 %v3167, 2147483648
        %v3347 = vxor.u32 %v3169, 2147483648
        %v3348 = vxor.u32 %v3171, 2147483648
        %v3349 = vxor.u32 %v3173, 2147483648
        %v3350 = vxor.u32 %v3177, 2147483648
        %v3351 = vxor.u32 %v3179, 2147483648
        %v3352 = vxor.u32 %v3181, 2147483648
        %v3353 = vxor.u32 %v3183, 2147483648
        %v3354 = vxor.u32 %v3187, 2147483648
        %v3355 = vxor.u32 %v3189, 2147483648
        %v3356 = vxor.u32 %v3191, 2147483648
        %v3357 = vxor.u32 %v3193, 2147483648
        %v3358 = vxor.u32 %v3197, 2147483648
        %v3359 = vxor.u32 %v3199, 2147483648
        %v3360 = vxor.u32 %v3201, 2147483648
        %v3361 = vxor.u32 %v3203, 2147483648
        %v3362 = vxor.u32 %v3207, 2147483648
        %v3363 = vxor.u32 %v3209, 2147483648
        %v3364 = vxor.u32 %v3211, 2147483648
        %v3365 = vxor.u32 %v3213, 2147483648
        %v3366 = vxor.u32 %v3217, 2147483648
        %v3367 = vxor.u32 %v3219, 2147483648
        %v3368 = vxor.u32 %v3221, 2147483648
        %v3369 = vxor.u32 %v3223, 2147483648
        %v3370 = vmul.f32 %v3338, 1.442695
        %v3371 = vpow.pop %v3370
        %v3372 = vmul.f32 %v3339, 1.442695
        %v3373 = vpow.pop %v3372
        %v3374 = vmul.f32 %v3340, 1.442695
        %v3375 = vpow.pop %v3374
        %v3376 = vmul.f32 %v3341, 1.442695
        %v3377 = vpow.pop %v3376
        %v3378 = vmul.f32 %v3342, 1.442695
        %v3379 = vpow.pop %v3378
        %v3380 = vmul.f32 %v3343, 1.442695
        %v3381 = vpow.pop %v3380
        %v3382 = vmul.f32 %v3344, 1.442695
        %v3383 = vpow.pop %v3382
        %v3384 = vmul.f32 %v3345, 1.442695
        %v3385 = vpow.pop %v3384
        %v3386 = vmul.f32 %v3346, 1.442695
        %v3387 = vpow.pop %v3386
        %v3388 = vmul.f32 %v3347, 1.442695
        %v3389 = vpow.pop %v3388
        %v3390 = vmul.f32 %v3348, 1.442695
        %v3391 = vpow.pop %v3390
        %v3392 = vmul.f32 %v3349, 1.442695
        %v3393 = vpow.pop %v3392
        %v3394 = vmul.f32 %v3350, 1.442695
        %v3395 = vpow.pop %v3394
        %v3396 = vmul.f32 %v3351, 1.442695
        %v3397 = vpow.pop %v3396
        %v3398 = vmul.f32 %v3352, 1.442695
        %v3399 = vpow.pop %v3398
        %v3400 = vmul.f32 %v3353, 1.442695
        %v3401 = vpow.pop %v3400
        %v3402 = vmul.f32 %v3354, 1.442695
        %v3403 = vpow.pop %v3402
        %v3404 = vmul.f32 %v3355, 1.442695
        %v3405 = vpow.pop %v3404
        %v3406 = vmul.f32 %v3356, 1.442695
        %v3407 = vpow.pop %v3406
        %v3408 = vmul.f32 %v3357, 1.442695
        %v3409 = vpow.pop %v3408
        %v3410 = vmul.f32 %v3358, 1.442695
        %v3411 = vpow.pop %v3410
        %v3412 = vmul.f32 %v3359, 1.442695
        %v3413 = vpow.pop %v3412
        %v3414 = vmul.f32 %v3360, 1.442695
        %v3415 = vpow.pop %v3414
        %v3416 = vmul.f32 %v3361, 1.442695
        %v3417 = vpow.pop %v3416
        %v3418 = vmul.f32 %v3362, 1.442695
        %v3419 = vpow.pop %v3418
        %v3420 = vmul.f32 %v3363, 1.442695
        %v3421 = vpow.pop %v3420
        %v3422 = vmul.f32 %v3364, 1.442695
        %v3423 = vpow.pop %v3422
        %v3424 = vmul.f32 %v3365, 1.442695
        %v3425 = vpow.pop %v3424
        %v3426 = vmul.f32 %v3366, 1.442695
        %v3427 = vpow.pop %v3426
        %v3428 = vmul.f32 %v3367, 1.442695
        %v3429 = vpow.pop %v3428
        %v3430 = vmul.f32 %v3368, 1.442695
        %v3431 = vpow.pop %v3430
        %v3432 = vmul.f32 %v3369, 1.442695
        %v3433 = vpow.pop %v3432
        %v3434 = vadd.f32 %v3371, 1.0
        %v3435 = vadd.f32 %v3373, 1.0
        %v3436 = vadd.f32 %v3375, 1.0
        %v3437 = vadd.f32 %v3377, 1.0
        %v3438 = vadd.f32 %v3379, 1.0
        %v3439 = vadd.f32 %v3381, 1.0
        %v3440 = vadd.f32 %v3383, 1.0
        %v3441 = vadd.f32 %v3385, 1.0
        %v3442 = vadd.f32 %v3387, 1.0
        %v3443 = vadd.f32 %v3389, 1.0
        %v3444 = vadd.f32 %v3391, 1.0
        %v3445 = vadd.f32 %v3393, 1.0
        %v3446 = vadd.f32 %v3395, 1.0
        %v3447 = vadd.f32 %v3397, 1.0
        %v3448 = vadd.f32 %v3399, 1.0
        %v3449 = vadd.f32 %v3401, 1.0
        %v3450 = vadd.f32 %v3403, 1.0
        %v3451 = vadd.f32 %v3405, 1.0
        %v3452 = vadd.f32 %v3407, 1.0
        %v3453 = vadd.f32 %v3409, 1.0
        %v3454 = vadd.f32 %v3411, 1.0
        %v3455 = vadd.f32 %v3413, 1.0
        %v3456 = vadd.f32 %v3415, 1.0
        %v3457 = vadd.f32 %v3417, 1.0
        %v3458 = vadd.f32 %v3419, 1.0
        %v3459 = vadd.f32 %v3421, 1.0
        %v3460 = vadd.f32 %v3423, 1.0
        %v3461 = vadd.f32 %v3425, 1.0
        %v3462 = vadd.f32 %v3427, 1.0
        %v3463 = vadd.f32 %v3429, 1.0
        %v3464 = vadd.f32 %v3431, 1.0
        %v3465 = vadd.f32 %v3433, 1.0
        %v3466 = vrcp.pop %v3434
        %v3467 = vmul.f32 1.0, %v3466
        %v3468 = vrcp.pop %v3435
        %v3469 = vmul.f32 1.0, %v3468
        %v3470 = vrcp.pop %v3436
        %v3471 = vmul.f32 1.0, %v3470
        %v3472 = vrcp.pop %v3437
        %v3473 = vmul.f32 1.0, %v3472
        %v3474 = vrcp.pop %v3438
        %v3475 = vmul.f32 1.0, %v3474
        %v3476 = vrcp.pop %v3439
        %v3477 = vmul.f32 1.0, %v3476
        %v3478 = vrcp.pop %v3440
        %v3479 = vmul.f32 1.0, %v3478
        %v3480 = vrcp.pop %v3441
        %v3481 = vmul.f32 1.0, %v3480
        %v3482 = vrcp.pop %v3442
        %v3483 = vmul.f32 1.0, %v3482
        %v3484 = vrcp.pop %v3443
        %v3485 = vmul.f32 1.0, %v3484
        %v3486 = vrcp.pop %v3444
        %v3487 = vmul.f32 1.0, %v3486
        %v3488 = vrcp.pop %v3445
        %v3489 = vmul.f32 1.0, %v3488
        %v3490 = vrcp.pop %v3446
        %v3491 = vmul.f32 1.0, %v3490
        %v3492 = vrcp.pop %v3447
        %v3493 = vmul.f32 1.0, %v3492
        %v3494 = vrcp.pop %v3448
        %v3495 = vmul.f32 1.0, %v3494
        %v3496 = vrcp.pop %v3449
        %v3497 = vmul.f32 1.0, %v3496
        %v3498 = vrcp.pop %v3450
        %v3499 = vmul.f32 1.0, %v3498
        %v3500 = vrcp.pop %v3451
        %v3501 = vmul.f32 1.0, %v3500
        %v3502 = vrcp.pop %v3452
        %v3503 = vmul.f32 1.0, %v3502
        %v3504 = vrcp.pop %v3453
        %v3505 = vmul.f32 1.0, %v3504
        %v3506 = vrcp.pop %v3454
        %v3507 = vmul.f32 1.0, %v3506
        %v3508 = vrcp.pop %v3455
        %v3509 = vmul.f32 1.0, %v3508
        %v3510 = vrcp.pop %v3456
        %v3511 = vmul.f32 1.0, %v3510
        %v3512 = vrcp.pop %v3457
        %v3513 = vmul.f32 1.0, %v3512
        %v3514 = vrcp.pop %v3458
        %v3515 = vmul.f32 1.0, %v3514
        %v3516 = vrcp.pop %v3459
        %v3517 = vmul.f32 1.0, %v3516
        %v3518 = vrcp.pop %v3460
        %v3519 = vmul.f32 1.0, %v3518
        %v3520 = vrcp.pop %v3461
        %v3521 = vmul.f32 1.0, %v3520
        %v3522 = vrcp.pop %v3462
        %v3523 = vmul.f32 1.0, %v3522
        %v3524 = vrcp.pop %v3463
        %v3525 = vmul.f32 1.0, %v3524
        %v3526 = vrcp.pop %v3464
        %v3527 = vmul.f32 1.0, %v3526
        %v3528 = vrcp.pop %v3465
        %v3529 = vmul.f32 1.0, %v3528
        %v3530 = vmul.f32 %v3467, %v3262
        %v3531 = vmul.f32 %v3471, %v3266
        %v3532 = vmul.f32 %v3475, %v3272
        %v3533 = vmul.f32 %v3479, %v3276
        %v3534 = vmul.f32 %v3483, %v3282
        %v3535 = vmul.f32 %v3487, %v3286
        %v3536 = vmul.f32 %v3491, %v3292
        %v3537 = vmul.f32 %v3495, %v3296
        %v3538 = vmul.f32 %v3499, %v3302
        %v3539 = vmul.f32 %v3503, %v3306
        %v3540 = vmul.f32 %v3507, %v3312
        %v3541 = vmul.f32 %v3511, %v3316
        %v3542 = vmul.f32 %v3515, %v3322
        %v3543 = vmul.f32 %v3519, %v3326
        %v3544 = vmul.f32 %v3523, %v3332
        %v3545 = vmul.f32 %v3527, %v3336
        %v3546 = vadd.f32 %v3260, %v3530
        %v3547 = vadd.f32 %v3264, %v3531
        %v3548 = vadd.f32 %v3270, %v3532
        %v3549 = vadd.f32 %v3274, %v3533
        %v3550 = vadd.f32 %v3280, %v3534
        %v3551 = vadd.f32 %v3284, %v3535
        %v3552 = vadd.f32 %v3290, %v3536
        %v3553 = vadd.f32 %v3294, %v3537
        %v3554 = vadd.f32 %v3300, %v3538
        %v3555 = vadd.f32 %v3304, %v3539
        %v3556 = vadd.f32 %v3310, %v3540
        %v3557 = vadd.f32 %v3314, %v3541
        %v3558 = vadd.f32 %v3320, %v3542
        %v3559 = vadd.f32 %v3324, %v3543
        %v3560 = vadd.f32 %v3330, %v3544
        %v3561 = vadd.f32 %v3334, %v3545
        %v3562 = vtanh.pop %v3546
        %v3563 = vtanh.pop %v3547
        %v3564 = vtanh.pop %v3548
        %v3565 = vtanh.pop %v3549
        %v3566 = vtanh.pop %v3550
        %v3567 = vtanh.pop %v3551
        %v3568 = vtanh.pop %v3552
        %v3569 = vtanh.pop %v3553
        %v3570 = vtanh.pop %v3554
        %v3571 = vtanh.pop %v3555
        %v3572 = vtanh.pop %v3556
        %v3573 = vtanh.pop %v3557
        %v3574 = vtanh.pop %v3558
        %v3575 = vtanh.pop %v3559
        %v3576 = vtanh.pop %v3560
        %v3577 = vtanh.pop %v3561
        %v3578 = vsub.f32 1.0, %v3469
        %v3579 = vsub.f32 1.0, %v3473
        %v3580 = vsub.f32 1.0, %v3477
        %v3581 = vsub.f32 1.0, %v3481
        %v3582 = vsub.f32 1.0, %v3485
        %v3583 = vsub.f32 1.0, %v3489
        %v3584 = vsub.f32 1.0, %v3493
        %v3585 = vsub.f32 1.0, %v3497
        %v3586 = vsub.f32 1.0, %v3501
        %v3587 = vsub.f32 1.0, %v3505
        %v3588 = vsub.f32 1.0, %v3509
        %v3589 = vsub.f32 1.0, %v3513
        %v3590 = vsub.f32 1.0, %v3517
        %v3591 = vsub.f32 1.0, %v3521
        %v3592 = vsub.f32 1.0, %v3525
        %v3593 = vsub.f32 1.0, %v3529
        %v3594 = vmul.f32 %v3578, %v3562
        %v3595 = vmul.f32 %v3579, %v3563
        %v3596 = vmul.f32 %v3580, %v3564
        %v3597 = vmul.f32 %v3581, %v3565
        %v3598 = vmul.f32 %v3582, %v3566
        %v3599 = vmul.f32 %v3583, %v3567
        %v3600 = vmul.f32 %v3584, %v3568
        %v3601 = vmul.f32 %v3585, %v3569
        %v3602 = vmul.f32 %v3586, %v3570
        %v3603 = vmul.f32 %v3587, %v3571
        %v3604 = vmul.f32 %v3588, %v3572
        %v3605 = vmul.f32 %v3589, %v3573
        %v3606 = vmul.f32 %v3590, %v3574
        %v3607 = vmul.f32 %v3591, %v3575
        %v3608 = vmul.f32 %v3592, %v3576
        %v3609 = vmul.f32 %v3593, %v3577
        %v3610 = vmul.f32 %v3469, %v2080
        %v3611 = vmul.f32 %v3473, %v2081
        %v3612 = vmul.f32 %v3477, %v2082
        %v3613 = vmul.f32 %v3481, %v2083
        %v3614 = vmul.f32 %v3485, %v2084
        %v3615 = vmul.f32 %v3489, %v2085
        %v3616 = vmul.f32 %v3493, %v2086
        %v3617 = vmul.f32 %v3497, %v2087
        %v3618 = vmul.f32 %v3501, %v2088
        %v3619 = vmul.f32 %v3505, %v2089
        %v3620 = vmul.f32 %v3509, %v2090
        %v3621 = vmul.f32 %v3513, %v2091
        %v3622 = vmul.f32 %v3517, %v2092
        %v3623 = vmul.f32 %v3521, %v2093
        %v3624 = vmul.f32 %v3525, %v2094
        %v3625 = vmul.f32 %v3529, %v2095
        %v3626 = vadd.f32 %v3594, %v3610
        %v3627 = vadd.f32 %v3595, %v3611
        %v3628 = vadd.f32 %v3596, %v3612
        %v3629 = vadd.f32 %v3597, %v3613
        %v3630 = vadd.f32 %v3598, %v3614
        %v3631 = vadd.f32 %v3599, %v3615
        %v3632 = vadd.f32 %v3600, %v3616
        %v3633 = vadd.f32 %v3601, %v3617
        %v3634 = vadd.f32 %v3602, %v3618
        %v3635 = vadd.f32 %v3603, %v3619
        %v3636 = vadd.f32 %v3604, %v3620
        %v3637 = vadd.f32 %v3605, %v3621
        %v3638 = vadd.f32 %v3606, %v3622
        %v3639 = vadd.f32 %v3607, %v3623
        %v3640 = vadd.f32 %v3608, %v3624
        %v3641 = vadd.f32 %v3609, %v3625
        %v3642 = vmul.f32 %v3626, %v3626
        %v3643 = vmul.f32 %v3627, %v3627
        %v3644 = vmul.f32 %v3628, %v3628
        %v3645 = vmul.f32 %v3629, %v3629
        %v3646 = vmul.f32 %v3630, %v3630
        %v3647 = vmul.f32 %v3631, %v3631
        %v3648 = vmul.f32 %v3632, %v3632
        %v3649 = vmul.f32 %v3633, %v3633
        %v3650 = vmul.f32 %v3634, %v3634
        %v3651 = vmul.f32 %v3635, %v3635
        %v3652 = vmul.f32 %v3636, %v3636
        %v3653 = vmul.f32 %v3637, %v3637
        %v3654 = vmul.f32 %v3638, %v3638
        %v3655 = vmul.f32 %v3639, %v3639
        %v3656 = vmul.f32 %v3640, %v3640
        %v3657 = vmul.f32 %v3641, %v3641
        %3658 = vadd.xlane.f32.xlu0 %v3642
        %v3659 = vpop.xlane.xlu0 %3658
        %3660 = vadd.xlane.f32.xlu0 %v3643
        %v3661 = vpop.xlane.xlu0 %3660
        %3662 = vadd.xlane.f32.xlu0 %v3644
        %v3663 = vpop.xlane.xlu0 %3662
        %3664 = vadd.xlane.f32.xlu0 %v3645
        %v3665 = vpop.xlane.xlu0 %3664
        %3666 = vadd.xlane.f32.xlu0 %v3646
        %v3667 = vpop.xlane.xlu0 %3666
        %3668 = vadd.xlane.f32.xlu0 %v3647
        %v3669 = vpop.xlane.xlu0 %3668
        %3670 = vadd.xlane.f32.xlu0 %v3648
        %v3671 = vpop.xlane.xlu0 %3670
        %3672 = vadd.xlane.f32.xlu0 %v3649
        %v3673 = vpop.xlane.xlu0 %3672
        %3674 = vadd.xlane.f32.xlu0 %v3650
        %v3675 = vpop.xlane.xlu0 %3674
        %3676 = vadd.xlane.f32.xlu0 %v3651
        %v3677 = vpop.xlane.xlu0 %3676
        %3678 = vadd.xlane.f32.xlu0 %v3652
        %v3679 = vpop.xlane.xlu0 %3678
        %3680 = vadd.xlane.f32.xlu0 %v3653
        %v3681 = vpop.xlane.xlu0 %3680
        %3682 = vadd.xlane.f32.xlu0 %v3654
        %v3683 = vpop.xlane.xlu0 %3682
        %3684 = vadd.xlane.f32.xlu0 %v3655
        %v3685 = vpop.xlane.xlu0 %3684
        %3686 = vadd.xlane.f32.xlu0 %v3656
        %v3687 = vpop.xlane.xlu0 %3686
        %3688 = vadd.xlane.f32.xlu0 %v3657
        %v3689 = vpop.xlane.xlu0 %3688
        %v3690 = vmax.f32 %v3659, 1e-24
        %v3691 = vmax.f32 %v3661, 1e-24
        %v3692 = vmax.f32 %v3663, 1e-24
        %v3693 = vmax.f32 %v3665, 1e-24
        %v3694 = vmax.f32 %v3667, 1e-24
        %v3695 = vmax.f32 %v3669, 1e-24
        %v3696 = vmax.f32 %v3671, 1e-24
        %v3697 = vmax.f32 %v3673, 1e-24
        %v3698 = vmax.f32 %v3675, 1e-24
        %v3699 = vmax.f32 %v3677, 1e-24
        %v3700 = vmax.f32 %v3679, 1e-24
        %v3701 = vmax.f32 %v3681, 1e-24
        %v3702 = vmax.f32 %v3683, 1e-24
        %v3703 = vmax.f32 %v3685, 1e-24
        %v3704 = vmax.f32 %v3687, 1e-24
        %v3705 = vmax.f32 %v3689, 1e-24
        %v3706 = vrsqrt.pop %v3690
        %v3707 = vrsqrt.pop %v3691
        %v3708 = vrsqrt.pop %v3692
        %v3709 = vrsqrt.pop %v3693
        %v3710 = vrsqrt.pop %v3694
        %v3711 = vrsqrt.pop %v3695
        %v3712 = vrsqrt.pop %v3696
        %v3713 = vrsqrt.pop %v3697
        %v3714 = vrsqrt.pop %v3698
        %v3715 = vrsqrt.pop %v3699
        %v3716 = vrsqrt.pop %v3700
        %v3717 = vrsqrt.pop %v3701
        %v3718 = vrsqrt.pop %v3702
        %v3719 = vrsqrt.pop %v3703
        %v3720 = vrsqrt.pop %v3704
        %v3721 = vrsqrt.pop %v3705
        %v3722 = vmul.f32 %v3626, %v3706
        %v3723 = vmul.f32 %v3627, %v3707
        %v3724 = vmul.f32 %v3628, %v3708
        %v3725 = vmul.f32 %v3629, %v3709
        %v3726 = vmul.f32 %v3630, %v3710
        %v3727 = vmul.f32 %v3631, %v3711
        %v3728 = vmul.f32 %v3632, %v3712
        %v3729 = vmul.f32 %v3633, %v3713
        %v3730 = vmul.f32 %v3634, %v3714
        %v3731 = vmul.f32 %v3635, %v3715
        %v3732 = vmul.f32 %v3636, %v3716
        %v3733 = vmul.f32 %v3637, %v3717
        %v3734 = vmul.f32 %v3638, %v3718
        %v3735 = vmul.f32 %v3639, %v3719
        %v3736 = vmul.f32 %v3640, %v3720
        %v3737 = vmul.f32 %v3641, %v3721
        %3738 = vst [vmem:[%s665] sm:$0xff] %v3722
        %3739 = vst [vmem:[%s665 + $0x8] sm:$0xff] %v3723
        %3740 = vst [vmem:[%s665 + $0x10] sm:$0xff] %v3724
        %3741 = vst [vmem:[%s665 + $0x18] sm:$0xff] %v3725
        %3742 = vst [vmem:[%s665 + $0x20] sm:$0xff] %v3726
        %3743 = vst [vmem:[%s665 + $0x28] sm:$0xff] %v3727
        %3744 = vst [vmem:[%s665 + $0x30] sm:$0xff] %v3728
        %3745 = vst [vmem:[%s665 + $0x38] sm:$0xff] %v3729
        %3746 = vst [vmem:[%s665 + $0x40] sm:$0xff] %v3730
        %3747 = vst [vmem:[%s665 + $0x48] sm:$0xff] %v3731
        %3748 = vst [vmem:[%s665 + $0x50] sm:$0xff] %v3732
        %3749 = vst [vmem:[%s665 + $0x58] sm:$0xff] %v3733
        %3750 = vst [vmem:[%s665 + $0x60] sm:$0xff] %v3734
        %3751 = vst [vmem:[%s665 + $0x68] sm:$0xff] %v3735
        %3752 = vst [vmem:[%s665 + $0x70] sm:$0xff] %v3736
        %3753 = vst [vmem:[%s665 + $0x78] sm:$0xff] %v3737
        %3754 = vst [vmem:[#allocation2] sm:$0xff] %v3722
        %3755 = vst [vmem:[#allocation2 + $0x8] sm:$0xff] %v3723
        %3756 = vst [vmem:[#allocation2 + $0x10] sm:$0xff] %v3724
        %3757 = vst [vmem:[#allocation2 + $0x18] sm:$0xff] %v3725
        %3758 = vst [vmem:[#allocation2 + $0x20] sm:$0xff] %v3726
        %3759 = vst [vmem:[#allocation2 + $0x28] sm:$0xff] %v3727
        %3760 = vst [vmem:[#allocation2 + $0x30] sm:$0xff] %v3728
        %3761 = vst [vmem:[#allocation2 + $0x38] sm:$0xff] %v3729
        %3762 = vst [vmem:[#allocation2 + $0x40] sm:$0xff] %v3730
        %3763 = vst [vmem:[#allocation2 + $0x48] sm:$0xff] %v3731
        %3764 = vst [vmem:[#allocation2 + $0x50] sm:$0xff] %v3732
        %3765 = vst [vmem:[#allocation2 + $0x58] sm:$0xff] %v3733
        %3766 = vst [vmem:[#allocation2 + $0x60] sm:$0xff] %v3734
        %3767 = vst [vmem:[#allocation2 + $0x68] sm:$0xff] %v3735
        %3768 = vst [vmem:[#allocation2 + $0x70] sm:$0xff] %v3736
        %3769 = vst [vmem:[#allocation2 + $0x78] sm:$0xff] %v3737
        %v3770 = vld [vmem:[%s6] sm:$0xff]
        %v3771 = vld [vmem:[%s6 + $0x8] sm:$0xff]
        %v3772 = vld [vmem:[%s6 + $0x10] sm:$0xff]
        %v3773 = vld [vmem:[%s6 + $0x18] sm:$0xff]
        %v3774 = vld [vmem:[%s6 + $0x20] sm:$0xff]
        %v3775 = vld [vmem:[%s6 + $0x28] sm:$0xff]
        %v3776 = vld [vmem:[%s6 + $0x30] sm:$0xff]
        %v3777 = vld [vmem:[%s6 + $0x38] sm:$0xff]
        %v3778 = vld [vmem:[%s6 + $0x40] sm:$0xff]
        %v3779 = vld [vmem:[%s6 + $0x48] sm:$0xff]
        %v3780 = vld [vmem:[%s6 + $0x50] sm:$0xff]
        %v3781 = vld [vmem:[%s6 + $0x58] sm:$0xff]
        %v3782 = vld [vmem:[%s6 + $0x60] sm:$0xff]
        %v3783 = vld [vmem:[%s6 + $0x68] sm:$0xff]
        %v3784 = vld [vmem:[%s6 + $0x70] sm:$0xff]
        %v3785 = vld [vmem:[%s6 + $0x78] sm:$0xff]
        %v3786 = vunpack.c.l.bf16 %v2690
        %v3787 = vunpack.c.h.bf16 %v2690
        %v3788 = vunpack.c.l.bf16 %v2691
        %v3789 = vunpack.c.h.bf16 %v2691
        %v3790 = vunpack.c.l.bf16 %v2692
        %v3791 = vunpack.c.h.bf16 %v2692
        %v3792 = vunpack.c.l.bf16 %v2693
        %v3793 = vunpack.c.h.bf16 %v2693
        %v3794 = vunpack.c.l.bf16 %v2694
        %v3795 = vunpack.c.h.bf16 %v2694
        %v3796 = vunpack.c.l.bf16 %v2695
        %v3797 = vunpack.c.h.bf16 %v2695
        %v3798 = vunpack.c.l.bf16 %v2696
        %v3799 = vunpack.c.h.bf16 %v2696
        %v3800 = vunpack.c.l.bf16 %v2697
        %v3801 = vunpack.c.h.bf16 %v2697
        %v3802 = vadd.f32 %v3770, %v3786
        %v3803 = vadd.f32 %v3771, %v3787
        %v3804 = vadd.f32 %v3772, %v3788
        %v3805 = vadd.f32 %v3773, %v3789
        %v3806 = vadd.f32 %v3774, %v3790
        %v3807 = vadd.f32 %v3775, %v3791
        %v3808 = vadd.f32 %v3776, %v3792
        %v3809 = vadd.f32 %v3777, %v3793
        %v3810 = vadd.f32 %v3778, %v3794
        %v3811 = vadd.f32 %v3779, %v3795
        %v3812 = vadd.f32 %v3780, %v3796
        %v3813 = vadd.f32 %v3781, %v3797
        %v3814 = vadd.f32 %v3782, %v3798
        %v3815 = vadd.f32 %v3783, %v3799
        %v3816 = vadd.f32 %v3784, %v3800
        %v3817 = vadd.f32 %v3785, %v3801
        %v3818 = vpack.c.bf16 %v3803, %v3802
        %v3819 = vpack.c.bf16 %v3805, %v3804
        %v3820 = vpack.c.bf16 %v3807, %v3806
        %v3821 = vpack.c.bf16 %v3809, %v3808
        %v3822 = vpack.c.bf16 %v3811, %v3810
        %v3823 = vpack.c.bf16 %v3813, %v3812
        %v3824 = vpack.c.bf16 %v3815, %v3814
        %v3825 = vpack.c.bf16 %v3817, %v3816
        %v3826 = vld [vmem:[%s10] sm:$0xf]
        %v3827 = vld [vmem:[%s10 + $0x4] sm:$0xf]
        %v3828 = vld [vmem:[%s10 + $0x8] sm:$0xf]
        %v3829 = vld [vmem:[%s10 + $0xc] sm:$0xf]
        %v3830 = vld [vmem:[%s10 + $0x10] sm:$0xf]
        %v3831 = vld [vmem:[%s10 + $0x14] sm:$0xf]
        %v3832 = vld [vmem:[%s10 + $0x18] sm:$0xf]
        %v3833 = vld [vmem:[%s10 + $0x1c] sm:$0xf]
        %v3834 = vld [vmem:[%s10 + $0x20] sm:$0xf]
        %v3835 = vld [vmem:[%s10 + $0x24] sm:$0xf]
        %v3836 = vld [vmem:[%s10 + $0x28] sm:$0xf]
        %v3837 = vld [vmem:[%s10 + $0x2c] sm:$0xf]
        %v3838 = vld [vmem:[%s10 + $0x30] sm:$0xf]
        %v3839 = vld [vmem:[%s10 + $0x34] sm:$0xf]
        %v3840 = vld [vmem:[%s10 + $0x38] sm:$0xf]
        %v3841 = vld [vmem:[%s10 + $0x3c] sm:$0xf]
        %v3842 = vld [vmem:[%s11] sm:$0x1]
        %v3844 = vlaneseq
        %v3845 = vshrl.u32 %v3844, 7
        %v3846 = vsub.s32 0, %v3845
        %v3847 = vrot.slane %v3842, %v3846
        %v3865 = vunpack.c.l.b16 %v3826
        %v3866 = vunpack.c.l.b16 %v3827
        %v3867 = vunpack.c.l.b16 %v3828
        %v3868 = vunpack.c.l.b16 %v3829
        %v3869 = vunpack.c.l.b16 %v3830
        %v3870 = vunpack.c.l.b16 %v3831
        %v3871 = vunpack.c.l.b16 %v3832
        %v3872 = vunpack.c.l.b16 %v3833
        %v3873 = vunpack.c.l.b16 %v3834
        %v3874 = vunpack.c.l.b16 %v3835
        %v3875 = vunpack.c.l.b16 %v3836
        %v3876 = vunpack.c.l.b16 %v3837
        %v3877 = vunpack.c.l.b16 %v3838
        %v3878 = vunpack.c.l.b16 %v3839
        %v3879 = vunpack.c.l.b16 %v3840
        %v3880 = vunpack.c.l.b16 %v3841
        %v3881 = vpack.c.b16 %v3866, %v3865
        %v3882 = vpack.c.b16 %v3868, %v3867
        %v3883 = vpack.c.b16 %v3870, %v3869
        %v3884 = vpack.c.b16 %v3872, %v3871
        %v3885 = vpack.c.b16 %v3874, %v3873
        %v3886 = vpack.c.b16 %v3876, %v3875
        %v3887 = vpack.c.b16 %v3878, %v3877
        %v3888 = vpack.c.b16 %v3880, %v3879
        %3897 = vmatprep.subr.bf16.mxu0 0
        %3898 = vmatpush1.bf16.msra.mxu0 %v3888
        %3899 = vmatprep.subr.bf16.mxu0 0
        %3900 = vmatpush1.bf16.msra.mxu0 %v3887
        %3901 = vmatprep.subr.bf16.mxu0 0
        %3902 = vmatpush1.bf16.msra.mxu0 %v3886
        %3903 = vmatprep.subr.bf16.mxu0 0
        %3904 = vmatpush1.bf16.msra.mxu0 %v3885
        %3905 = vmatprep.subr.bf16.mxu0 0
        %3906 = vmatpush1.bf16.msra.mxu0 %v3884
        %3907 = vmatprep.subr.bf16.mxu0 0
        %3908 = vmatpush1.bf16.msra.mxu0 %v3883
        %3909 = vmatprep.subr.bf16.mxu0 0
        %3910 = vmatpush1.bf16.msra.mxu0 %v3882
        %3911 = vmatprep.subr.bf16.mxu0 0
        %3912 = vmatpush1.bf16.msra.mxu0 %v3881
        %3913 = vmatprep.subr.bf16.mxu0 0
        %3914 = vmatpush2.bf16.msra.mxu0 0
        %3915 = vmatprep.subr.bf16.mxu0 0
        %3916 = vmatpush2.bf16.msra.mxu0 0
        %3917 = vmatprep.subr.bf16.mxu0 0
        %3918 = vmatpush2.bf16.msra.mxu0 0
        %3919 = vmatprep.subr.bf16.mxu0 0
        %3920 = vmatpush2.bf16.msra.mxu0 0
        %3921 = vmatprep.subr.bf16.mxu0 0
        %3922 = vmatpush2.bf16.msra.mxu0 0
        %3923 = vmatprep.subr.bf16.mxu0 0
        %3924 = vmatpush2.bf16.msra.mxu0 0
        %3925 = vmatprep.subr.bf16.mxu0 0
        %3926 = vmatpush2.bf16.msra.mxu0 0
        %3927 = vmatprep.subr.bf16.mxu0 0
        %3928 = vmatpush2.bf16.msra.mxu0 0
        %3929 = vmatprep.mubr.bf16.mxu0 0
        %3930 = vmatmul.mubr.bf16.gmra.mxu0 %v3818
        %v3931 = vpop.f32.mrf.mxu0
        %v3932 = vadd.f32 %v3847, %v3931
        %v3933 = vpop.f32.mrf.mxu0
        %v3934 = vpop.f32.mrf.mxu0
        %v3935 = vadd.f32 %v3847, %v3934
        %v3936 = vpop.f32.mrf.mxu0
        %3937 = vmatprep.mubr.bf16.mxu0 0
        %3938 = vmatmul.mubr.bf16.gmra.mxu0 %v3819
        %v3939 = vpop.f32.mrf.mxu0
        %v3940 = vadd.f32 %v3847, %v3939
        %v3941 = vpop.f32.mrf.mxu0
        %v3942 = vpop.f32.mrf.mxu0
        %v3943 = vadd.f32 %v3847, %v3942
        %v3944 = vpop.f32.mrf.mxu0
        %3945 = vmatprep.mubr.bf16.mxu0 0
        %3946 = vmatmul.mubr.bf16.gmra.mxu0 %v3820
        %v3947 = vpop.f32.mrf.mxu0
        %v3948 = vadd.f32 %v3847, %v3947
        %v3949 = vpop.f32.mrf.mxu0
        %v3950 = vpop.f32.mrf.mxu0
        %v3951 = vadd.f32 %v3847, %v3950
        %v3952 = vpop.f32.mrf.mxu0
        %3953 = vmatprep.mubr.bf16.mxu0 0
        %3954 = vmatmul.mubr.bf16.gmra.mxu0 %v3821
        %v3955 = vpop.f32.mrf.mxu0
        %v3956 = vadd.f32 %v3847, %v3955
        %v3957 = vpop.f32.mrf.mxu0
        %v3958 = vpop.f32.mrf.mxu0
        %v3959 = vadd.f32 %v3847, %v3958
        %v3960 = vpop.f32.mrf.mxu0
        %3961 = vmatprep.mubr.bf16.mxu0 0
        %3962 = vmatmul.mubr.bf16.gmra.mxu0 %v3822
        %v3963 = vpop.f32.mrf.mxu0
        %v3964 = vadd.f32 %v3847, %v3963
        %v3965 = vpop.f32.mrf.mxu0
        %v3966 = vpop.f32.mrf.mxu0
        %v3967 = vadd.f32 %v3847, %v3966
        %v3968 = vpop.f32.mrf.mxu0
        %3969 = vmatprep.mubr.bf16.mxu0 0
        %3970 = vmatmul.mubr.bf16.gmra.mxu0 %v3823
        %v3971 = vpop.f32.mrf.mxu0
        %v3972 = vadd.f32 %v3847, %v3971
        %v3973 = vpop.f32.mrf.mxu0
        %v3974 = vpop.f32.mrf.mxu0
        %v3975 = vadd.f32 %v3847, %v3974
        %v3976 = vpop.f32.mrf.mxu0
        %3977 = vmatprep.mubr.bf16.mxu0 0
        %3978 = vmatmul.mubr.bf16.gmra.mxu0 %v3824
        %v3979 = vpop.f32.mrf.mxu0
        %v3980 = vadd.f32 %v3847, %v3979
        %v3981 = vpop.f32.mrf.mxu0
        %v3982 = vpop.f32.mrf.mxu0
        %v3983 = vadd.f32 %v3847, %v3982
        %v3984 = vpop.f32.mrf.mxu0
        %3985 = vmatprep.mubr.bf16.mxu0 0
        %3986 = vmatmul.mubr.bf16.gmra.mxu0 %v3825
        %v3987 = vpop.f32.mrf.mxu0
        %v3988 = vadd.f32 %v3847, %v3987
        %v3989 = vpop.f32.mrf.mxu0
        %v3990 = vpop.f32.mrf.mxu0
        %v3991 = vadd.f32 %v3847, %v3990
        %v3992 = vpop.f32.mrf.mxu0
        %3993 = vdwg.mxu0
        %v3994 = vld [vmem:[#allocation3] sm:$0xff]
        %v3995 = vld [vmem:[#allocation3 + $0x8] sm:$0xff]
        %v3996 = vld [vmem:[#allocation3 + $0x10] sm:$0xff]
        %v3997 = vld [vmem:[#allocation3 + $0x18] sm:$0xff]
        %v3998 = vld [vmem:[#allocation3 + $0x20] sm:$0xff]
        %v3999 = vld [vmem:[#allocation3 + $0x28] sm:$0xff]
        %v4000 = vld [vmem:[#allocation3 + $0x30] sm:$0xff]
        %v4001 = vld [vmem:[#allocation3 + $0x38] sm:$0xff]
        %v4002 = vld [vmem:[#allocation3 + $0x40] sm:$0xff]
        %v4003 = vld [vmem:[#allocation3 + $0x48] sm:$0xff]
        %v4004 = vld [vmem:[#allocation3 + $0x50] sm:$0xff]
        %v4005 = vld [vmem:[#allocation3 + $0x58] sm:$0xff]
        %v4006 = vld [vmem:[#allocation3 + $0x60] sm:$0xff]
        %v4007 = vld [vmem:[#allocation3 + $0x68] sm:$0xff]
        %v4008 = vld [vmem:[#allocation3 + $0x70] sm:$0xff]
        %v4009 = vld [vmem:[#allocation3 + $0x78] sm:$0xff]
        %4010 = vmax.xlane.f32.xlu0 %v3932
        %v4011 = vpop.xlane.xlu0 %4010
        %4012 = vmax.xlane.f32.xlu0 %v3935
        %v4013 = vpop.xlane.xlu0 %4012
        %4014 = vmax.xlane.f32.xlu0 %v3940
        %v4015 = vpop.xlane.xlu0 %4014
        %4016 = vmax.xlane.f32.xlu0 %v3943
        %v4017 = vpop.xlane.xlu0 %4016
        %4018 = vmax.xlane.f32.xlu0 %v3948
        %v4019 = vpop.xlane.xlu0 %4018
        %4020 = vmax.xlane.f32.xlu0 %v3951
        %v4021 = vpop.xlane.xlu0 %4020
        %4022 = vmax.xlane.f32.xlu0 %v3956
        %v4023 = vpop.xlane.xlu0 %4022
        %4024 = vmax.xlane.f32.xlu0 %v3959
        %v4025 = vpop.xlane.xlu0 %4024
        %4026 = vmax.xlane.f32.xlu0 %v3964
        %v4027 = vpop.xlane.xlu0 %4026
        %4028 = vmax.xlane.f32.xlu0 %v3967
        %v4029 = vpop.xlane.xlu0 %4028
        %4030 = vmax.xlane.f32.xlu0 %v3972
        %v4031 = vpop.xlane.xlu0 %4030
        %4032 = vmax.xlane.f32.xlu0 %v3975
        %v4033 = vpop.xlane.xlu0 %4032
        %4034 = vmax.xlane.f32.xlu0 %v3980
        %v4035 = vpop.xlane.xlu0 %4034
        %4036 = vmax.xlane.f32.xlu0 %v3983
        %v4037 = vpop.xlane.xlu0 %4036
        %4038 = vmax.xlane.f32.xlu0 %v3988
        %v4039 = vpop.xlane.xlu0 %4038
        %4040 = vmax.xlane.f32.xlu0 %v3991
        %v4041 = vpop.xlane.xlu0 %4040
        %v4042 = vsub.f32 %v3932, %v4011
        %v4043 = vsub.f32 %v3935, %v4013
        %v4044 = vsub.f32 %v3940, %v4015
        %v4045 = vsub.f32 %v3943, %v4017
        %v4046 = vsub.f32 %v3948, %v4019
        %v4047 = vsub.f32 %v3951, %v4021
        %v4048 = vsub.f32 %v3956, %v4023
        %v4049 = vsub.f32 %v3959, %v4025
        %v4050 = vsub.f32 %v3964, %v4027
        %v4051 = vsub.f32 %v3967, %v4029
        %v4052 = vsub.f32 %v3972, %v4031
        %v4053 = vsub.f32 %v3975, %v4033
        %v4054 = vsub.f32 %v3980, %v4035
        %v4055 = vsub.f32 %v3983, %v4037
        %v4056 = vsub.f32 %v3988, %v4039
        %v4057 = vsub.f32 %v3991, %v4041
        %v4058 = vmul.f32 %v4042, 1.442695
        %v4059 = vpow.pop %v4058
        %v4060 = vmul.f32 %v4043, 1.442695
        %v4061 = vpow.pop %v4060
        %v4062 = vmul.f32 %v4044, 1.442695
        %v4063 = vpow.pop %v4062
        %v4064 = vmul.f32 %v4045, 1.442695
        %v4065 = vpow.pop %v4064
        %v4066 = vmul.f32 %v4046, 1.442695
        %v4067 = vpow.pop %v4066
        %v4068 = vmul.f32 %v4047, 1.442695
        %v4069 = vpow.pop %v4068
        %v4070 = vmul.f32 %v4048, 1.442695
        %v4071 = vpow.pop %v4070
        %v4072 = vmul.f32 %v4049, 1.442695
        %v4073 = vpow.pop %v4072
        %v4074 = vmul.f32 %v4050, 1.442695
        %v4075 = vpow.pop %v4074
        %v4076 = vmul.f32 %v4051, 1.442695
        %v4077 = vpow.pop %v4076
        %v4078 = vmul.f32 %v4052, 1.442695
        %v4079 = vpow.pop %v4078
        %v4080 = vmul.f32 %v4053, 1.442695
        %v4081 = vpow.pop %v4080
        %v4082 = vmul.f32 %v4054, 1.442695
        %v4083 = vpow.pop %v4082
        %v4084 = vmul.f32 %v4055, 1.442695
        %v4085 = vpow.pop %v4084
        %v4086 = vmul.f32 %v4056, 1.442695
        %v4087 = vpow.pop %v4086
        %v4088 = vmul.f32 %v4057, 1.442695
        %v4089 = vpow.pop %v4088
        %4090 = vadd.xlane.f32.xlu0 %v4059
        %v4091 = vpop.xlane.xlu0 %4090
        %4092 = vadd.xlane.f32.xlu0 %v4061
        %v4093 = vpop.xlane.xlu0 %4092
        %4094 = vadd.xlane.f32.xlu0 %v4063
        %v4095 = vpop.xlane.xlu0 %4094
        %4096 = vadd.xlane.f32.xlu0 %v4065
        %v4097 = vpop.xlane.xlu0 %4096
        %4098 = vadd.xlane.f32.xlu0 %v4067
        %v4099 = vpop.xlane.xlu0 %4098
        %4100 = vadd.xlane.f32.xlu0 %v4069
        %v4101 = vpop.xlane.xlu0 %4100
        %4102 = vadd.xlane.f32.xlu0 %v4071
        %v4103 = vpop.xlane.xlu0 %4102
        %4104 = vadd.xlane.f32.xlu0 %v4073
        %v4105 = vpop.xlane.xlu0 %4104
        %4106 = vadd.xlane.f32.xlu0 %v4075
        %v4107 = vpop.xlane.xlu0 %4106
        %4108 = vadd.xlane.f32.xlu0 %v4077
        %v4109 = vpop.xlane.xlu0 %4108
        %4110 = vadd.xlane.f32.xlu0 %v4079
        %v4111 = vpop.xlane.xlu0 %4110
        %4112 = vadd.xlane.f32.xlu0 %v4081
        %v4113 = vpop.xlane.xlu0 %4112
        %4114 = vadd.xlane.f32.xlu0 %v4083
        %v4115 = vpop.xlane.xlu0 %4114
        %4116 = vadd.xlane.f32.xlu0 %v4085
        %v4117 = vpop.xlane.xlu0 %4116
        %4118 = vadd.xlane.f32.xlu0 %v4087
        %v4119 = vpop.xlane.xlu0 %4118
        %4120 = vadd.xlane.f32.xlu0 %v4089
        %v4121 = vpop.xlane.xlu0 %4120
        %v4122 = vrcp.pop %v4091
        %v4123 = vrcp.pop %v4093
        %v4124 = vrcp.pop %v4095
        %v4125 = vrcp.pop %v4097
        %v4126 = vrcp.pop %v4099
        %v4127 = vrcp.pop %v4101
        %v4128 = vrcp.pop %v4103
        %v4129 = vrcp.pop %v4105
        %v4130 = vrcp.pop %v4107
        %v4131 = vrcp.pop %v4109
        %v4132 = vrcp.pop %v4111
        %v4133 = vrcp.pop %v4113
        %v4134 = vrcp.pop %v4115
        %v4135 = vrcp.pop %v4117
        %v4136 = vrcp.pop %v4119
        %v4137 = vrcp.pop %v4121
        %v4138 = vmul.f32 %v4059, %v4122
        %v4139 = vmul.f32 %v4061, %v4123
        %v4140 = vmul.f32 %v4063, %v4124
        %v4141 = vmul.f32 %v4065, %v4125
        %v4142 = vmul.f32 %v4067, %v4126
        %v4143 = vmul.f32 %v4069, %v4127
        %v4144 = vmul.f32 %v4071, %v4128
        %v4145 = vmul.f32 %v4073, %v4129
        %v4146 = vmul.f32 %v4075, %v4130
        %v4147 = vmul.f32 %v4077, %v4131
        %v4148 = vmul.f32 %v4079, %v4132
        %v4149 = vmul.f32 %v4081, %v4133
        %v4150 = vmul.f32 %v4083, %v4134
        %v4151 = vmul.f32 %v4085, %v4135
        %v4152 = vmul.f32 %v4087, %v4136
        %v4153 = vmul.f32 %v4089, %v4137
        %v4154 = vmul.f32 %v4138, %v3722
        %v4155 = vmul.f32 %v4139, %v3723
        %v4156 = vmul.f32 %v4140, %v3724
        %v4157 = vmul.f32 %v4141, %v3725
        %v4158 = vmul.f32 %v4142, %v3726
        %v4159 = vmul.f32 %v4143, %v3727
        %v4160 = vmul.f32 %v4144, %v3728
        %v4161 = vmul.f32 %v4145, %v3729
        %v4162 = vmul.f32 %v4146, %v3730
        %v4163 = vmul.f32 %v4147, %v3731
        %v4164 = vmul.f32 %v4148, %v3732
        %v4165 = vmul.f32 %v4149, %v3733
        %v4166 = vmul.f32 %v4150, %v3734
        %v4167 = vmul.f32 %v4151, %v3735
        %v4168 = vmul.f32 %v4152, %v3736
        %v4169 = vmul.f32 %v4153, %v3737
        %v4170 = vadd.f32 %v3994, %v4154
        %v4171 = vadd.f32 %v3995, %v4155
        %v4172 = vadd.f32 %v3996, %v4156
        %v4173 = vadd.f32 %v3997, %v4157
        %v4174 = vadd.f32 %v3998, %v4158
        %v4175 = vadd.f32 %v3999, %v4159
        %v4176 = vadd.f32 %v4000, %v4160
        %v4177 = vadd.f32 %v4001, %v4161
        %v4178 = vadd.f32 %v4002, %v4162
        %v4179 = vadd.f32 %v4003, %v4163
        %v4180 = vadd.f32 %v4004, %v4164
        %v4181 = vadd.f32 %v4005, %v4165
        %v4182 = vadd.f32 %v4006, %v4166
        %v4183 = vadd.f32 %v4007, %v4167
        %v4184 = vadd.f32 %v4008, %v4168
        %v4185 = vadd.f32 %v4009, %v4169
        %4186 = vst [vmem:[#allocation3] sm:$0xff] %v4170
        %4187 = vst [vmem:[#allocation3 + $0x8] sm:$0xff] %v4171
        %4188 = vst [vmem:[#allocation3 + $0x10] sm:$0xff] %v4172
        %4189 = vst [vmem:[#allocation3 + $0x18] sm:$0xff] %v4173
        %4190 = vst [vmem:[#allocation3 + $0x20] sm:$0xff] %v4174
        %4191 = vst [vmem:[#allocation3 + $0x28] sm:$0xff] %v4175
        %4192 = vst [vmem:[#allocation3 + $0x30] sm:$0xff] %v4176
        %4193 = vst [vmem:[#allocation3 + $0x38] sm:$0xff] %v4177
        %4194 = vst [vmem:[#allocation3 + $0x40] sm:$0xff] %v4178
        %4195 = vst [vmem:[#allocation3 + $0x48] sm:$0xff] %v4179
        %4196 = vst [vmem:[#allocation3 + $0x50] sm:$0xff] %v4180
        %4197 = vst [vmem:[#allocation3 + $0x58] sm:$0xff] %v4181
        %4198 = vst [vmem:[#allocation3 + $0x60] sm:$0xff] %v4182
        %4199 = vst [vmem:[#allocation3 + $0x68] sm:$0xff] %v4183
        %4200 = vst [vmem:[#allocation3 + $0x70] sm:$0xff] %v4184
        %4201 = vst [vmem:[#allocation3 + $0x78] sm:$0xff] %v4185
        %v4202 = vpack.c.bf16 %v2151, %v2150
        %v4203 = vld [vmem:[%s16] sm:$0xf]
        %v4204 = vld [vmem:[%s16 + $0x4] sm:$0xf]
        %v4205 = vld [vmem:[%s16 + $0x8] sm:$0xf]
        %v4206 = vld [vmem:[%s16 + $0xc] sm:$0xf]
        %v4207 = vld [vmem:[%s16 + $0x10] sm:$0xf]
        %v4208 = vld [vmem:[%s16 + $0x14] sm:$0xf]
        %v4209 = vld [vmem:[%s16 + $0x18] sm:$0xf]
        %v4210 = vld [vmem:[%s16 + $0x1c] sm:$0xf]
        %v4211 = vld [vmem:[%s16 + $0x20] sm:$0xf]
        %v4212 = vld [vmem:[%s16 + $0x24] sm:$0xf]
        %v4213 = vld [vmem:[%s16 + $0x28] sm:$0xf]
        %v4214 = vld [vmem:[%s16 + $0x2c] sm:$0xf]
        %v4215 = vld [vmem:[%s16 + $0x30] sm:$0xf]
        %v4216 = vld [vmem:[%s16 + $0x34] sm:$0xf]
        %v4217 = vld [vmem:[%s16 + $0x38] sm:$0xf]
        %v4218 = vld [vmem:[%s16 + $0x3c] sm:$0xf]
        %v4219 = vld [vmem:[%s17] sm:$0x1]
        %v4221 = vlaneseq
        %v4222 = vshrl.u32 %v4221, 7
        %v4223 = vsub.s32 0, %v4222
        %v4224 = vrot.slane %v4219, %v4223
        %v4242 = vunpack.c.l.b16 %v4203
        %v4243 = vunpack.c.l.b16 %v4204
        %v4244 = vunpack.c.l.b16 %v4205
        %v4245 = vunpack.c.l.b16 %v4206
        %v4246 = vunpack.c.l.b16 %v4207
        %v4247 = vunpack.c.l.b16 %v4208
        %v4248 = vunpack.c.l.b16 %v4209
        %v4249 = vunpack.c.l.b16 %v4210
        %v4250 = vunpack.c.l.b16 %v4211
        %v4251 = vunpack.c.l.b16 %v4212
        %v4252 = vunpack.c.l.b16 %v4213
        %v4253 = vunpack.c.l.b16 %v4214
        %v4254 = vunpack.c.l.b16 %v4215
        %v4255 = vunpack.c.l.b16 %v4216
        %v4256 = vunpack.c.l.b16 %v4217
        %v4257 = vunpack.c.l.b16 %v4218
        %v4258 = vpack.c.b16 %v4243, %v4242
        %v4259 = vpack.c.b16 %v4245, %v4244
        %v4260 = vpack.c.b16 %v4247, %v4246
        %v4261 = vpack.c.b16 %v4249, %v4248
        %v4262 = vpack.c.b16 %v4251, %v4250
        %v4263 = vpack.c.b16 %v4253, %v4252
        %v4264 = vpack.c.b16 %v4255, %v4254
        %v4265 = vpack.c.b16 %v4257, %v4256
        %4274 = vmatprep.subr.bf16.mxu0 0
        %4275 = vmatpush1.bf16.msra.mxu0 %v4265
        %4276 = vmatprep.subr.bf16.mxu0 0
        %4277 = vmatpush1.bf16.msra.mxu0 %v4264
        %4278 = vmatprep.subr.bf16.mxu0 0
        %4279 = vmatpush1.bf16.msra.mxu0 %v4263
        %4280 = vmatprep.subr.bf16.mxu0 0
        %4281 = vmatpush1.bf16.msra.mxu0 %v4262
        %4282 = vmatprep.subr.bf16.mxu0 0
        %4283 = vmatpush1.bf16.msra.mxu0 %v4261
        %4284 = vmatprep.subr.bf16.mxu0 0
        %4285 = vmatpush1.bf16.msra.mxu0 %v4260
        %4286 = vmatprep.subr.bf16.mxu0 0
        %4287 = vmatpush1.bf16.msra.mxu0 %v4259
        %4288 = vmatprep.subr.bf16.mxu0 0
        %4289 = vmatpush1.bf16.msra.mxu0 %v4258
        %4290 = vmatprep.subr.bf16.mxu0 0
        %4291 = vmatpush2.bf16.msra.mxu0 0
        %4292 = vmatprep.subr.bf16.mxu0 0
        %4293 = vmatpush2.bf16.msra.mxu0 0
        %4294 = vmatprep.subr.bf16.mxu0 0
        %4295 = vmatpush2.bf16.msra.mxu0 0
        %4296 = vmatprep.subr.bf16.mxu0 0
        %4297 = vmatpush2.bf16.msra.mxu0 0
        %4298 = vmatprep.subr.bf16.mxu0 0
        %4299 = vmatpush2.bf16.msra.mxu0 0
        %4300 = vmatprep.subr.bf16.mxu0 0
        %4301 = vmatpush2.bf16.msra.mxu0 0
        %4302 = vmatprep.subr.bf16.mxu0 0
        %4303 = vmatpush2.bf16.msra.mxu0 0
        %4304 = vmatprep.subr.bf16.mxu0 0
        %4305 = vmatpush2.bf16.msra.mxu0 0
        %4306 = vmatprep.mubr.bf16.mxu0 0
        %4307 = vmatmul.mubr.bf16.gmra.mxu0 %v4202
        %v4308 = vpop.f32.mrf.mxu0
        %v4309 = vadd.f32 %v4224, %v4308
        %v4310 = vpop.f32.mrf.mxu0
        %v4311 = vpop.f32.mrf.mxu0
        %v4312 = vadd.f32 %v4224, %v4311
        %v4313 = vpop.f32.mrf.mxu0
        %4314 = vdwg.mxu0
        %v4315 = vxor.u32 %v4309, 2147483648
        %v4316 = vxor.u32 %v4312, 2147483648
        %v4317 = vmul.f32 %v4315, 1.442695
        %v4318 = vpow.pop %v4317
        %v4319 = vmul.f32 %v4316, 1.442695
        %v4320 = vpow.pop %v4319
        %v4321 = vadd.f32 %v4318, 1.0
        %v4322 = vadd.f32 %v4320, 1.0
        %v4323 = vrcp.pop %v4321
        %v4324 = vmul.f32 1.0, %v4323
        %v4325 = vrcp.pop %v4322
        %v4326 = vmul.f32 1.0, %v4325
        %v4327 = vmul.f32 %v4324, %v2150
        %v4328 = vmul.f32 %v4326, %v2151
        %v4329 = vsub.f32 1.0, %v4324
        %v4330 = vsub.f32 1.0, %v4326
        %v4331 = vld [vmem:[%s5] sm:$0xff]
        %v4332 = vld [vmem:[%s5 + $0x8] sm:$0xff]
        %v4333 = vmul.f32 %v4329, %v4331
        %v4334 = vmul.f32 %v4330, %v4332
        %v4335 = vadd.f32 %v4327, %v4333
        %v4336 = vadd.f32 %v4328, %v4334
        %v4337 = vmul.f32 %v4335, %v4335
        %v4338 = vmul.f32 %v4336, %v4336
        %4339 = vadd.xlane.f32.xlu0 %v4337
        %v4340 = vpop.xlane.xlu0 %4339
        %4341 = vadd.xlane.f32.xlu0 %v4338
        %v4342 = vpop.xlane.xlu0 %4341
        %v4343 = vmax.f32 %v4340, 1e-24
        %v4344 = vmax.f32 %v4342, 1e-24
        %v4345 = vrsqrt.pop %v4343
        %v4346 = vrsqrt.pop %v4344
        %v4347 = vmul.f32 %v4335, %v4345
        %v4348 = vmul.f32 %v4336, %v4346
        %4349 = vst [vmem:[%s684] sm:$0xff] %v4347
        %4350 = vst [vmem:[%s684 + $0x8] sm:$0xff] %v4348
        %p4351 = scmp.eq.s32.totalorder %s36, 2
        // Predicated region
        $region97: #{recurrent_rgcn_forward.1} parent=91 // pred_check
          %p4352 = pneg %p4351
        $region98: #{recurrent_rgcn_forward.1} parent=91 // pred_check_branch
          %4354 = sbr.rel (%p4352) target = $region100
        $region99: #{recurrent_rgcn_forward.1} parent=91 // pred_region
          %v4355 = vld [vmem:[#allocation3] sm:$0xff]
          %v4356 = vld [vmem:[#allocation3 + $0x8] sm:$0xff]
          %v4357 = vld [vmem:[#allocation3 + $0x10] sm:$0xff]
          %v4358 = vld [vmem:[#allocation3 + $0x18] sm:$0xff]
          %v4359 = vld [vmem:[#allocation3 + $0x20] sm:$0xff]
          %v4360 = vld [vmem:[#allocation3 + $0x28] sm:$0xff]
          %v4361 = vld [vmem:[#allocation3 + $0x30] sm:$0xff]
          %v4362 = vld [vmem:[#allocation3 + $0x38] sm:$0xff]
          %v4363 = vld [vmem:[#allocation3 + $0x40] sm:$0xff]
          %v4364 = vld [vmem:[#allocation3 + $0x48] sm:$0xff]
          %v4365 = vld [vmem:[#allocation3 + $0x50] sm:$0xff]
          %v4366 = vld [vmem:[#allocation3 + $0x58] sm:$0xff]
          %v4367 = vld [vmem:[#allocation3 + $0x60] sm:$0xff]
          %v4368 = vld [vmem:[#allocation3 + $0x68] sm:$0xff]
          %v4369 = vld [vmem:[#allocation3 + $0x70] sm:$0xff]
          %v4370 = vld [vmem:[#allocation3 + $0x78] sm:$0xff]
          %v4371 = vmul.f32 %v4355, %v4355
          %v4372 = vmul.f32 %v4356, %v4356
          %v4373 = vmul.f32 %v4357, %v4357
          %v4374 = vmul.f32 %v4358, %v4358
          %v4375 = vmul.f32 %v4359, %v4359
          %v4376 = vmul.f32 %v4360, %v4360
          %v4377 = vmul.f32 %v4361, %v4361
          %v4378 = vmul.f32 %v4362, %v4362
          %v4379 = vmul.f32 %v4363, %v4363
          %v4380 = vmul.f32 %v4364, %v4364
          %v4381 = vmul.f32 %v4365, %v4365
          %v4382 = vmul.f32 %v4366, %v4366
          %v4383 = vmul.f32 %v4367, %v4367
          %v4384 = vmul.f32 %v4368, %v4368
          %v4385 = vmul.f32 %v4369, %v4369
          %v4386 = vmul.f32 %v4370, %v4370
          %4387 = vadd.xlane.f32.xlu0 %v4371
          %v4388 = vpop.xlane.xlu0 %4387
          %4389 = vadd.xlane.f32.xlu0 %v4372
          %v4390 = vpop.xlane.xlu0 %4389
          %4391 = vadd.xlane.f32.xlu0 %v4373
          %v4392 = vpop.xlane.xlu0 %4391
          %4393 = vadd.xlane.f32.xlu0 %v4374
          %v4394 = vpop.xlane.xlu0 %4393
          %4395 = vadd.xlane.f32.xlu0 %v4375
          %v4396 = vpop.xlane.xlu0 %4395
          %4397 = vadd.xlane.f32.xlu0 %v4376
          %v4398 = vpop.xlane.xlu0 %4397
          %4399 = vadd.xlane.f32.xlu0 %v4377
          %v4400 = vpop.xlane.xlu0 %4399
          %4401 = vadd.xlane.f32.xlu0 %v4378
          %v4402 = vpop.xlane.xlu0 %4401
          %4403 = vadd.xlane.f32.xlu0 %v4379
          %v4404 = vpop.xlane.xlu0 %4403
          %4405 = vadd.xlane.f32.xlu0 %v4380
          %v4406 = vpop.xlane.xlu0 %4405
          %4407 = vadd.xlane.f32.xlu0 %v4381
          %v4408 = vpop.xlane.xlu0 %4407
          %4409 = vadd.xlane.f32.xlu0 %v4382
          %v4410 = vpop.xlane.xlu0 %4409
          %4411 = vadd.xlane.f32.xlu0 %v4383
          %v4412 = vpop.xlane.xlu0 %4411
          %4413 = vadd.xlane.f32.xlu0 %v4384
          %v4414 = vpop.xlane.xlu0 %4413
          %4415 = vadd.xlane.f32.xlu0 %v4385
          %v4416 = vpop.xlane.xlu0 %4415
          %4417 = vadd.xlane.f32.xlu0 %v4386
          %v4418 = vpop.xlane.xlu0 %4417
          %v4419 = vmax.f32 %v4388, 1e-24
          %v4420 = vmax.f32 %v4390, 1e-24
          %v4421 = vmax.f32 %v4392, 1e-24
          %v4422 = vmax.f32 %v4394, 1e-24
          %v4423 = vmax.f32 %v4396, 1e-24
          %v4424 = vmax.f32 %v4398, 1e-24
          %v4425 = vmax.f32 %v4400, 1e-24
          %v4426 = vmax.f32 %v4402, 1e-24
          %v4427 = vmax.f32 %v4404, 1e-24
          %v4428 = vmax.f32 %v4406, 1e-24
          %v4429 = vmax.f32 %v4408, 1e-24
          %v4430 = vmax.f32 %v4410, 1e-24
          %v4431 = vmax.f32 %v4412, 1e-24
          %v4432 = vmax.f32 %v4414, 1e-24
          %v4433 = vmax.f32 %v4416, 1e-24
          %v4434 = vmax.f32 %v4418, 1e-24
          %v4435 = vrsqrt.pop %v4419
          %v4436 = vrsqrt.pop %v4420
          %v4437 = vrsqrt.pop %v4421
          %v4438 = vrsqrt.pop %v4422
          %v4439 = vrsqrt.pop %v4423
          %v4440 = vrsqrt.pop %v4424
          %v4441 = vrsqrt.pop %v4425
          %v4442 = vrsqrt.pop %v4426
          %v4443 = vrsqrt.pop %v4427
          %v4444 = vrsqrt.pop %v4428
          %v4445 = vrsqrt.pop %v4429
          %v4446 = vrsqrt.pop %v4430
          %v4447 = vrsqrt.pop %v4431
          %v4448 = vrsqrt.pop %v4432
          %v4449 = vrsqrt.pop %v4433
          %v4450 = vrsqrt.pop %v4434
          %v4451 = vmul.f32 %v4355, %v4435
          %v4452 = vmul.f32 %v4356, %v4436
          %v4453 = vmul.f32 %v4357, %v4437
          %v4454 = vmul.f32 %v4358, %v4438
          %v4455 = vmul.f32 %v4359, %v4439
          %v4456 = vmul.f32 %v4360, %v4440
          %v4457 = vmul.f32 %v4361, %v4441
          %v4458 = vmul.f32 %v4362, %v4442
          %v4459 = vmul.f32 %v4363, %v4443
          %v4460 = vmul.f32 %v4364, %v4444
          %v4461 = vmul.f32 %v4365, %v4445
          %v4462 = vmul.f32 %v4366, %v4446
          %v4463 = vmul.f32 %v4367, %v4447
          %v4464 = vmul.f32 %v4368, %v4448
          %v4465 = vmul.f32 %v4369, %v4449
          %v4466 = vmul.f32 %v4370, %v4450
          %v4467 = vadd.f32 %v4451, %v3722
          %v4468 = vadd.f32 %v4452, %v3723
          %v4469 = vadd.f32 %v4453, %v3724
          %v4470 = vadd.f32 %v4454, %v3725
          %v4471 = vadd.f32 %v4455, %v3726
          %v4472 = vadd.f32 %v4456, %v3727
          %v4473 = vadd.f32 %v4457, %v3728
          %v4474 = vadd.f32 %v4458, %v3729
          %v4475 = vadd.f32 %v4459, %v3730
          %v4476 = vadd.f32 %v4460, %v3731
          %v4477 = vadd.f32 %v4461, %v3732
          %v4478 = vadd.f32 %v4462, %v3733
          %v4479 = vadd.f32 %v4463, %v3734
          %v4480 = vadd.f32 %v4464, %v3735
          %v4481 = vadd.f32 %v4465, %v3736
          %v4482 = vadd.f32 %v4466, %v3737
          %v4483 = vmul.f32 %v4467, %v4467
          %v4484 = vmul.f32 %v4468, %v4468
          %v4485 = vmul.f32 %v4469, %v4469
          %v4486 = vmul.f32 %v4470, %v4470
          %v4487 = vmul.f32 %v4471, %v4471
          %v4488 = vmul.f32 %v4472, %v4472
          %v4489 = vmul.f32 %v4473, %v4473
          %v4490 = vmul.f32 %v4474, %v4474
          %v4491 = vmul.f32 %v4475, %v4475
          %v4492 = vmul.f32 %v4476, %v4476
          %v4493 = vmul.f32 %v4477, %v4477
          %v4494 = vmul.f32 %v4478, %v4478
          %v4495 = vmul.f32 %v4479, %v4479
          %v4496 = vmul.f32 %v4480, %v4480
          %v4497 = vmul.f32 %v4481, %v4481
          %v4498 = vmul.f32 %v4482, %v4482
          %4499 = vadd.xlane.f32.xlu0 %v4483
          %v4500 = vpop.xlane.xlu0 %4499
          %4501 = vadd.xlane.f32.xlu0 %v4484
          %v4502 = vpop.xlane.xlu0 %4501
          %4503 = vadd.xlane.f32.xlu0 %v4485
          %v4504 = vpop.xlane.xlu0 %4503
          %4505 = vadd.xlane.f32.xlu0 %v4486
          %v4506 = vpop.xlane.xlu0 %4505
          %4507 = vadd.xlane.f32.xlu0 %v4487
          %v4508 = vpop.xlane.xlu0 %4507
          %4509 = vadd.xlane.f32.xlu0 %v4488
          %v4510 = vpop.xlane.xlu0 %4509
          %4511 = vadd.xlane.f32.xlu0 %v4489
          %v4512 = vpop.xlane.xlu0 %4511
          %4513 = vadd.xlane.f32.xlu0 %v4490
          %v4514 = vpop.xlane.xlu0 %4513
          %4515 = vadd.xlane.f32.xlu0 %v4491
          %v4516 = vpop.xlane.xlu0 %4515
          %4517 = vadd.xlane.f32.xlu0 %v4492
          %v4518 = vpop.xlane.xlu0 %4517
          %4519 = vadd.xlane.f32.xlu0 %v4493
          %v4520 = vpop.xlane.xlu0 %4519
          %4521 = vadd.xlane.f32.xlu0 %v4494
          %v4522 = vpop.xlane.xlu0 %4521
          %4523 = vadd.xlane.f32.xlu0 %v4495
          %v4524 = vpop.xlane.xlu0 %4523
          %4525 = vadd.xlane.f32.xlu0 %v4496
          %v4526 = vpop.xlane.xlu0 %4525
          %4527 = vadd.xlane.f32.xlu0 %v4497
          %v4528 = vpop.xlane.xlu0 %4527
          %4529 = vadd.xlane.f32.xlu0 %v4498
          %v4530 = vpop.xlane.xlu0 %4529
          %v4531 = vmax.f32 %v4500, 1e-24
          %v4532 = vmax.f32 %v4502, 1e-24
          %v4533 = vmax.f32 %v4504, 1e-24
          %v4534 = vmax.f32 %v4506, 1e-24
          %v4535 = vmax.f32 %v4508, 1e-24
          %v4536 = vmax.f32 %v4510, 1e-24
          %v4537 = vmax.f32 %v4512, 1e-24
          %v4538 = vmax.f32 %v4514, 1e-24
          %v4539 = vmax.f32 %v4516, 1e-24
          %v4540 = vmax.f32 %v4518, 1e-24
          %v4541 = vmax.f32 %v4520, 1e-24
          %v4542 = vmax.f32 %v4522, 1e-24
          %v4543 = vmax.f32 %v4524, 1e-24
          %v4544 = vmax.f32 %v4526, 1e-24
          %v4545 = vmax.f32 %v4528, 1e-24
          %v4546 = vmax.f32 %v4530, 1e-24
          %v4547 = vrsqrt.pop %v4531
          %v4548 = vrsqrt.pop %v4532
          %v4549 = vrsqrt.pop %v4533
          %v4550 = vrsqrt.pop %v4534
          %v4551 = vrsqrt.pop %v4535
          %v4552 = vrsqrt.pop %v4536
          %v4553 = vrsqrt.pop %v4537
          %v4554 = vrsqrt.pop %v4538
          %v4555 = vrsqrt.pop %v4539
          %v4556 = vrsqrt.pop %v4540
          %v4557 = vrsqrt.pop %v4541
          %v4558 = vrsqrt.pop %v4542
          %v4559 = vrsqrt.pop %v4543
          %v4560 = vrsqrt.pop %v4544
          %v4561 = vrsqrt.pop %v4545
          %v4562 = vrsqrt.pop %v4546
          %v4563 = vmul.f32 %v4467, %v4547
          %v4564 = vmul.f32 %v4468, %v4548
          %v4565 = vmul.f32 %v4469, %v4549
          %v4566 = vmul.f32 %v4470, %v4550
          %v4567 = vmul.f32 %v4471, %v4551
          %v4568 = vmul.f32 %v4472, %v4552
          %v4569 = vmul.f32 %v4473, %v4553
          %v4570 = vmul.f32 %v4474, %v4554
          %v4571 = vmul.f32 %v4475, %v4555
          %v4572 = vmul.f32 %v4476, %v4556
          %v4573 = vmul.f32 %v4477, %v4557
          %v4574 = vmul.f32 %v4478, %v4558
          %v4575 = vmul.f32 %v4479, %v4559
          %v4576 = vmul.f32 %v4480, %v4560
          %v4577 = vmul.f32 %v4481, %v4561
          %v4578 = vmul.f32 %v4482, %v4562
          %4579 = vst [vmem:[#allocation9] sm:$0xff] %v4563
          %4580 = vst [vmem:[#allocation9 + $0x8] sm:$0xff] %v4564
          %4581 = vst [vmem:[#allocation9 + $0x10] sm:$0xff] %v4565
          %4582 = vst [vmem:[#allocation9 + $0x18] sm:$0xff] %v4566
          %4583 = vst [vmem:[#allocation9 + $0x20] sm:$0xff] %v4567
          %4584 = vst [vmem:[#allocation9 + $0x28] sm:$0xff] %v4568
          %4585 = vst [vmem:[#allocation9 + $0x30] sm:$0xff] %v4569
          %4586 = vst [vmem:[#allocation9 + $0x38] sm:$0xff] %v4570
          %4587 = vst [vmem:[#allocation9 + $0x40] sm:$0xff] %v4571
          %4588 = vst [vmem:[#allocation9 + $0x48] sm:$0xff] %v4572
          %4589 = vst [vmem:[#allocation9 + $0x50] sm:$0xff] %v4573
          %4590 = vst [vmem:[#allocation9 + $0x58] sm:$0xff] %v4574
          %4591 = vst [vmem:[#allocation9 + $0x60] sm:$0xff] %v4575
          %4592 = vst [vmem:[#allocation9 + $0x68] sm:$0xff] %v4576
          %4593 = vst [vmem:[#allocation9 + $0x70] sm:$0xff] %v4577
          %4594 = vst [vmem:[#allocation9 + $0x78] sm:$0xff] %v4578
        $region100: #{recurrent_rgcn_forward.1} parent=91 // pred_fallthru
          _
        %s4595 = sand.u32 %s36, 1
        %s4596 = scalar_lea.sflag [#allocation5], %s4595
        %s4597 = sand.u32 %s469, 1
        %s4598 = smul.addr %s4597, 128
        %s4599 = scalar_lea.vmem [#allocation8], %s4598
        %p4600 = scmp.lt.s32.totalorder %s36, 2
        %s4601 = scalar_select %p4600, %s36, 2
        %s4602 = smul.addr %s4601, 2
        %s4603 = smul.addr %s4602, 8
        %s4604 = scalar_lea.vmem %s21, %s4603
        // Predicated region
        $region101: #{recurrent_rgcn_forward.1} parent=91 // pred_check
          %p4605 = pneg %p432
        $region102: #{recurrent_rgcn_forward.1} parent=91 // pred_check_branch
          %4607 = sbr.rel (%p4605) target = $region104
        $region103: #{recurrent_rgcn_forward.1} parent=91 // pred_region
          %s4609 = ssub.s32 2048, 2048
          %4610 = vsyncadd [#allocation5], %s4609
          %s4611 = sshll.u32 [#allocation4], 4
          %s4612 = int_to_ptr.vmem [resolvable:$true] %s4611
          %4617 = dma.vmem_to_hbm [thread:$0]  %s4612, 2048, %s18, [#allocation5], 128, 128, 8
        $region104: #{recurrent_rgcn_forward.1} parent=91 // pred_fallthru
          _
        // Predicated region
        $region105: #{recurrent_rgcn_forward.1} parent=91 // pred_check
          %p4618 = pneg %p453
        $region106: #{recurrent_rgcn_forward.1} parent=91 // pred_check_branch
          %4620 = sbr.rel (%p4618) target = $region108
        $region107: #{recurrent_rgcn_forward.1} parent=91 // pred_region
          %s4622 = ssub.s32 256, 256
          %4623 = vsyncadd [#allocation7], %s4622
          %s4624 = sshll.u32 [#allocation6], 4
          %s4625 = int_to_ptr.vmem [resolvable:$true] %s4624
          %4630 = dma.vmem_to_hbm [thread:$0]  %s4625, 256, %s19, [#allocation7], 128, 128, 8
        $region108: #{recurrent_rgcn_forward.1} parent=91 // pred_fallthru
          _
        // Predicated region
        $region109: #{recurrent_rgcn_forward.1} parent=91 // pred_check
          %p4631 = pneg %p479
        $region110: #{recurrent_rgcn_forward.1} parent=91 // pred_check_branch
          %4633 = sbr.rel (%p4631) target = $region112
        $region111: #{recurrent_rgcn_forward.1} parent=91 // pred_region
          %s4635 = ssub.s32 2048, 2048
          %4636 = vsyncadd %s4596, %s4635
          %s4637 = smul.addr %s36, 16
          %s4638 = smul.addr %s4637, 128
          %s4639 = scalar_lea.hbm %s20, %s4638
          %s4640 = sshll.u32 %s4599, 4
          %s4641 = int_to_ptr.vmem [resolvable:$true] %s4640
          %4646 = dma.vmem_to_hbm [thread:$0]  %s4641, 2048, %s4639, %s4596, 128, 128, 8
        $region112: #{recurrent_rgcn_forward.1} parent=91 // pred_fallthru
          _
        // Predicated region
        $region113: #{recurrent_rgcn_forward.1} parent=91 // pred_check
          %p4647 = pneg %p505
        $region114: #{recurrent_rgcn_forward.1} parent=91 // pred_check_branch
          %4649 = sbr.rel (%p4647) target = $region116
        $region115: #{recurrent_rgcn_forward.1} parent=91 // pred_region
          _
        $region116: #{recurrent_rgcn_forward.1} parent=91 // pred_fallthru
          _
        // Predicated region
        $region117: #{recurrent_rgcn_forward.1} parent=91 // pred_check
          %p4650 = pneg %p526
        $region118: #{recurrent_rgcn_forward.1} parent=91 // pred_check_branch
          %4652 = sbr.rel (%p4650) target = $region120
        $region119: #{recurrent_rgcn_forward.1} parent=91 // pred_region
          %s4654 = ssub.s32 2048, 2048
          %4655 = vsyncadd [#allocation7], %s4654
          %s4656 = sshll.u32 [#allocation9], 4
          %s4657 = int_to_ptr.vmem [resolvable:$true] %s4656
          %4662 = dma.vmem_to_hbm [thread:$0]  %s4657, 2048, %s22, [#allocation7], 128, 128, 8
        $region120: #{recurrent_rgcn_forward.1} parent=91 // pred_fallthru
          _
        // Predicated region
        $region121: #{recurrent_rgcn_forward.1} parent=91 // pred_check
          %p4663 = pneg %p432
        $region122: #{recurrent_rgcn_forward.1} parent=91 // pred_check_branch
          %4665 = sbr.rel (%p4663) target = $region124
        $region123: #{recurrent_rgcn_forward.1} parent=91 // pred_region
          %4666 = dma.done [#allocation5], 2048
        $region124: #{recurrent_rgcn_forward.1} parent=91 // pred_fallthru
          _
        // Predicated region
        $region125: #{recurrent_rgcn_forward.1} parent=91 // pred_check
          %p4667 = pneg %p453
        $region126: #{recurrent_rgcn_forward.1} parent=91 // pred_check_branch
          %4669 = sbr.rel (%p4667) target = $region128
        $region127: #{recurrent_rgcn_forward.1} parent=91 // pred_region
          %4670 = dma.done [#allocation7], 256
        $region128: #{recurrent_rgcn_forward.1} parent=91 // pred_fallthru
          _
        // Predicated region
        $region129: #{recurrent_rgcn_forward.1} parent=91 // pred_check
          %p4671 = pneg %p526
        $region130: #{recurrent_rgcn_forward.1} parent=91 // pred_check_branch
          %4673 = sbr.rel (%p4671) target = $region132
        $region131: #{recurrent_rgcn_forward.1} parent=91 // pred_region
          %4674 = dma.done [#allocation7], 2048
        $region132: #{recurrent_rgcn_forward.1} parent=91 // pred_fallthru
          _
      $region92: #{recurrent_rgcn_forward.1} parent=5 // pred_fallthru
        _
      %p4675 = scmp.le.s32.totalorder 2, %s31
      // Predicated region
      $region133: #{recurrent_rgcn_forward.1} parent=5 // pred_check
        %p4676 = pneg %p4675
      $region134: #{recurrent_rgcn_forward.1} parent=5 // pred_check_branch
        %4678 = sbr.rel (%p4676) target = $region136
      $region135: #{recurrent_rgcn_forward.1} parent=5 // pred_region
        %s4679 = ssub.s32 %s31, 2
        // Predicated region
        $region137: #{recurrent_rgcn_forward.1} parent=135 // pred_check
          %p4680 = pneg %p485
        $region138: #{recurrent_rgcn_forward.1} parent=135 // pred_check_branch
          %4682 = sbr.rel (%p4680) target = $region140
        $region139: #{recurrent_rgcn_forward.1} parent=135 // pred_region
          %s4683 = sand.u32 %s37, 1
          %s4684 = scalar_lea.sflag [#allocation5], %s4683
          %s4685 = sand.u32 %s470, 1
          %s4686 = smul.addr %s4685, 128
          %s4687 = scalar_lea.vmem [#allocation8], %s4686
          %4688 = dma.done %s4684, 2048
        $region140: #{recurrent_rgcn_forward.1} parent=135 // pred_fallthru
          _
        // Predicated region
        $region141: #{recurrent_rgcn_forward.1} parent=135 // pred_check
          %p4689 = pneg %p511
        $region142: #{recurrent_rgcn_forward.1} parent=135 // pred_check_branch
          %4691 = sbr.rel (%p4689) target = $region144
        $region143: #{recurrent_rgcn_forward.1} parent=135 // pred_region
          %p4692 = scmp.lt.s32.totalorder %s37, 2
          %s4693 = scalar_select %p4692, %s37, 2
          %s4694 = smul.addr %s4693, 2
          %s4695 = smul.addr %s4694, 8
          %s4696 = scalar_lea.vmem %s21, %s4695
        $region144: #{recurrent_rgcn_forward.1} parent=135 // pred_fallthru
          _
      $region136: #{recurrent_rgcn_forward.1} parent=5 // pred_fallthru
        _
    $region6: #{recurrent_rgcn_forward.1} parent=1 // loop_footer
      %s35 = sadd.s32 1, %s31
    $region7: #{recurrent_rgcn_forward.1} parent=1 // loop_footer_branch
      %30 = sbr.rel target = $region3
    $region8: #{recurrent_rgcn_forward.1} parent=1 // loop_exit
      _
    %4697 = vsyncpa [#allocation5], 1
    %s4698 = scalar_lea.sflag [#allocation5], 1
    %4699 = vsyncpa %s4698, 1
    %4700 = vsyncpa [#allocation7], 1

</llo_original>
